<compile_context>
chip_gen: v5e
topology: v5e:2x2
jax: 0.10.0
libtpu: 0.0.40
codegen_flags: <defaults>
</compile_context>

<pallas_src>
import functools

import jax
import jax.numpy as jnp
from jax.experimental import pallas as pl
from jax.experimental.pallas import tpu as pltpu

# MLP dims from the module definition.
H1, H2, H3 = 2000, 500, 500
_LANE = 128
_SUBLANE = 8


def _round_up(x, m):
    return (x + m - 1) // m * m


def _decoder_kernel(z_ref, w1_ref, w2_ref, w34_ref, b_ref, out_ref, *,
                    h1p, h2p, h3p, xp):
    # Static, lane-aligned offsets into the concatenated bias / W3|W4 arrays.
    o1 = h1p
    o2 = h1p + h2p
    o3 = h1p + h2p + h3p
    o4 = o3 + xp

    def layer(x_bf16, w_bf16, b_f32, relu):
        # MXU matmul with f32 accumulation; bias-add + ReLU in f32 on the VPU.
        acc = jnp.dot(x_bf16, w_bf16, preferred_element_type=jnp.float32)
        acc = acc + b_f32
        if relu:
            # Carry the activation in bf16: halves VMEM spill traffic for the
            # large intermediates and is numerically identical to casting
            # right before the next matmul (which is what happened before).
            return jnp.maximum(acc, 0.0).astype(jnp.bfloat16)
        return acc

    h = layer(z_ref[...].astype(jnp.bfloat16), w1_ref[...], b_ref[:, 0:o1], True)
    h = layer(h, w2_ref[...], b_ref[:, o1:o2], True)
    h = layer(h, w34_ref[:, 0:h3p], b_ref[:, o2:o3], True)
    out_ref[...] = layer(h, w34_ref[:, h3p:], b_ref[:, o3:o4], False
                         ).astype(out_ref.dtype)


def view_specific_decoder(z, params, *, batch_tile=None):
    """Runs the fused MLP decoder.

    z:       (B, z_dim) float32
    params:  dict with w1..w4 of shape (in, out) and b1..b4 of shape (1, out)
             (y = x @ W + b, i.e. W is the transpose of PyTorch's (out, in)).
    """
    B, z_dim = z.shape
    x_dim = params["w4"].shape[1]

    # Lane-align hidden/output dims. Zero padding is exact: padded hidden
    # units are ReLU(0 + 0) = 0 and padded weight rows are zero, so nothing
    # leaks into the real lanes; padded output lanes are sliced off below.
    h1p = _round_up(H1, _LANE)        # 2000 -> 2048
    h2p = _round_up(H2, _LANE)        # 500  -> 512
    h3p = _round_up(H3, _LANE)        # 500  -> 512
    xp = _round_up(x_dim, _LANE)      # e.g. 64 -> 128

    def pad_w(w, rows, cols):
        r, c = w.shape
        return jnp.pad(w, ((0, rows - r), (0, cols - c)))

    def pad_b(b, cols):
        b = b.reshape(1, -1).astype(jnp.float32)
        return jnp.pad(b, ((0, 0), (0, cols - b.shape[-1])))

    # bf16 weights (mem-bound regime -> halve HBM traffic), f32 biases.
    w1 = pad_w(params["w1"], z_dim, h1p).astype(jnp.bfloat16)
    w2 = pad_w(params["w2"], h1p, h2p).astype(jnp.bfloat16)
    w3 = pad_w(params["w3"], h2p, h3p).astype(jnp.bfloat16)
    w4 = pad_w(params["w4"], h3p, xp).astype(jnp.bfloat16)
    # W3 and W4 share the same (512-row) contraction dim: ship them as one
    # array (one DMA) and split with a static in-kernel slice.
    w34 = jnp.concatenate([w3, w4], axis=1)
    # All four biases as one small f32 input (one DMA instead of four).
    biases = jnp.concatenate(
        [pad_b(params["b1"], h1p), pad_b(params["b2"], h2p),
         pad_b(params["b3"], h3p), pad_b(params["b4"], xp)], axis=1)

    # Batch tile: multiple of 8 (sublanes), capped at 256 (on v5e a 128 tile
    # is equally MXU-efficient and halves intermediate scratch if you want to
    # pass batch_tile=128 explicitly). Ragged batches are padded with zero
    # rows and sliced off afterwards.
    if batch_tile is None:
        batch_tile = min(_round_up(B, _SUBLANE), 256)
    batch_tile = _round_up(batch_tile, _SUBLANE)
    b_pad = _round_up(B, batch_tile)
    z_p = jnp.pad(z, ((0, b_pad - B), (0, 0))) if b_pad != B else z

    grid_steps = b_pad // batch_tile
    grid = (grid_steps,)

    # v7x megacore would duplicate the whole ~2.7 MB weight fetch per
    # TensorCore; only shard the batch across cores when the grid is long
    # enough to amortize that.
    semantics = ("arbitrary",) if grid_steps <= 4 else ("parallel",)

    weight_args = (w1, w2, w34, biases)

    in_specs = [pl.BlockSpec((batch_tile, z_dim), lambda i: (i, 0))]
    # Whole-array, grid-invariant weight blocks: fetched once and kept
    # VMEM-resident across grid steps. Single-buffering (pl.Buffered(1)) is
    # deliberately omitted: the extra ~3 MB of default double-buffer VMEM is
    # well inside budget and we avoid a version-fragile lowering path.
    for a in weight_args:
        nd = a.ndim
        in_specs.append(pl.BlockSpec(a.shape, lambda i, _nd=nd: (0,) * _nd))
    out_spec = pl.BlockSpec((batch_tile, xp), lambda i: (i, 0))

    kernel = functools.partial(_decoder_kernel, h1p=h1p, h2p=h2p, h3p=h3p, xp=xp)

    out_padded = pl.pallas_call(
        kernel,
        out_shape=jax.ShapeDtypeStruct((b_pad, xp), jnp.float32),
        grid=grid,
        in_specs=in_specs,
        out_specs=out_spec,
        compiler_params=pltpu.CompilerParams(
            dimension_semantics=semantics,
            # working set: ~2.7 MB bf16 weights (double-buffered) + bf16/f32
            # intermediates + z/out tiles — 32 MiB is safe on v5e/v6e and
            # within v7x's 64 MiB physical VMEM. Re-derive if batch_tile is
            # ever raised above 256.
            vmem_limit_bytes=32 << 20,
        ),
    )(z_p, *weight_args)

    if b_pad != B or xp != x_dim:
        # TODO(synk): at large B, let downstream consume the padded (b_pad, xp)
        # buffer directly to skip this extra read+write pass.
        out_padded = out_padded[:B, :x_dim]
    return out_padded


def init_params(key, z_dim, x_dim):
    """Deterministic synthetic parameters (not a checkpoint load)."""
    dims = [(z_dim, H1), (H1, H2), (H2, H3), (H3, x_dim)]
    params = {}
    for idx, (din, dout) in enumerate(dims, start=1):
        key, kw, kb = jax.random.split(key, 3)
        bound = 1.0 / jnp.sqrt(jnp.float32(din))  # nn.Linear U(-1/sqrt(in), 1/sqrt(in))
        params[f"w{idx}"] = jax.random.uniform(
            kw, (din, dout), jnp.float32, minval=-bound, maxval=bound)
        params[f"b{idx}"] = jax.random.uniform(
            kb, (1, dout), jnp.float32, minval=-bound, maxval=bound)
    return params


def reference_decoder(z, params):
    """Matches the kernel's numerics: bf16 operands into each matmul,
    f32 accumulation, f32 bias add / ReLU."""
    def layer(x, w, b, relu):
        y = jnp.dot(x.astype(jnp.bfloat16), w.astype(jnp.bfloat16),
                    preferred_element_type=jnp.float32) + b.astype(jnp.float32)
        return jnp.maximum(y, 0.0) if relu else y

    h = layer(z, params["w1"], params["b1"], True)
    h = layer(h, params["w2"], params["b2"], True)
    h = layer(h, params["w3"], params["b3"], True)
    return layer(h, params["w4"], params["b4"], False)


if __name__ == "__main__":
    key = jax.random.PRNGKey(0)
    batch, z_dim, x_dim = 8, 32, 64   # small shapes consistent with the module

    key, kz = jax.random.split(key)
    z = jax.random.normal(kz, (batch, z_dim), jnp.float32)
    params = init_params(key, z_dim, x_dim)

    out = view_specific_decoder(z, params)
    out = jax.block_until_ready(out)

    ref = reference_decoder(z, params)
    assert out.shape == (batch, x_dim)
    assert jnp.allclose(out, ref, atol=1e-2, rtol=1e-2), "mismatch vs reference"

    print("KERNEL_OK")
</pallas_src>

<mosaic_0001>
module attributes {stable_mosaic.version = 11 : i64} {
  func.func @_decoder_kernel(%arg0: i32, %arg1: memref<8x32xf32, #tpu.memory_space<vmem>>, %arg2: memref<32x2048xbf16, #tpu.memory_space<vmem>>, %arg3: memref<2048x512xbf16, #tpu.memory_space<vmem>>, %arg4: memref<512x640xbf16, #tpu.memory_space<vmem>>, %arg5: memref<1x3200xf32, #tpu.memory_space<vmem>>, %arg6: memref<8x128xf32, #tpu.memory_space<vmem>>) attributes {dimension_semantics = [#tpu.dimension_semantics<arbitrary>], iteration_bounds = array<i64: 1>, scalar_prefetch = 0 : i64, scratch_operands = 0 : i64, tpu.core_type = #tpu.core_type<tc>, window_params = [{transform_indices = @transform_0, window_bounds = array<i64: 8, 32>}, {pipeline_mode = #tpu.pipeline_mode<synchronous>, transform_indices = @transform_1, window_bounds = array<i64: 32, 2048>}, {pipeline_mode = #tpu.pipeline_mode<synchronous>, transform_indices = @transform_2, window_bounds = array<i64: 2048, 512>}, {pipeline_mode = #tpu.pipeline_mode<synchronous>, transform_indices = @transform_3, window_bounds = array<i64: 512, 640>}, {pipeline_mode = #tpu.pipeline_mode<synchronous>, transform_indices = @transform_4, window_bounds = array<i64: 1, 3200>}, {transform_indices = @transform_5, window_bounds = array<i64: 8, 128>}]} {
    %c0 = arith.constant 0 : index
    %c0_0 = arith.constant 0 : index
    %0 = vector.load %arg1[%c0, %c0_0] : memref<8x32xf32, #tpu.memory_space<vmem>>, vector<8x32xf32>
    %1 = arith.truncf %0 : vector<8x32xf32> to vector<8x32xbf16>
    %c0_1 = arith.constant 0 : index
    %c0_2 = arith.constant 0 : index
    %2 = vector.load %arg2[%c0_1, %c0_2] : memref<32x2048xbf16, #tpu.memory_space<vmem>>, vector<32x2048xbf16>
    %c0_3 = arith.constant 0 : index
    %c0_4 = arith.constant 0 : index
    %3 = vector.load %arg5[%c0_3, %c0_4] : memref<1x3200xf32, #tpu.memory_space<vmem>>, vector<1x2048xf32>
    %cst = arith.constant dense<0.000000e+00> : vector<8x2048xf32>
    %4 = tpu.matmul %1, %2, %cst {dimension_numbers = #tpu.dot_dimension_numbers<[1], [0], [0], [1], [0, 0, 1, 1], [], []>} : vector<8x32xbf16>, vector<32x2048xbf16>, vector<8x2048xf32> -> vector<8x2048xf32>
    %5 = vector.broadcast %3 : vector<1x2048xf32> to vector<8x2048xf32>
    %6 = arith.addf %4, %5 : vector<8x2048xf32>
    %cst_5 = arith.constant 0.000000e+00 : f32
    %7 = vector.broadcast %cst_5 : f32 to vector<8x2048xf32>
    %8 = arith.maximumf %6, %7 : vector<8x2048xf32>
    %9 = arith.truncf %8 : vector<8x2048xf32> to vector<8x2048xbf16>
    %c0_6 = arith.constant 0 : index
    %c0_7 = arith.constant 0 : index
    %10 = vector.load %arg3[%c0_6, %c0_7] : memref<2048x512xbf16, #tpu.memory_space<vmem>>, vector<2048x512xbf16>
    %c0_8 = arith.constant 0 : index
    %c2048 = arith.constant 2048 : index
    %11 = vector.load %arg5[%c0_8, %c2048] : memref<1x3200xf32, #tpu.memory_space<vmem>>, vector<1x512xf32>
    %cst_9 = arith.constant dense<0.000000e+00> : vector<8x512xf32>
    %12 = tpu.matmul %9, %10, %cst_9 {dimension_numbers = #tpu.dot_dimension_numbers<[1], [0], [0], [1], [0, 0, 1, 1], [], []>} : vector<8x2048xbf16>, vector<2048x512xbf16>, vector<8x512xf32> -> vector<8x512xf32>
    %13 = vector.broadcast %11 : vector<1x512xf32> to vector<8x512xf32>
    %14 = arith.addf %12, %13 : vector<8x512xf32>
    %cst_10 = arith.constant 0.000000e+00 : f32
    %15 = vector.broadcast %cst_10 : f32 to vector<8x512xf32>
    %16 = arith.maximumf %14, %15 : vector<8x512xf32>
    %17 = arith.truncf %16 : vector<8x512xf32> to vector<8x512xbf16>
    %c0_11 = arith.constant 0 : index
    %c0_12 = arith.constant 0 : index
    %18 = vector.load %arg4[%c0_11, %c0_12] : memref<512x640xbf16, #tpu.memory_space<vmem>>, vector<512x512xbf16>
    %c0_13 = arith.constant 0 : index
    %c2560 = arith.constant 2560 : index
    %19 = vector.load %arg5[%c0_13, %c2560] : memref<1x3200xf32, #tpu.memory_space<vmem>>, vector<1x512xf32>
    %cst_14 = arith.constant dense<0.000000e+00> : vector<8x512xf32>
    %20 = tpu.matmul %17, %18, %cst_14 {dimension_numbers = #tpu.dot_dimension_numbers<[1], [0], [0], [1], [0, 0, 1, 1], [], []>} : vector<8x512xbf16>, vector<512x512xbf16>, vector<8x512xf32> -> vector<8x512xf32>
    %21 = vector.broadcast %19 : vector<1x512xf32> to vector<8x512xf32>
    %22 = arith.addf %20, %21 : vector<8x512xf32>
    %cst_15 = arith.constant 0.000000e+00 : f32
    %23 = vector.broadcast %cst_15 : f32 to vector<8x512xf32>
    %24 = arith.maximumf %22, %23 : vector<8x512xf32>
    %25 = arith.truncf %24 : vector<8x512xf32> to vector<8x512xbf16>
    %c0_16 = arith.constant 0 : index
    %c512 = arith.constant 512 : index
    %26 = vector.load %arg4[%c0_16, %c512] : memref<512x640xbf16, #tpu.memory_space<vmem>>, vector<512x128xbf16>
    %c0_17 = arith.constant 0 : index
    %c3072 = arith.constant 3072 : index
    %27 = vector.load %arg5[%c0_17, %c3072] : memref<1x3200xf32, #tpu.memory_space<vmem>>, vector<1x128xf32>
    %cst_18 = arith.constant dense<0.000000e+00> : vector<8x128xf32>
    %28 = tpu.matmul %25, %26, %cst_18 {dimension_numbers = #tpu.dot_dimension_numbers<[1], [0], [0], [1], [0, 0, 1, 1], [], []>} : vector<8x512xbf16>, vector<512x128xbf16>, vector<8x128xf32> -> vector<8x128xf32>
    %29 = vector.broadcast %27 : vector<1x128xf32> to vector<8x128xf32>
    %30 = arith.addf %28, %29 : vector<8x128xf32>
    %c0_19 = arith.constant 0 : index
    %c0_20 = arith.constant 0 : index
    %31 = vector.load %arg6[%c0_19, %c0_20] : memref<8x128xf32, #tpu.memory_space<vmem>>, vector<8x128xf32>
    tpu.vector_store %arg6[%c0_19, %c0_20], %30 {strides = array<i32>} : memref<8x128xf32, #tpu.memory_space<vmem>>, vector<8x128xf32>,
    return
  }
  func.func @transform_0(%arg0: i32) -> (i32, i32) {
    %c0_i32 = arith.constant 0 : i32
    %c0_i32_0 = arith.constant 0 : i32
    return %arg0, %c0_i32 : i32, i32
  }
  func.func @transform_1(%arg0: i32) -> (i32, i32) {
    %c0_i32 = arith.constant 0 : i32
    %c0_i32_0 = arith.constant 0 : i32
    %c0_i32_1 = arith.constant 0 : i32
    return %c0_i32, %c0_i32_0 : i32, i32
  }
  func.func @transform_2(%arg0: i32) -> (i32, i32) {
    %c0_i32 = arith.constant 0 : i32
    %c0_i32_0 = arith.constant 0 : i32
    %c0_i32_1 = arith.constant 0 : i32
    return %c0_i32, %c0_i32_0 : i32, i32
  }
  func.func @transform_3(%arg0: i32) -> (i32, i32) {
    %c0_i32 = arith.constant 0 : i32
    %c0_i32_0 = arith.constant 0 : i32
    %c0_i32_1 = arith.constant 0 : i32
    return %c0_i32, %c0_i32_0 : i32, i32
  }
  func.func @transform_4(%arg0: i32) -> (i32, i32) {
    %c0_i32 = arith.constant 0 : i32
    %c0_i32_0 = arith.constant 0 : i32
    %c0_i32_1 = arith.constant 0 : i32
    return %c0_i32, %c0_i32_0 : i32, i32
  }
  func.func @transform_5(%arg0: i32) -> (i32, i32) {
    %c0_i32 = arith.constant 0 : i32
    %c0_i32_0 = arith.constant 0 : i32
    return %arg0, %c0_i32 : i32, i32
  }
}

</mosaic_0001>

<llo_original>
// kernel: tpu_custom_call.1
$region0: #{tpu_custom_call.1}
  #allocation0 [shape = 'u32[]', space=smem, size = 0x4, offset = 0x4, fixed_abs, tag = 'smem constant byte address 0x4 - core index']
  #allocation1 [shape = 'u32[72,128]{1,0:T(1,128)}', space=vmem, size = 0x9000, scoped, tag = 'internal scratch']
  %s0 = inlined_call_operand.hbm [shape: f32[8,32], index: 0, kind: input, shape index: {}]
  %s1 = inlined_call_operand.hbm [shape: bf16[32,2048], index: 1, kind: input, shape index: {}]
  %s2 = inlined_call_operand.hbm [shape: bf16[2048,512], index: 2, kind: input, shape index: {}]
  %s3 = inlined_call_operand.hbm [shape: bf16[512,640], index: 3, kind: input, shape index: {}]
  %s4 = inlined_call_operand.hbm [shape: f32[1,3200], index: 4, kind: input, shape index: {}]
  %s5 = inlined_call_operand.hbm [shape: f32[8,128], index: 5, kind: output, shape index: {}]
  %s6 = sld [smem:[#allocation0]]
  $region50: #{tpu_custom_call.1} parent=0
    _
  %s8 = ssub.s32 1, %s6
  %s9 = scalar_select 0, %s8, %s6
  $region1: #{tpu_custom_call.1} parent=0
    #allocation2 [shape = 'u8[4096]{0}', space=vmem, size = 0x1000, scoped, tag = 'input window, operand 0, single buffered']
    #allocation3 [shape = 's32[1]{0}', space=sflag, size = 0x4, scoped, tag = 'scoped memory for tpu_custom_call.1']
    #allocation4 [shape = 's32[1]{0}', space=sflag, size = 0x4, scoped, tag = 'scoped memory for tpu_custom_call.1']
    #allocation5 [shape = 'u8[131072]{0}', space=vmem, size = 0x20000, scoped, tag = 'input window, operand 1, single buffered']
    #allocation6 [shape = 's32[1]{0}', space=sflag, size = 0x4, scoped, tag = 'scoped memory for tpu_custom_call.1']
    #allocation7 [shape = 'u8[2097152]{0}', space=vmem, size = 0x200000, scoped, tag = 'input window, operand 2, single buffered']
    #allocation8 [shape = 'u8[655360]{0}', space=vmem, size = 0xa0000, scoped, tag = 'input window, operand 3, single buffered']
    #allocation9 [shape = 's32[1]{0}', space=sflag, size = 0x4, scoped, tag = 'scoped memory for tpu_custom_call.1']
    #allocation10 [shape = 'u8[12800]{0}', space=vmem, size = 0x3400, scoped, tag = 'input window, operand 4, single buffered']
    #allocation11 [shape = 'u8[4096]{0}', space=vmem, size = 0x1000, scoped, tag = 'output window, operand 0, single buffered']
    %10 = vsyncpa [#allocation3], 0
    %11 = vsyncpa [#allocation6], 0
    %12 = vsyncpa [#allocation9], 0
    %13 = vsyncpa [#allocation4], 0
    // Predicated region
    $region2: #{tpu_custom_call.1} parent=1 // pred_check
      _
    $region3: #{tpu_custom_call.1} parent=1 // pred_check_branch
      %15 = sbr.rel (0) target = $region5
    $region4: #{tpu_custom_call.1} parent=1 // pred_region
      %17 = vsyncadd [#allocation3], 0
      %s19 = sshll.u32 %s0, 4
      %s20 = int_to_ptr.hbm [resolvable:$true] %s19
      %s21 = sshll.u32 [#allocation2], 4
      %s22 = int_to_ptr.vmem [resolvable:$true] %s21
      %24 = dma.hbm_to_vmem [thread:$0]  %s20, 128, %s22, [#allocation3]
    $region5: #{tpu_custom_call.1} parent=1 // pred_fallthru
      _
    // Predicated region
    $region6: #{tpu_custom_call.1} parent=1 // pred_check
      _
    $region7: #{tpu_custom_call.1} parent=1 // pred_check_branch
      %26 = sbr.rel (0) target = $region9
    $region8: #{tpu_custom_call.1} parent=1 // pred_region
      %28 = vsyncadd [#allocation6], 0
      %s29 = sshll.u32 %s1, 4
      %s30 = int_to_ptr.hbm [resolvable:$true] %s29
      %s31 = sshll.u32 [#allocation5], 4
      %s32 = int_to_ptr.vmem [resolvable:$true] %s31
      %37 = dma.hbm_to_vmem [thread:$0]  %s30, 4096, %s32, [#allocation6], 1024, 1024, 64
    $region9: #{tpu_custom_call.1} parent=1 // pred_fallthru
      _
    // Predicated region
    $region10: #{tpu_custom_call.1} parent=1 // pred_check
      _
    $region11: #{tpu_custom_call.1} parent=1 // pred_check_branch
      %39 = sbr.rel (0) target = $region13
    $region12: #{tpu_custom_call.1} parent=1 // pred_region
      %41 = vsyncadd [#allocation6], 0
      %s42 = sshll.u32 %s2, 4
      %s43 = int_to_ptr.hbm [resolvable:$true] %s42
      %s44 = sshll.u32 [#allocation7], 4
      %s45 = int_to_ptr.vmem [resolvable:$true] %s44
      %50 = dma.hbm_to_vmem [thread:$0]  %s43, 65536, %s45, [#allocation6], 256, 256, 16
    $region13: #{tpu_custom_call.1} parent=1 // pred_fallthru
      _
    // Predicated region
    $region14: #{tpu_custom_call.1} parent=1 // pred_check
      _
    $region15: #{tpu_custom_call.1} parent=1 // pred_check_branch
      %52 = sbr.rel (0) target = $region17
    $region16: #{tpu_custom_call.1} parent=1 // pred_region
      %54 = vsyncadd [#allocation9], 0
      %s55 = sshll.u32 %s3, 4
      %s56 = int_to_ptr.hbm [resolvable:$true] %s55
      %s57 = sshll.u32 [#allocation8], 4
      %s58 = int_to_ptr.vmem [resolvable:$true] %s57
      %63 = dma.hbm_to_vmem [thread:$0]  %s56, 20480, %s58, [#allocation9], 320, 320, 20
    $region17: #{tpu_custom_call.1} parent=1 // pred_fallthru
      _
    // Predicated region
    $region18: #{tpu_custom_call.1} parent=1 // pred_check
      _
    $region19: #{tpu_custom_call.1} parent=1 // pred_check_branch
      %65 = sbr.rel (0) target = $region21
    $region20: #{tpu_custom_call.1} parent=1 // pred_region
      %67 = vsyncadd [#allocation9], 0
      %s69 = sshll.u32 %s4, 4
      %s70 = int_to_ptr.hbm [resolvable:$true] %s69
      %s71 = sshll.u32 [#allocation10], 4
      %s72 = int_to_ptr.vmem [resolvable:$true] %s71
      %74 = dma.hbm_to_vmem [thread:$0]  %s70, 400, %s72, [#allocation9]
    $region21: #{tpu_custom_call.1} parent=1 // pred_fallthru
      _
    // Predicated region
    $region22: #{tpu_custom_call.1} parent=1 // pred_check
      _
    $region23: #{tpu_custom_call.1} parent=1 // pred_check_branch
      %76 = sbr.rel (0) target = $region25
    $region24: #{tpu_custom_call.1} parent=1 // pred_region
      %78 = dma.done [#allocation3], 128
    $region25: #{tpu_custom_call.1} parent=1 // pred_fallthru
      _
    // Predicated region
    $region26: #{tpu_custom_call.1} parent=1 // pred_check
      _
    $region27: #{tpu_custom_call.1} parent=1 // pred_check_branch
      %80 = sbr.rel (0) target = $region29
    $region28: #{tpu_custom_call.1} parent=1 // pred_region
      %82 = dma.done [#allocation6], 4096
    $region29: #{tpu_custom_call.1} parent=1 // pred_fallthru
      _
    // Predicated region
    $region30: #{tpu_custom_call.1} parent=1 // pred_check
      _
    $region31: #{tpu_custom_call.1} parent=1 // pred_check_branch
      %84 = sbr.rel (0) target = $region33
    $region32: #{tpu_custom_call.1} parent=1 // pred_region
      %86 = dma.done [#allocation6], 65536
    $region33: #{tpu_custom_call.1} parent=1 // pred_fallthru
      _
    // Predicated region
    $region34: #{tpu_custom_call.1} parent=1 // pred_check
      _
    $region35: #{tpu_custom_call.1} parent=1 // pred_check_branch
      %88 = sbr.rel (0) target = $region37
    $region36: #{tpu_custom_call.1} parent=1 // pred_region
      %90 = dma.done [#allocation9], 20480
    $region37: #{tpu_custom_call.1} parent=1 // pred_fallthru
      _
    // Predicated region
    $region38: #{tpu_custom_call.1} parent=1 // pred_check
      _
    $region39: #{tpu_custom_call.1} parent=1 // pred_check_branch
      %92 = sbr.rel (0) target = $region41
    $region40: #{tpu_custom_call.1} parent=1 // pred_region
      %94 = dma.done [#allocation9], 400
    $region41: #{tpu_custom_call.1} parent=1 // pred_fallthru
      _
    %v96 = vld [vmem:[#allocation2] sm:$0xff]
    %v97 = vpack.c.bf16 %v96, %v96
    %v98 = vld [vmem:[#allocation5] sm:$0xff]
    %v99 = vld [vmem:[#allocation5 + $0x8] sm:$0xff]
    %v100 = vld [vmem:[#allocation5 + $0x10] sm:$0xff]
    %v101 = vld [vmem:[#allocation5 + $0x18] sm:$0xff]
    %v102 = vld [vmem:[#allocation5 + $0x20] sm:$0xff]
    %v103 = vld [vmem:[#allocation5 + $0x28] sm:$0xff]
    %v104 = vld [vmem:[#allocation5 + $0x30] sm:$0xff]
    %v105 = vld [vmem:[#allocation5 + $0x38] sm:$0xff]
    %v106 = vld [vmem:[#allocation5 + $0x40] sm:$0xff]
    %v107 = vld [vmem:[#allocation5 + $0x48] sm:$0xff]
    %v108 = vld [vmem:[#allocation5 + $0x50] sm:$0xff]
    %v109 = vld [vmem:[#allocation5 + $0x58] sm:$0xff]
    %v110 = vld [vmem:[#allocation5 + $0x60] sm:$0xff]
    %v111 = vld [vmem:[#allocation5 + $0x68] sm:$0xff]
    %v112 = vld [vmem:[#allocation5 + $0x70] sm:$0xff]
    %v113 = vld [vmem:[#allocation5 + $0x78] sm:$0xff]
    %v114 = vld [vmem:[#allocation5 + $0x80] sm:$0xff]
    %v115 = vld [vmem:[#allocation5 + $0x88] sm:$0xff]
    %v116 = vld [vmem:[#allocation5 + $0x90] sm:$0xff]
    %v117 = vld [vmem:[#allocation5 + $0x98] sm:$0xff]
    %v118 = vld [vmem:[#allocation5 + $0xa0] sm:$0xff]
    %v119 = vld [vmem:[#allocation5 + $0xa8] sm:$0xff]
    %v120 = vld [vmem:[#allocation5 + $0xb0] sm:$0xff]
    %v121 = vld [vmem:[#allocation5 + $0xb8] sm:$0xff]
    %v122 = vld [vmem:[#allocation5 + $0xc0] sm:$0xff]
    %v123 = vld [vmem:[#allocation5 + $0xc8] sm:$0xff]
    %v124 = vld [vmem:[#allocation5 + $0xd0] sm:$0xff]
    %v125 = vld [vmem:[#allocation5 + $0xd8] sm:$0xff]
    %v126 = vld [vmem:[#allocation5 + $0xe0] sm:$0xff]
    %v127 = vld [vmem:[#allocation5 + $0xe8] sm:$0xff]
    %v128 = vld [vmem:[#allocation5 + $0xf0] sm:$0xff]
    %v129 = vld [vmem:[#allocation5 + $0xf8] sm:$0xff]
    %v130 = vld [vmem:[#allocation10] sm:$0xff]
    %v131 = vld [vmem:[#allocation10 + $0x8] sm:$0xff]
    %v134 = vperm.slane %v130, 0
    %v135 = vperm.slane %v130, 1
    %v136 = vperm.slane %v130, 2
    %v137 = vperm.slane %v130, 3
    %v138 = vperm.slane %v130, 4
    %v139 = vperm.slane %v130, 5
    %v140 = vperm.slane %v130, 6
    %v141 = vperm.slane %v130, 7
    %v142 = vperm.slane %v131, 0
    %v143 = vperm.slane %v131, 1
    %v144 = vperm.slane %v131, 2
    %v145 = vperm.slane %v131, 3
    %v146 = vperm.slane %v131, 4
    %v147 = vperm.slane %v131, 5
    %v148 = vperm.slane %v131, 6
    %v149 = vperm.slane %v131, 7
    %v198 = vunpack.c.l.b16 %v98
    %v199 = vunpack.c.h.b16 %v98
    %v200 = vunpack.c.l.b16 %v99
    %v201 = vunpack.c.h.b16 %v99
    %v202 = vunpack.c.l.b16 %v100
    %v203 = vunpack.c.h.b16 %v100
    %v204 = vunpack.c.l.b16 %v101
    %v205 = vunpack.c.h.b16 %v101
    %v206 = vunpack.c.l.b16 %v102
    %v207 = vunpack.c.h.b16 %v102
    %v208 = vunpack.c.l.b16 %v103
    %v209 = vunpack.c.h.b16 %v103
    %v210 = vunpack.c.l.b16 %v104
    %v211 = vunpack.c.h.b16 %v104
    %v212 = vunpack.c.l.b16 %v105
    %v213 = vunpack.c.h.b16 %v105
    %v214 = vunpack.c.l.b16 %v106
    %v215 = vunpack.c.h.b16 %v106
    %v216 = vunpack.c.l.b16 %v107
    %v217 = vunpack.c.h.b16 %v107
    %v218 = vunpack.c.l.b16 %v108
    %v219 = vunpack.c.h.b16 %v108
    %v220 = vunpack.c.l.b16 %v109
    %v221 = vunpack.c.h.b16 %v109
    %v222 = vunpack.c.l.b16 %v110
    %v223 = vunpack.c.h.b16 %v110
    %v224 = vunpack.c.l.b16 %v111
    %v225 = vunpack.c.h.b16 %v111
    %v226 = vunpack.c.l.b16 %v112
    %v227 = vunpack.c.h.b16 %v112
    %v228 = vunpack.c.l.b16 %v113
    %v229 = vunpack.c.h.b16 %v113
    %v230 = vunpack.c.l.b16 %v114
    %v231 = vunpack.c.h.b16 %v114
    %v232 = vunpack.c.l.b16 %v115
    %v233 = vunpack.c.h.b16 %v115
    %v234 = vunpack.c.l.b16 %v116
    %v235 = vunpack.c.h.b16 %v116
    %v236 = vunpack.c.l.b16 %v117
    %v237 = vunpack.c.h.b16 %v117
    %v238 = vunpack.c.l.b16 %v118
    %v239 = vunpack.c.h.b16 %v118
    %v240 = vunpack.c.l.b16 %v119
    %v241 = vunpack.c.h.b16 %v119
    %v242 = vunpack.c.l.b16 %v120
    %v243 = vunpack.c.h.b16 %v120
    %v244 = vunpack.c.l.b16 %v121
    %v245 = vunpack.c.h.b16 %v121
    %v246 = vunpack.c.l.b16 %v122
    %v247 = vunpack.c.h.b16 %v122
    %v248 = vunpack.c.l.b16 %v123
    %v249 = vunpack.c.h.b16 %v123
    %v250 = vunpack.c.l.b16 %v124
    %v251 = vunpack.c.h.b16 %v124
    %v252 = vunpack.c.l.b16 %v125
    %v253 = vunpack.c.h.b16 %v125
    %v254 = vunpack.c.l.b16 %v126
    %v255 = vunpack.c.h.b16 %v126
    %v256 = vunpack.c.l.b16 %v127
    %v257 = vunpack.c.h.b16 %v127
    %v258 = vunpack.c.l.b16 %v128
    %v259 = vunpack.c.h.b16 %v128
    %v260 = vunpack.c.l.b16 %v129
    %v261 = vunpack.c.h.b16 %v129
    %v262 = vpack.c.b16 %v214, %v198
    %v263 = vpack.c.b16 %v215, %v199
    %v264 = vpack.c.b16 %v216, %v200
    %v265 = vpack.c.b16 %v217, %v201
    %v266 = vpack.c.b16 %v218, %v202
    %v267 = vpack.c.b16 %v219, %v203
    %v268 = vpack.c.b16 %v220, %v204
    %v269 = vpack.c.b16 %v221, %v205
    %v270 = vpack.c.b16 %v222, %v206
    %v271 = vpack.c.b16 %v223, %v207
    %v272 = vpack.c.b16 %v224, %v208
    %v273 = vpack.c.b16 %v225, %v209
    %v274 = vpack.c.b16 %v226, %v210
    %v275 = vpack.c.b16 %v227, %v211
    %v276 = vpack.c.b16 %v228, %v212
    %v277 = vpack.c.b16 %v229, %v213
    %v278 = vpack.c.b16 %v246, %v230
    %v279 = vpack.c.b16 %v247, %v231
    %v280 = vpack.c.b16 %v248, %v232
    %v281 = vpack.c.b16 %v249, %v233
    %v282 = vpack.c.b16 %v250, %v234
    %v283 = vpack.c.b16 %v251, %v235
    %v284 = vpack.c.b16 %v252, %v236
    %v285 = vpack.c.b16 %v253, %v237
    %v286 = vpack.c.b16 %v254, %v238
    %v287 = vpack.c.b16 %v255, %v239
    %v288 = vpack.c.b16 %v256, %v240
    %v289 = vpack.c.b16 %v257, %v241
    %v290 = vpack.c.b16 %v258, %v242
    %v291 = vpack.c.b16 %v259, %v243
    %v292 = vpack.c.b16 %v260, %v244
    %v293 = vpack.c.b16 %v261, %v245
    %vm326 = vcmask 261120
    %v328 = vsel %vm326, %v97, 0
    %330 = vmatpush.bf16.msra.mxu0 0
    %331 = vmatpush.bf16.msra.mxu0 0
    %332 = vmatpush.bf16.msra.mxu0 0
    %333 = vmatpush.bf16.msra.mxu0 0
    %334 = vmatpush.bf16.msra.mxu0 0
    %335 = vmatpush.bf16.msra.mxu0 0
    %336 = vmatpush.bf16.msra.mxu0 %v278
    %337 = vmatpush.bf16.msra.mxu0 %v262
    %338 = vmatmul.bf16.gmra.mxu0 %v328
    %v339 = vpop.f32.mrf.mxu0
    %v340 = vadd.f32 %v134, %v339
    %v341 = vpop.f32.mrf.mxu0
    %342 = vdwg.mxu0
    %343 = vmatpush.bf16.msra.mxu0 0
    %344 = vmatpush.bf16.msra.mxu0 0
    %345 = vmatpush.bf16.msra.mxu0 0
    %346 = vmatpush.bf16.msra.mxu0 0
    %347 = vmatpush.bf16.msra.mxu0 0
    %348 = vmatpush.bf16.msra.mxu0 0
    %349 = vmatpush.bf16.msra.mxu0 %v279
    %350 = vmatpush.bf16.msra.mxu0 %v263
    %351 = vmatmul.bf16.gmra.mxu0 %v328
    %v352 = vpop.f32.mrf.mxu0
    %v353 = vadd.f32 %v135, %v352
    %v354 = vpop.f32.mrf.mxu0
    %355 = vdwg.mxu0
    %356 = vmatpush.bf16.msra.mxu0 0
    %357 = vmatpush.bf16.msra.mxu0 0
    %358 = vmatpush.bf16.msra.mxu0 0
    %359 = vmatpush.bf16.msra.mxu0 0
    %360 = vmatpush.bf16.msra.mxu0 0
    %361 = vmatpush.bf16.msra.mxu0 0
    %362 = vmatpush.bf16.msra.mxu0 %v280
    %363 = vmatpush.bf16.msra.mxu0 %v264
    %364 = vmatmul.bf16.gmra.mxu0 %v328
    %v365 = vpop.f32.mrf.mxu0
    %v366 = vadd.f32 %v136, %v365
    %v367 = vpop.f32.mrf.mxu0
    %368 = vdwg.mxu0
    %369 = vmatpush.bf16.msra.mxu0 0
    %370 = vmatpush.bf16.msra.mxu0 0
    %371 = vmatpush.bf16.msra.mxu0 0
    %372 = vmatpush.bf16.msra.mxu0 0
    %373 = vmatpush.bf16.msra.mxu0 0
    %374 = vmatpush.bf16.msra.mxu0 0
    %375 = vmatpush.bf16.msra.mxu0 %v281
    %376 = vmatpush.bf16.msra.mxu0 %v265
    %377 = vmatmul.bf16.gmra.mxu0 %v328
    %v378 = vpop.f32.mrf.mxu0
    %v379 = vadd.f32 %v137, %v378
    %v380 = vpop.f32.mrf.mxu0
    %381 = vdwg.mxu0
    %382 = vmatpush.bf16.msra.mxu0 0
    %383 = vmatpush.bf16.msra.mxu0 0
    %384 = vmatpush.bf16.msra.mxu0 0
    %385 = vmatpush.bf16.msra.mxu0 0
    %386 = vmatpush.bf16.msra.mxu0 0
    %387 = vmatpush.bf16.msra.mxu0 0
    %388 = vmatpush.bf16.msra.mxu0 %v282
    %389 = vmatpush.bf16.msra.mxu0 %v266
    %390 = vmatmul.bf16.gmra.mxu0 %v328
    %v391 = vpop.f32.mrf.mxu0
    %v392 = vadd.f32 %v138, %v391
    %v393 = vpop.f32.mrf.mxu0
    %394 = vdwg.mxu0
    %395 = vmatpush.bf16.msra.mxu0 0
    %396 = vmatpush.bf16.msra.mxu0 0
    %397 = vmatpush.bf16.msra.mxu0 0
    %398 = vmatpush.bf16.msra.mxu0 0
    %399 = vmatpush.bf16.msra.mxu0 0
    %400 = vmatpush.bf16.msra.mxu0 0
    %401 = vmatpush.bf16.msra.mxu0 %v283
    %402 = vmatpush.bf16.msra.mxu0 %v267
    %403 = vmatmul.bf16.gmra.mxu0 %v328
    %v404 = vpop.f32.mrf.mxu0
    %v405 = vadd.f32 %v139, %v404
    %v406 = vpop.f32.mrf.mxu0
    %407 = vdwg.mxu0
    %408 = vmatpush.bf16.msra.mxu0 0
    %409 = vmatpush.bf16.msra.mxu0 0
    %410 = vmatpush.bf16.msra.mxu0 0
    %411 = vmatpush.bf16.msra.mxu0 0
    %412 = vmatpush.bf16.msra.mxu0 0
    %413 = vmatpush.bf16.msra.mxu0 0
    %414 = vmatpush.bf16.msra.mxu0 %v284
    %415 = vmatpush.bf16.msra.mxu0 %v268
    %416 = vmatmul.bf16.gmra.mxu0 %v328
    %v417 = vpop.f32.mrf.mxu0
    %v418 = vadd.f32 %v140, %v417
    %v419 = vpop.f32.mrf.mxu0
    %420 = vdwg.mxu0
    %421 = vmatpush.bf16.msra.mxu0 0
    %422 = vmatpush.bf16.msra.mxu0 0
    %423 = vmatpush.bf16.msra.mxu0 0
    %424 = vmatpush.bf16.msra.mxu0 0
    %425 = vmatpush.bf16.msra.mxu0 0
    %426 = vmatpush.bf16.msra.mxu0 0
    %427 = vmatpush.bf16.msra.mxu0 %v285
    %428 = vmatpush.bf16.msra.mxu0 %v269
    %429 = vmatmul.bf16.gmra.mxu0 %v328
    %v430 = vpop.f32.mrf.mxu0
    %v431 = vadd.f32 %v141, %v430
    %v432 = vpop.f32.mrf.mxu0
    %433 = vdwg.mxu0
    %434 = vmatpush.bf16.msra.mxu0 0
    %435 = vmatpush.bf16.msra.mxu0 0
    %436 = vmatpush.bf16.msra.mxu0 0
    %437 = vmatpush.bf16.msra.mxu0 0
    %438 = vmatpush.bf16.msra.mxu0 0
    %439 = vmatpush.bf16.msra.mxu0 0
    %440 = vmatpush.bf16.msra.mxu0 %v286
    %441 = vmatpush.bf16.msra.mxu0 %v270
    %442 = vmatmul.bf16.gmra.mxu0 %v328
    %v443 = vpop.f32.mrf.mxu0
    %v444 = vadd.f32 %v142, %v443
    %v445 = vpop.f32.mrf.mxu0
    %446 = vdwg.mxu0
    %447 = vmatpush.bf16.msra.mxu0 0
    %448 = vmatpush.bf16.msra.mxu0 0
    %449 = vmatpush.bf16.msra.mxu0 0
    %450 = vmatpush.bf16.msra.mxu0 0
    %451 = vmatpush.bf16.msra.mxu0 0
    %452 = vmatpush.bf16.msra.mxu0 0
    %453 = vmatpush.bf16.msra.mxu0 %v287
    %454 = vmatpush.bf16.msra.mxu0 %v271
    %455 = vmatmul.bf16.gmra.mxu0 %v328
    %v456 = vpop.f32.mrf.mxu0
    %v457 = vadd.f32 %v143, %v456
    %v458 = vpop.f32.mrf.mxu0
    %459 = vdwg.mxu0
    %460 = vmatpush.bf16.msra.mxu0 0
    %461 = vmatpush.bf16.msra.mxu0 0
    %462 = vmatpush.bf16.msra.mxu0 0
    %463 = vmatpush.bf16.msra.mxu0 0
    %464 = vmatpush.bf16.msra.mxu0 0
    %465 = vmatpush.bf16.msra.mxu0 0
    %466 = vmatpush.bf16.msra.mxu0 %v288
    %467 = vmatpush.bf16.msra.mxu0 %v272
    %468 = vmatmul.bf16.gmra.mxu0 %v328
    %v469 = vpop.f32.mrf.mxu0
    %v470 = vadd.f32 %v144, %v469
    %v471 = vpop.f32.mrf.mxu0
    %472 = vdwg.mxu0
    %473 = vmatpush.bf16.msra.mxu0 0
    %474 = vmatpush.bf16.msra.mxu0 0
    %475 = vmatpush.bf16.msra.mxu0 0
    %476 = vmatpush.bf16.msra.mxu0 0
    %477 = vmatpush.bf16.msra.mxu0 0
    %478 = vmatpush.bf16.msra.mxu0 0
    %479 = vmatpush.bf16.msra.mxu0 %v289
    %480 = vmatpush.bf16.msra.mxu0 %v273
    %481 = vmatmul.bf16.gmra.mxu0 %v328
    %v482 = vpop.f32.mrf.mxu0
    %v483 = vadd.f32 %v145, %v482
    %v484 = vpop.f32.mrf.mxu0
    %485 = vdwg.mxu0
    %486 = vmatpush.bf16.msra.mxu0 0
    %487 = vmatpush.bf16.msra.mxu0 0
    %488 = vmatpush.bf16.msra.mxu0 0
    %489 = vmatpush.bf16.msra.mxu0 0
    %490 = vmatpush.bf16.msra.mxu0 0
    %491 = vmatpush.bf16.msra.mxu0 0
    %492 = vmatpush.bf16.msra.mxu0 %v290
    %493 = vmatpush.bf16.msra.mxu0 %v274
    %494 = vmatmul.bf16.gmra.mxu0 %v328
    %v495 = vpop.f32.mrf.mxu0
    %v496 = vadd.f32 %v146, %v495
    %v497 = vpop.f32.mrf.mxu0
    %498 = vdwg.mxu0
    %499 = vmatpush.bf16.msra.mxu0 0
    %500 = vmatpush.bf16.msra.mxu0 0
    %501 = vmatpush.bf16.msra.mxu0 0
    %502 = vmatpush.bf16.msra.mxu0 0
    %503 = vmatpush.bf16.msra.mxu0 0
    %504 = vmatpush.bf16.msra.mxu0 0
    %505 = vmatpush.bf16.msra.mxu0 %v291
    %506 = vmatpush.bf16.msra.mxu0 %v275
    %507 = vmatmul.bf16.gmra.mxu0 %v328
    %v508 = vpop.f32.mrf.mxu0
    %v509 = vadd.f32 %v147, %v508
    %v510 = vpop.f32.mrf.mxu0
    %511 = vdwg.mxu0
    %512 = vmatpush.bf16.msra.mxu0 0
    %513 = vmatpush.bf16.msra.mxu0 0
    %514 = vmatpush.bf16.msra.mxu0 0
    %515 = vmatpush.bf16.msra.mxu0 0
    %516 = vmatpush.bf16.msra.mxu0 0
    %517 = vmatpush.bf16.msra.mxu0 0
    %518 = vmatpush.bf16.msra.mxu0 %v292
    %519 = vmatpush.bf16.msra.mxu0 %v276
    %520 = vmatmul.bf16.gmra.mxu0 %v328
    %v521 = vpop.f32.mrf.mxu0
    %v522 = vadd.f32 %v148, %v521
    %v523 = vpop.f32.mrf.mxu0
    %524 = vdwg.mxu0
    %525 = vmatpush.bf16.msra.mxu0 0
    %526 = vmatpush.bf16.msra.mxu0 0
    %527 = vmatpush.bf16.msra.mxu0 0
    %528 = vmatpush.bf16.msra.mxu0 0
    %529 = vmatpush.bf16.msra.mxu0 0
    %530 = vmatpush.bf16.msra.mxu0 0
    %531 = vmatpush.bf16.msra.mxu0 %v293
    %532 = vmatpush.bf16.msra.mxu0 %v277
    %533 = vmatmul.bf16.gmra.mxu0 %v328
    %v534 = vpop.f32.mrf.mxu0
    %v535 = vadd.f32 %v149, %v534
    %v536 = vpop.f32.mrf.mxu0
    %537 = vdwg.mxu0
    %v538 = vmax.f32 %v340, 0.0
    %v539 = vmax.f32 %v353, 0.0
    %v540 = vmax.f32 %v366, 0.0
    %v541 = vmax.f32 %v379, 0.0
    %v542 = vmax.f32 %v392, 0.0
    %v543 = vmax.f32 %v405, 0.0
    %v544 = vmax.f32 %v418, 0.0
    %v545 = vmax.f32 %v431, 0.0
    %v546 = vmax.f32 %v444, 0.0
    %v547 = vmax.f32 %v457, 0.0
    %v548 = vmax.f32 %v470, 0.0
    %v549 = vmax.f32 %v483, 0.0
    %v550 = vmax.f32 %v496, 0.0
    %v551 = vmax.f32 %v509, 0.0
    %v552 = vmax.f32 %v522, 0.0
    %v553 = vmax.f32 %v535, 0.0
    %v554 = vpack.c.bf16 %v538, %v538
    %v555 = vpack.c.bf16 %v539, %v539
    %v556 = vpack.c.bf16 %v540, %v540
    %v557 = vpack.c.bf16 %v541, %v541
    %v558 = vpack.c.bf16 %v542, %v542
    %v559 = vpack.c.bf16 %v543, %v543
    %v560 = vpack.c.bf16 %v544, %v544
    %v561 = vpack.c.bf16 %v545, %v545
    %v562 = vpack.c.bf16 %v546, %v546
    %v563 = vpack.c.bf16 %v547, %v547
    %v564 = vpack.c.bf16 %v548, %v548
    %v565 = vpack.c.bf16 %v549, %v549
    %v566 = vpack.c.bf16 %v550, %v550
    %v567 = vpack.c.bf16 %v551, %v551
    %v568 = vpack.c.bf16 %v552, %v552
    %v569 = vpack.c.bf16 %v553, %v553
    %v570 = vld [vmem:[#allocation7] sm:$0xff]
    %v571 = vld [vmem:[#allocation7 + $0x8] sm:$0xff]
    %v572 = vld [vmem:[#allocation7 + $0x10] sm:$0xff]
    %v573 = vld [vmem:[#allocation7 + $0x18] sm:$0xff]
    %v574 = vld [vmem:[#allocation7 + $0x20] sm:$0xff]
    %v575 = vld [vmem:[#allocation7 + $0x28] sm:$0xff]
    %v576 = vld [vmem:[#allocation7 + $0x30] sm:$0xff]
    %v577 = vld [vmem:[#allocation7 + $0x38] sm:$0xff]
    %v578 = vld [vmem:[#allocation7 + $0x40] sm:$0xff]
    %v579 = vld [vmem:[#allocation7 + $0x48] sm:$0xff]
    %v580 = vld [vmem:[#allocation7 + $0x50] sm:$0xff]
    %v581 = vld [vmem:[#allocation7 + $0x58] sm:$0xff]
    %v582 = vld [vmem:[#allocation7 + $0x60] sm:$0xff]
    %v583 = vld [vmem:[#allocation7 + $0x68] sm:$0xff]
    %v584 = vld [vmem:[#allocation7 + $0x70] sm:$0xff]
    %v585 = vld [vmem:[#allocation7 + $0x78] sm:$0xff]
    %v586 = vld [vmem:[#allocation7 + $0x80] sm:$0xff]
    %v587 = vld [vmem:[#allocation7 + $0x88] sm:$0xff]
    %v588 = vld [vmem:[#allocation7 + $0x90] sm:$0xff]
    %v589 = vld [vmem:[#allocation7 + $0x98] sm:$0xff]
    %v590 = vld [vmem:[#allocation7 + $0xa0] sm:$0xff]
    %v591 = vld [vmem:[#allocation7 + $0xa8] sm:$0xff]
    %v592 = vld [vmem:[#allocation7 + $0xb0] sm:$0xff]
    %v593 = vld [vmem:[#allocation7 + $0xb8] sm:$0xff]
    %v594 = vld [vmem:[#allocation7 + $0xc0] sm:$0xff]
    %v595 = vld [vmem:[#allocation7 + $0xc8] sm:$0xff]
    %v596 = vld [vmem:[#allocation7 + $0xd0] sm:$0xff]
    %v597 = vld [vmem:[#allocation7 + $0xd8] sm:$0xff]
    %v598 = vld [vmem:[#allocation7 + $0xe0] sm:$0xff]
    %v599 = vld [vmem:[#allocation7 + $0xe8] sm:$0xff]
    %v600 = vld [vmem:[#allocation7 + $0xf0] sm:$0xff]
    %v601 = vld [vmem:[#allocation7 + $0xf8] sm:$0xff]
    %v602 = vld [vmem:[#allocation7 + $0x100] sm:$0xff]
    %v603 = vld [vmem:[#allocation7 + $0x108] sm:$0xff]
    %v604 = vld [vmem:[#allocation7 + $0x110] sm:$0xff]
    %v605 = vld [vmem:[#allocation7 + $0x118] sm:$0xff]
    %v606 = vld [vmem:[#allocation7 + $0x120] sm:$0xff]
    %v607 = vld [vmem:[#allocation7 + $0x128] sm:$0xff]
    %v608 = vld [vmem:[#allocation7 + $0x130] sm:$0xff]
    %v609 = vld [vmem:[#allocation7 + $0x138] sm:$0xff]
    %v610 = vld [vmem:[#allocation7 + $0x140] sm:$0xff]
    %v611 = vld [vmem:[#allocation7 + $0x148] sm:$0xff]
    %v612 = vld [vmem:[#allocation7 + $0x150] sm:$0xff]
    %v613 = vld [vmem:[#allocation7 + $0x158] sm:$0xff]
    %v614 = vld [vmem:[#allocation7 + $0x160] sm:$0xff]
    %v615 = vld [vmem:[#allocation7 + $0x168] sm:$0xff]
    %v616 = vld [vmem:[#allocation7 + $0x170] sm:$0xff]
    %v617 = vld [vmem:[#allocation7 + $0x178] sm:$0xff]
    %v618 = vld [vmem:[#allocation7 + $0x180] sm:$0xff]
    %v619 = vld [vmem:[#allocation7 + $0x188] sm:$0xff]
    %v620 = vld [vmem:[#allocation7 + $0x190] sm:$0xff]
    %v621 = vld [vmem:[#allocation7 + $0x198] sm:$0xff]
    %v622 = vld [vmem:[#allocation7 + $0x1a0] sm:$0xff]
    %v623 = vld [vmem:[#allocation7 + $0x1a8] sm:$0xff]
    %v624 = vld [vmem:[#allocation7 + $0x1b0] sm:$0xff]
    %v625 = vld [vmem:[#allocation7 + $0x1b8] sm:$0xff]
    %v626 = vld [vmem:[#allocation7 + $0x1c0] sm:$0xff]
    %v627 = vld [vmem:[#allocation7 + $0x1c8] sm:$0xff]
    %v628 = vld [vmem:[#allocation7 + $0x1d0] sm:$0xff]
    %v629 = vld [vmem:[#allocation7 + $0x1d8] sm:$0xff]
    %v630 = vld [vmem:[#allocation7 + $0x1e0] sm:$0xff]
    %v631 = vld [vmem:[#allocation7 + $0x1e8] sm:$0xff]
    %v632 = vld [vmem:[#allocation7 + $0x1f0] sm:$0xff]
    %v633 = vld [vmem:[#allocation7 + $0x1f8] sm:$0xff]
    %v634 = vld [vmem:[#allocation7 + $0x200] sm:$0xff]
    %v635 = vld [vmem:[#allocation7 + $0x208] sm:$0xff]
    %v636 = vld [vmem:[#allocation7 + $0x210] sm:$0xff]
    %v637 = vld [vmem:[#allocation7 + $0x218] sm:$0xff]
    %v638 = vld [vmem:[#allocation7 + $0x220] sm:$0xff]
    %v639 = vld [vmem:[#allocation7 + $0x228] sm:$0xff]
    %v640 = vld [vmem:[#allocation7 + $0x230] sm:$0xff]
    %v641 = vld [vmem:[#allocation7 + $0x238] sm:$0xff]
    %v642 = vld [vmem:[#allocation7 + $0x240] sm:$0xff]
    %v643 = vld [vmem:[#allocation7 + $0x248] sm:$0xff]
    %v644 = vld [vmem:[#allocation7 + $0x250] sm:$0xff]
    %v645 = vld [vmem:[#allocation7 + $0x258] sm:$0xff]
    %v646 = vld [vmem:[#allocation7 + $0x260] sm:$0xff]
    %v647 = vld [vmem:[#allocation7 + $0x268] sm:$0xff]
    %v648 = vld [vmem:[#allocation7 + $0x270] sm:$0xff]
    %v649 = vld [vmem:[#allocation7 + $0x278] sm:$0xff]
    %v650 = vld [vmem:[#allocation7 + $0x280] sm:$0xff]
    %v651 = vld [vmem:[#allocation7 + $0x288] sm:$0xff]
    %v652 = vld [vmem:[#allocation7 + $0x290] sm:$0xff]
    %v653 = vld [vmem:[#allocation7 + $0x298] sm:$0xff]
    %v654 = vld [vmem:[#allocation7 + $0x2a0] sm:$0xff]
    %v655 = vld [vmem:[#allocation7 + $0x2a8] sm:$0xff]
    %v656 = vld [vmem:[#allocation7 + $0x2b0] sm:$0xff]
    %v657 = vld [vmem:[#allocation7 + $0x2b8] sm:$0xff]
    %v658 = vld [vmem:[#allocation7 + $0x2c0] sm:$0xff]
    %v659 = vld [vmem:[#allocation7 + $0x2c8] sm:$0xff]
    %v660 = vld [vmem:[#allocation7 + $0x2d0] sm:$0xff]
    %v661 = vld [vmem:[#allocation7 + $0x2d8] sm:$0xff]
    %v662 = vld [vmem:[#allocation7 + $0x2e0] sm:$0xff]
    %v663 = vld [vmem:[#allocation7 + $0x2e8] sm:$0xff]
    %v664 = vld [vmem:[#allocation7 + $0x2f0] sm:$0xff]
    %v665 = vld [vmem:[#allocation7 + $0x2f8] sm:$0xff]
    %v666 = vld [vmem:[#allocation7 + $0x300] sm:$0xff]
    %v667 = vld [vmem:[#allocation7 + $0x308] sm:$0xff]
    %v668 = vld [vmem:[#allocation7 + $0x310] sm:$0xff]
    %v669 = vld [vmem:[#allocation7 + $0x318] sm:$0xff]
    %v670 = vld [vmem:[#allocation7 + $0x320] sm:$0xff]
    %v671 = vld [vmem:[#allocation7 + $0x328] sm:$0xff]
    %v672 = vld [vmem:[#allocation7 + $0x330] sm:$0xff]
    %v673 = vld [vmem:[#allocation7 + $0x338] sm:$0xff]
    %v674 = vld [vmem:[#allocation7 + $0x340] sm:$0xff]
    %v675 = vld [vmem:[#allocation7 + $0x348] sm:$0xff]
    %v676 = vld [vmem:[#allocation7 + $0x350] sm:$0xff]
    %v677 = vld [vmem:[#allocation7 + $0x358] sm:$0xff]
    %v678 = vld [vmem:[#allocation7 + $0x360] sm:$0xff]
    %v679 = vld [vmem:[#allocation7 + $0x368] sm:$0xff]
    %v680 = vld [vmem:[#allocation7 + $0x370] sm:$0xff]
    %v681 = vld [vmem:[#allocation7 + $0x378] sm:$0xff]
    %v682 = vld [vmem:[#allocation7 + $0x380] sm:$0xff]
    %v683 = vld [vmem:[#allocation7 + $0x388] sm:$0xff]
    %v684 = vld [vmem:[#allocation7 + $0x390] sm:$0xff]
    %v685 = vld [vmem:[#allocation7 + $0x398] sm:$0xff]
    %v686 = vld [vmem:[#allocation7 + $0x3a0] sm:$0xff]
    %v687 = vld [vmem:[#allocation7 + $0x3a8] sm:$0xff]
    %v688 = vld [vmem:[#allocation7 + $0x3b0] sm:$0xff]
    %v689 = vld [vmem:[#allocation7 + $0x3b8] sm:$0xff]
    %v690 = vld [vmem:[#allocation7 + $0x3c0] sm:$0xff]
    %v691 = vld [vmem:[#allocation7 + $0x3c8] sm:$0xff]
    %v692 = vld [vmem:[#allocation7 + $0x3d0] sm:$0xff]
    %v693 = vld [vmem:[#allocation7 + $0x3d8] sm:$0xff]
    %v694 = vld [vmem:[#allocation7 + $0x3e0] sm:$0xff]
    %v695 = vld [vmem:[#allocation7 + $0x3e8] sm:$0xff]
    %v696 = vld [vmem:[#allocation7 + $0x3f0] sm:$0xff]
    %v697 = vld [vmem:[#allocation7 + $0x3f8] sm:$0xff]
    %v698 = vld [vmem:[#allocation7 + $0x400] sm:$0xff]
    %v699 = vld [vmem:[#allocation7 + $0x408] sm:$0xff]
    %v700 = vld [vmem:[#allocation7 + $0x410] sm:$0xff]
    %v701 = vld [vmem:[#allocation7 + $0x418] sm:$0xff]
    %v702 = vld [vmem:[#allocation7 + $0x420] sm:$0xff]
    %v703 = vld [vmem:[#allocation7 + $0x428] sm:$0xff]
    %v704 = vld [vmem:[#allocation7 + $0x430] sm:$0xff]
    %v705 = vld [vmem:[#allocation7 + $0x438] sm:$0xff]
    %v706 = vld [vmem:[#allocation7 + $0x440] sm:$0xff]
    %v707 = vld [vmem:[#allocation7 + $0x448] sm:$0xff]
    %v708 = vld [vmem:[#allocation7 + $0x450] sm:$0xff]
    %v709 = vld [vmem:[#allocation7 + $0x458] sm:$0xff]
    %v710 = vld [vmem:[#allocation7 + $0x460] sm:$0xff]
    %v711 = vld [vmem:[#allocation7 + $0x468] sm:$0xff]
    %v712 = vld [vmem:[#allocation7 + $0x470] sm:$0xff]
    %v713 = vld [vmem:[#allocation7 + $0x478] sm:$0xff]
    %v714 = vld [vmem:[#allocation7 + $0x480] sm:$0xff]
    %v715 = vld [vmem:[#allocation7 + $0x488] sm:$0xff]
    %v716 = vld [vmem:[#allocation7 + $0x490] sm:$0xff]
    %v717 = vld [vmem:[#allocation7 + $0x498] sm:$0xff]
    %v718 = vld [vmem:[#allocation7 + $0x4a0] sm:$0xff]
    %v719 = vld [vmem:[#allocation7 + $0x4a8] sm:$0xff]
    %v720 = vld [vmem:[#allocation7 + $0x4b0] sm:$0xff]
    %v721 = vld [vmem:[#allocation7 + $0x4b8] sm:$0xff]
    %v722 = vld [vmem:[#allocation7 + $0x4c0] sm:$0xff]
    %v723 = vld [vmem:[#allocation7 + $0x4c8] sm:$0xff]
    %v724 = vld [vmem:[#allocation7 + $0x4d0] sm:$0xff]
    %v725 = vld [vmem:[#allocation7 + $0x4d8] sm:$0xff]
    %v726 = vld [vmem:[#allocation7 + $0x4e0] sm:$0xff]
    %v727 = vld [vmem:[#allocation7 + $0x4e8] sm:$0xff]
    %v728 = vld [vmem:[#allocation7 + $0x4f0] sm:$0xff]
    %v729 = vld [vmem:[#allocation7 + $0x4f8] sm:$0xff]
    %v730 = vld [vmem:[#allocation7 + $0x500] sm:$0xff]
    %v731 = vld [vmem:[#allocation7 + $0x508] sm:$0xff]
    %v732 = vld [vmem:[#allocation7 + $0x510] sm:$0xff]
    %v733 = vld [vmem:[#allocation7 + $0x518] sm:$0xff]
    %v734 = vld [vmem:[#allocation7 + $0x520] sm:$0xff]
    %v735 = vld [vmem:[#allocation7 + $0x528] sm:$0xff]
    %v736 = vld [vmem:[#allocation7 + $0x530] sm:$0xff]
    %v737 = vld [vmem:[#allocation7 + $0x538] sm:$0xff]
    %v738 = vld [vmem:[#allocation7 + $0x540] sm:$0xff]
    %v739 = vld [vmem:[#allocation7 + $0x548] sm:$0xff]
    %v740 = vld [vmem:[#allocation7 + $0x550] sm:$0xff]
    %v741 = vld [vmem:[#allocation7 + $0x558] sm:$0xff]
    %v742 = vld [vmem:[#allocation7 + $0x560] sm:$0xff]
    %v743 = vld [vmem:[#allocation7 + $0x568] sm:$0xff]
    %v744 = vld [vmem:[#allocation7 + $0x570] sm:$0xff]
    %v745 = vld [vmem:[#allocation7 + $0x578] sm:$0xff]
    %v746 = vld [vmem:[#allocation7 + $0x580] sm:$0xff]
    %v747 = vld [vmem:[#allocation7 + $0x588] sm:$0xff]
    %v748 = vld [vmem:[#allocation7 + $0x590] sm:$0xff]
    %v749 = vld [vmem:[#allocation7 + $0x598] sm:$0xff]
    %v750 = vld [vmem:[#allocation7 + $0x5a0] sm:$0xff]
    %v751 = vld [vmem:[#allocation7 + $0x5a8] sm:$0xff]
    %v752 = vld [vmem:[#allocation7 + $0x5b0] sm:$0xff]
    %v753 = vld [vmem:[#allocation7 + $0x5b8] sm:$0xff]
    %v754 = vld [vmem:[#allocation7 + $0x5c0] sm:$0xff]
    %v755 = vld [vmem:[#allocation7 + $0x5c8] sm:$0xff]
    %v756 = vld [vmem:[#allocation7 + $0x5d0] sm:$0xff]
    %v757 = vld [vmem:[#allocation7 + $0x5d8] sm:$0xff]
    %v758 = vld [vmem:[#allocation7 + $0x5e0] sm:$0xff]
    %v759 = vld [vmem:[#allocation7 + $0x5e8] sm:$0xff]
    %v760 = vld [vmem:[#allocation7 + $0x5f0] sm:$0xff]
    %v761 = vld [vmem:[#allocation7 + $0x5f8] sm:$0xff]
    %v762 = vld [vmem:[#allocation7 + $0x600] sm:$0xff]
    %v763 = vld [vmem:[#allocation7 + $0x608] sm:$0xff]
    %v764 = vld [vmem:[#allocation7 + $0x610] sm:$0xff]
    %v765 = vld [vmem:[#allocation7 + $0x618] sm:$0xff]
    %v766 = vld [vmem:[#allocation7 + $0x620] sm:$0xff]
    %v767 = vld [vmem:[#allocation7 + $0x628] sm:$0xff]
    %v768 = vld [vmem:[#allocation7 + $0x630] sm:$0xff]
    %v769 = vld [vmem:[#allocation7 + $0x638] sm:$0xff]
    %v770 = vld [vmem:[#allocation7 + $0x640] sm:$0xff]
    %v771 = vld [vmem:[#allocation7 + $0x648] sm:$0xff]
    %v772 = vld [vmem:[#allocation7 + $0x650] sm:$0xff]
    %v773 = vld [vmem:[#allocation7 + $0x658] sm:$0xff]
    %v774 = vld [vmem:[#allocation7 + $0x660] sm:$0xff]
    %v775 = vld [vmem:[#allocation7 + $0x668] sm:$0xff]
    %v776 = vld [vmem:[#allocation7 + $0x670] sm:$0xff]
    %v777 = vld [vmem:[#allocation7 + $0x678] sm:$0xff]
    %v778 = vld [vmem:[#allocation7 + $0x680] sm:$0xff]
    %v779 = vld [vmem:[#allocation7 + $0x688] sm:$0xff]
    %v780 = vld [vmem:[#allocation7 + $0x690] sm:$0xff]
    %v781 = vld [vmem:[#allocation7 + $0x698] sm:$0xff]
    %v782 = vld [vmem:[#allocation7 + $0x6a0] sm:$0xff]
    %v783 = vld [vmem:[#allocation7 + $0x6a8] sm:$0xff]
    %v784 = vld [vmem:[#allocation7 + $0x6b0] sm:$0xff]
    %v785 = vld [vmem:[#allocation7 + $0x6b8] sm:$0xff]
    %v786 = vld [vmem:[#allocation7 + $0x6c0] sm:$0xff]
    %v787 = vld [vmem:[#allocation7 + $0x6c8] sm:$0xff]
    %v788 = vld [vmem:[#allocation7 + $0x6d0] sm:$0xff]
    %v789 = vld [vmem:[#allocation7 + $0x6d8] sm:$0xff]
    %v790 = vld [vmem:[#allocation7 + $0x6e0] sm:$0xff]
    %v791 = vld [vmem:[#allocation7 + $0x6e8] sm:$0xff]
    %v792 = vld [vmem:[#allocation7 + $0x6f0] sm:$0xff]
    %v793 = vld [vmem:[#allocation7 + $0x6f8] sm:$0xff]
    %v794 = vld [vmem:[#allocation7 + $0x700] sm:$0xff]
    %v795 = vld [vmem:[#allocation7 + $0x708] sm:$0xff]
    %v796 = vld [vmem:[#allocation7 + $0x710] sm:$0xff]
    %v797 = vld [vmem:[#allocation7 + $0x718] sm:$0xff]
    %v798 = vld [vmem:[#allocation7 + $0x720] sm:$0xff]
    %v799 = vld [vmem:[#allocation7 + $0x728] sm:$0xff]
    %v800 = vld [vmem:[#allocation7 + $0x730] sm:$0xff]
    %v801 = vld [vmem:[#allocation7 + $0x738] sm:$0xff]
    %v802 = vld [vmem:[#allocation7 + $0x740] sm:$0xff]
    %v803 = vld [vmem:[#allocation7 + $0x748] sm:$0xff]
    %v804 = vld [vmem:[#allocation7 + $0x750] sm:$0xff]
    %v805 = vld [vmem:[#allocation7 + $0x758] sm:$0xff]
    %v806 = vld [vmem:[#allocation7 + $0x760] sm:$0xff]
    %v807 = vld [vmem:[#allocation7 + $0x768] sm:$0xff]
    %v808 = vld [vmem:[#allocation7 + $0x770] sm:$0xff]
    %v809 = vld [vmem:[#allocation7 + $0x778] sm:$0xff]
    %v810 = vld [vmem:[#allocation7 + $0x780] sm:$0xff]
    %v811 = vld [vmem:[#allocation7 + $0x788] sm:$0xff]
    %v812 = vld [vmem:[#allocation7 + $0x790] sm:$0xff]
    %v813 = vld [vmem:[#allocation7 + $0x798] sm:$0xff]
    %v814 = vld [vmem:[#allocation7 + $0x7a0] sm:$0xff]
    %v815 = vld [vmem:[#allocation7 + $0x7a8] sm:$0xff]
    %v816 = vld [vmem:[#allocation7 + $0x7b0] sm:$0xff]
    %v817 = vld [vmem:[#allocation7 + $0x7b8] sm:$0xff]
    %v818 = vld [vmem:[#allocation7 + $0x7c0] sm:$0xff]
    %v819 = vld [vmem:[#allocation7 + $0x7c8] sm:$0xff]
    %v820 = vld [vmem:[#allocation7 + $0x7d0] sm:$0xff]
    %v821 = vld [vmem:[#allocation7 + $0x7d8] sm:$0xff]
    %v822 = vld [vmem:[#allocation7 + $0x7e0] sm:$0xff]
    %v823 = vld [vmem:[#allocation7 + $0x7e8] sm:$0xff]
    %v824 = vld [vmem:[#allocation7 + $0x7f0] sm:$0xff]
    %v825 = vld [vmem:[#allocation7 + $0x7f8] sm:$0xff]
    %v826 = vld [vmem:[#allocation7 + $0x800] sm:$0xff]
    %v827 = vld [vmem:[#allocation7 + $0x808] sm:$0xff]
    %v828 = vld [vmem:[#allocation7 + $0x810] sm:$0xff]
    %v829 = vld [vmem:[#allocation7 + $0x818] sm:$0xff]
    %v830 = vld [vmem:[#allocation7 + $0x820] sm:$0xff]
    %v831 = vld [vmem:[#allocation7 + $0x828] sm:$0xff]
    %v832 = vld [vmem:[#allocation7 + $0x830] sm:$0xff]
    %v833 = vld [vmem:[#allocation7 + $0x838] sm:$0xff]
    %v834 = vld [vmem:[#allocation7 + $0x840] sm:$0xff]
    %v835 = vld [vmem:[#allocation7 + $0x848] sm:$0xff]
    %v836 = vld [vmem:[#allocation7 + $0x850] sm:$0xff]
    %v837 = vld [vmem:[#allocation7 + $0x858] sm:$0xff]
    %v838 = vld [vmem:[#allocation7 + $0x860] sm:$0xff]
    %v839 = vld [vmem:[#allocation7 + $0x868] sm:$0xff]
    %v840 = vld [vmem:[#allocation7 + $0x870] sm:$0xff]
    %v841 = vld [vmem:[#allocation7 + $0x878] sm:$0xff]
    %v842 = vld [vmem:[#allocation7 + $0x880] sm:$0xff]
    %v843 = vld [vmem:[#allocation7 + $0x888] sm:$0xff]
    %v844 = vld [vmem:[#allocation7 + $0x890] sm:$0xff]
    %v845 = vld [vmem:[#allocation7 + $0x898] sm:$0xff]
    %v846 = vld [vmem:[#allocation7 + $0x8a0] sm:$0xff]
    %v847 = vld [vmem:[#allocation7 + $0x8a8] sm:$0xff]
    %v848 = vld [vmem:[#allocation7 + $0x8b0] sm:$0xff]
    %v849 = vld [vmem:[#allocation7 + $0x8b8] sm:$0xff]
    %v850 = vld [vmem:[#allocation7 + $0x8c0] sm:$0xff]
    %v851 = vld [vmem:[#allocation7 + $0x8c8] sm:$0xff]
    %v852 = vld [vmem:[#allocation7 + $0x8d0] sm:$0xff]
    %v853 = vld [vmem:[#allocation7 + $0x8d8] sm:$0xff]
    %v854 = vld [vmem:[#allocation7 + $0x8e0] sm:$0xff]
    %v855 = vld [vmem:[#allocation7 + $0x8e8] sm:$0xff]
    %v856 = vld [vmem:[#allocation7 + $0x8f0] sm:$0xff]
    %v857 = vld [vmem:[#allocation7 + $0x8f8] sm:$0xff]
    %v858 = vld [vmem:[#allocation7 + $0x900] sm:$0xff]
    %v859 = vld [vmem:[#allocation7 + $0x908] sm:$0xff]
    %v860 = vld [vmem:[#allocation7 + $0x910] sm:$0xff]
    %v861 = vld [vmem:[#allocation7 + $0x918] sm:$0xff]
    %v862 = vld [vmem:[#allocation7 + $0x920] sm:$0xff]
    %v863 = vld [vmem:[#allocation7 + $0x928] sm:$0xff]
    %v864 = vld [vmem:[#allocation7 + $0x930] sm:$0xff]
    %v865 = vld [vmem:[#allocation7 + $0x938] sm:$0xff]
    %v866 = vld [vmem:[#allocation7 + $0x940] sm:$0xff]
    %v867 = vld [vmem:[#allocation7 + $0x948] sm:$0xff]
    %v868 = vld [vmem:[#allocation7 + $0x950] sm:$0xff]
    %v869 = vld [vmem:[#allocation7 + $0x958] sm:$0xff]
    %v870 = vld [vmem:[#allocation7 + $0x960] sm:$0xff]
    %v871 = vld [vmem:[#allocation7 + $0x968] sm:$0xff]
    %v872 = vld [vmem:[#allocation7 + $0x970] sm:$0xff]
    %v873 = vld [vmem:[#allocation7 + $0x978] sm:$0xff]
    %v874 = vld [vmem:[#allocation7 + $0x980] sm:$0xff]
    %v875 = vld [vmem:[#allocation7 + $0x988] sm:$0xff]
    %v876 = vld [vmem:[#allocation7 + $0x990] sm:$0xff]
    %v877 = vld [vmem:[#allocation7 + $0x998] sm:$0xff]
    %v878 = vld [vmem:[#allocation7 + $0x9a0] sm:$0xff]
    %v879 = vld [vmem:[#allocation7 + $0x9a8] sm:$0xff]
    %v880 = vld [vmem:[#allocation7 + $0x9b0] sm:$0xff]
    %v881 = vld [vmem:[#allocation7 + $0x9b8] sm:$0xff]
    %v882 = vld [vmem:[#allocation7 + $0x9c0] sm:$0xff]
    %v883 = vld [vmem:[#allocation7 + $0x9c8] sm:$0xff]
    %v884 = vld [vmem:[#allocation7 + $0x9d0] sm:$0xff]
    %v885 = vld [vmem:[#allocation7 + $0x9d8] sm:$0xff]
    %v886 = vld [vmem:[#allocation7 + $0x9e0] sm:$0xff]
    %v887 = vld [vmem:[#allocation7 + $0x9e8] sm:$0xff]
    %v888 = vld [vmem:[#allocation7 + $0x9f0] sm:$0xff]
    %v889 = vld [vmem:[#allocation7 + $0x9f8] sm:$0xff]
    %v890 = vld [vmem:[#allocation7 + $0xa00] sm:$0xff]
    %v891 = vld [vmem:[#allocation7 + $0xa08] sm:$0xff]
    %v892 = vld [vmem:[#allocation7 + $0xa10] sm:$0xff]
    %v893 = vld [vmem:[#allocation7 + $0xa18] sm:$0xff]
    %v894 = vld [vmem:[#allocation7 + $0xa20] sm:$0xff]
    %v895 = vld [vmem:[#allocation7 + $0xa28] sm:$0xff]
    %v896 = vld [vmem:[#allocation7 + $0xa30] sm:$0xff]
    %v897 = vld [vmem:[#allocation7 + $0xa38] sm:$0xff]
    %v898 = vld [vmem:[#allocation7 + $0xa40] sm:$0xff]
    %v899 = vld [vmem:[#allocation7 + $0xa48] sm:$0xff]
    %v900 = vld [vmem:[#allocation7 + $0xa50] sm:$0xff]
    %v901 = vld [vmem:[#allocation7 + $0xa58] sm:$0xff]
    %v902 = vld [vmem:[#allocation7 + $0xa60] sm:$0xff]
    %v903 = vld [vmem:[#allocation7 + $0xa68] sm:$0xff]
    %v904 = vld [vmem:[#allocation7 + $0xa70] sm:$0xff]
    %v905 = vld [vmem:[#allocation7 + $0xa78] sm:$0xff]
    %v906 = vld [vmem:[#allocation7 + $0xa80] sm:$0xff]
    %v907 = vld [vmem:[#allocation7 + $0xa88] sm:$0xff]
    %v908 = vld [vmem:[#allocation7 + $0xa90] sm:$0xff]
    %v909 = vld [vmem:[#allocation7 + $0xa98] sm:$0xff]
    %v910 = vld [vmem:[#allocation7 + $0xaa0] sm:$0xff]
    %v911 = vld [vmem:[#allocation7 + $0xaa8] sm:$0xff]
    %v912 = vld [vmem:[#allocation7 + $0xab0] sm:$0xff]
    %v913 = vld [vmem:[#allocation7 + $0xab8] sm:$0xff]
    %v914 = vld [vmem:[#allocation7 + $0xac0] sm:$0xff]
    %v915 = vld [vmem:[#allocation7 + $0xac8] sm:$0xff]
    %v916 = vld [vmem:[#allocation7 + $0xad0] sm:$0xff]
    %v917 = vld [vmem:[#allocation7 + $0xad8] sm:$0xff]
    %v918 = vld [vmem:[#allocation7 + $0xae0] sm:$0xff]
    %v919 = vld [vmem:[#allocation7 + $0xae8] sm:$0xff]
    %v920 = vld [vmem:[#allocation7 + $0xaf0] sm:$0xff]
    %v921 = vld [vmem:[#allocation7 + $0xaf8] sm:$0xff]
    %v922 = vld [vmem:[#allocation7 + $0xb00] sm:$0xff]
    %v923 = vld [vmem:[#allocation7 + $0xb08] sm:$0xff]
    %v924 = vld [vmem:[#allocation7 + $0xb10] sm:$0xff]
    %v925 = vld [vmem:[#allocation7 + $0xb18] sm:$0xff]
    %v926 = vld [vmem:[#allocation7 + $0xb20] sm:$0xff]
    %v927 = vld [vmem:[#allocation7 + $0xb28] sm:$0xff]
    %v928 = vld [vmem:[#allocation7 + $0xb30] sm:$0xff]
    %v929 = vld [vmem:[#allocation7 + $0xb38] sm:$0xff]
    %v930 = vld [vmem:[#allocation7 + $0xb40] sm:$0xff]
    %v931 = vld [vmem:[#allocation7 + $0xb48] sm:$0xff]
    %v932 = vld [vmem:[#allocation7 + $0xb50] sm:$0xff]
    %v933 = vld [vmem:[#allocation7 + $0xb58] sm:$0xff]
    %v934 = vld [vmem:[#allocation7 + $0xb60] sm:$0xff]
    %v935 = vld [vmem:[#allocation7 + $0xb68] sm:$0xff]
    %v936 = vld [vmem:[#allocation7 + $0xb70] sm:$0xff]
    %v937 = vld [vmem:[#allocation7 + $0xb78] sm:$0xff]
    %v938 = vld [vmem:[#allocation7 + $0xb80] sm:$0xff]
    %v939 = vld [vmem:[#allocation7 + $0xb88] sm:$0xff]
    %v940 = vld [vmem:[#allocation7 + $0xb90] sm:$0xff]
    %v941 = vld [vmem:[#allocation7 + $0xb98] sm:$0xff]
    %v942 = vld [vmem:[#allocation7 + $0xba0] sm:$0xff]
    %v943 = vld [vmem:[#allocation7 + $0xba8] sm:$0xff]
    %v944 = vld [vmem:[#allocation7 + $0xbb0] sm:$0xff]
    %v945 = vld [vmem:[#allocation7 + $0xbb8] sm:$0xff]
    %v946 = vld [vmem:[#allocation7 + $0xbc0] sm:$0xff]
    %v947 = vld [vmem:[#allocation7 + $0xbc8] sm:$0xff]
    %v948 = vld [vmem:[#allocation7 + $0xbd0] sm:$0xff]
    %v949 = vld [vmem:[#allocation7 + $0xbd8] sm:$0xff]
    %v950 = vld [vmem:[#allocation7 + $0xbe0] sm:$0xff]
    %v951 = vld [vmem:[#allocation7 + $0xbe8] sm:$0xff]
    %v952 = vld [vmem:[#allocation7 + $0xbf0] sm:$0xff]
    %v953 = vld [vmem:[#allocation7 + $0xbf8] sm:$0xff]
    %v954 = vld [vmem:[#allocation7 + $0xc00] sm:$0xff]
    %v955 = vld [vmem:[#allocation7 + $0xc08] sm:$0xff]
    %v956 = vld [vmem:[#allocation7 + $0xc10] sm:$0xff]
    %v957 = vld [vmem:[#allocation7 + $0xc18] sm:$0xff]
    %v958 = vld [vmem:[#allocation7 + $0xc20] sm:$0xff]
    %v959 = vld [vmem:[#allocation7 + $0xc28] sm:$0xff]
    %v960 = vld [vmem:[#allocation7 + $0xc30] sm:$0xff]
    %v961 = vld [vmem:[#allocation7 + $0xc38] sm:$0xff]
    %v962 = vld [vmem:[#allocation7 + $0xc40] sm:$0xff]
    %v963 = vld [vmem:[#allocation7 + $0xc48] sm:$0xff]
    %v964 = vld [vmem:[#allocation7 + $0xc50] sm:$0xff]
    %v965 = vld [vmem:[#allocation7 + $0xc58] sm:$0xff]
    %v966 = vld [vmem:[#allocation7 + $0xc60] sm:$0xff]
    %v967 = vld [vmem:[#allocation7 + $0xc68] sm:$0xff]
    %v968 = vld [vmem:[#allocation7 + $0xc70] sm:$0xff]
    %v969 = vld [vmem:[#allocation7 + $0xc78] sm:$0xff]
    %v970 = vld [vmem:[#allocation7 + $0xc80] sm:$0xff]
    %v971 = vld [vmem:[#allocation7 + $0xc88] sm:$0xff]
    %v972 = vld [vmem:[#allocation7 + $0xc90] sm:$0xff]
    %v973 = vld [vmem:[#allocation7 + $0xc98] sm:$0xff]
    %v974 = vld [vmem:[#allocation7 + $0xca0] sm:$0xff]
    %v975 = vld [vmem:[#allocation7 + $0xca8] sm:$0xff]
    %v976 = vld [vmem:[#allocation7 + $0xcb0] sm:$0xff]
    %v977 = vld [vmem:[#allocation7 + $0xcb8] sm:$0xff]
    %v978 = vld [vmem:[#allocation7 + $0xcc0] sm:$0xff]
    %v979 = vld [vmem:[#allocation7 + $0xcc8] sm:$0xff]
    %v980 = vld [vmem:[#allocation7 + $0xcd0] sm:$0xff]
    %v981 = vld [vmem:[#allocation7 + $0xcd8] sm:$0xff]
    %v982 = vld [vmem:[#allocation7 + $0xce0] sm:$0xff]
    %v983 = vld [vmem:[#allocation7 + $0xce8] sm:$0xff]
    %v984 = vld [vmem:[#allocation7 + $0xcf0] sm:$0xff]
    %v985 = vld [vmem:[#allocation7 + $0xcf8] sm:$0xff]
    %v986 = vld [vmem:[#allocation7 + $0xd00] sm:$0xff]
    %v987 = vld [vmem:[#allocation7 + $0xd08] sm:$0xff]
    %v988 = vld [vmem:[#allocation7 + $0xd10] sm:$0xff]
    %v989 = vld [vmem:[#allocation7 + $0xd18] sm:$0xff]
    %v990 = vld [vmem:[#allocation7 + $0xd20] sm:$0xff]
    %v991 = vld [vmem:[#allocation7 + $0xd28] sm:$0xff]
    %v992 = vld [vmem:[#allocation7 + $0xd30] sm:$0xff]
    %v993 = vld [vmem:[#allocation7 + $0xd38] sm:$0xff]
    %v994 = vld [vmem:[#allocation7 + $0xd40] sm:$0xff]
    %v995 = vld [vmem:[#allocation7 + $0xd48] sm:$0xff]
    %v996 = vld [vmem:[#allocation7 + $0xd50] sm:$0xff]
    %v997 = vld [vmem:[#allocation7 + $0xd58] sm:$0xff]
    %v998 = vld [vmem:[#allocation7 + $0xd60] sm:$0xff]
    %v999 = vld [vmem:[#allocation7 + $0xd68] sm:$0xff]
    %v1000 = vld [vmem:[#allocation7 + $0xd70] sm:$0xff]
    %v1001 = vld [vmem:[#allocation7 + $0xd78] sm:$0xff]
    %v1002 = vld [vmem:[#allocation7 + $0xd80] sm:$0xff]
    %v1003 = vld [vmem:[#allocation7 + $0xd88] sm:$0xff]
    %v1004 = vld [vmem:[#allocation7 + $0xd90] sm:$0xff]
    %v1005 = vld [vmem:[#allocation7 + $0xd98] sm:$0xff]
    %v1006 = vld [vmem:[#allocation7 + $0xda0] sm:$0xff]
    %v1007 = vld [vmem:[#allocation7 + $0xda8] sm:$0xff]
    %v1008 = vld [vmem:[#allocation7 + $0xdb0] sm:$0xff]
    %v1009 = vld [vmem:[#allocation7 + $0xdb8] sm:$0xff]
    %v1010 = vld [vmem:[#allocation7 + $0xdc0] sm:$0xff]
    %v1011 = vld [vmem:[#allocation7 + $0xdc8] sm:$0xff]
    %v1012 = vld [vmem:[#allocation7 + $0xdd0] sm:$0xff]
    %v1013 = vld [vmem:[#allocation7 + $0xdd8] sm:$0xff]
    %v1014 = vld [vmem:[#allocation7 + $0xde0] sm:$0xff]
    %v1015 = vld [vmem:[#allocation7 + $0xde8] sm:$0xff]
    %v1016 = vld [vmem:[#allocation7 + $0xdf0] sm:$0xff]
    %v1017 = vld [vmem:[#allocation7 + $0xdf8] sm:$0xff]
    %v1018 = vld [vmem:[#allocation7 + $0xe00] sm:$0xff]
    %v1019 = vld [vmem:[#allocation7 + $0xe08] sm:$0xff]
    %v1020 = vld [vmem:[#allocation7 + $0xe10] sm:$0xff]
    %v1021 = vld [vmem:[#allocation7 + $0xe18] sm:$0xff]
    %v1022 = vld [vmem:[#allocation7 + $0xe20] sm:$0xff]
    %v1023 = vld [vmem:[#allocation7 + $0xe28] sm:$0xff]
    %v1024 = vld [vmem:[#allocation7 + $0xe30] sm:$0xff]
    %v1025 = vld [vmem:[#allocation7 + $0xe38] sm:$0xff]
    %v1026 = vld [vmem:[#allocation7 + $0xe40] sm:$0xff]
    %v1027 = vld [vmem:[#allocation7 + $0xe48] sm:$0xff]
    %v1028 = vld [vmem:[#allocation7 + $0xe50] sm:$0xff]
    %v1029 = vld [vmem:[#allocation7 + $0xe58] sm:$0xff]
    %v1030 = vld [vmem:[#allocation7 + $0xe60] sm:$0xff]
    %v1031 = vld [vmem:[#allocation7 + $0xe68] sm:$0xff]
    %v1032 = vld [vmem:[#allocation7 + $0xe70] sm:$0xff]
    %v1033 = vld [vmem:[#allocation7 + $0xe78] sm:$0xff]
    %v1034 = vld [vmem:[#allocation7 + $0xe80] sm:$0xff]
    %v1035 = vld [vmem:[#allocation7 + $0xe88] sm:$0xff]
    %v1036 = vld [vmem:[#allocation7 + $0xe90] sm:$0xff]
    %v1037 = vld [vmem:[#allocation7 + $0xe98] sm:$0xff]
    %v1038 = vld [vmem:[#allocation7 + $0xea0] sm:$0xff]
    %v1039 = vld [vmem:[#allocation7 + $0xea8] sm:$0xff]
    %v1040 = vld [vmem:[#allocation7 + $0xeb0] sm:$0xff]
    %v1041 = vld [vmem:[#allocation7 + $0xeb8] sm:$0xff]
    %v1042 = vld [vmem:[#allocation7 + $0xec0] sm:$0xff]
    %v1043 = vld [vmem:[#allocation7 + $0xec8] sm:$0xff]
    %v1044 = vld [vmem:[#allocation7 + $0xed0] sm:$0xff]
    %v1045 = vld [vmem:[#allocation7 + $0xed8] sm:$0xff]
    %v1046 = vld [vmem:[#allocation7 + $0xee0] sm:$0xff]
    %v1047 = vld [vmem:[#allocation7 + $0xee8] sm:$0xff]
    %v1048 = vld [vmem:[#allocation7 + $0xef0] sm:$0xff]
    %v1049 = vld [vmem:[#allocation7 + $0xef8] sm:$0xff]
    %v1050 = vld [vmem:[#allocation7 + $0xf00] sm:$0xff]
    %v1051 = vld [vmem:[#allocation7 + $0xf08] sm:$0xff]
    %v1052 = vld [vmem:[#allocation7 + $0xf10] sm:$0xff]
    %v1053 = vld [vmem:[#allocation7 + $0xf18] sm:$0xff]
    %v1054 = vld [vmem:[#allocation7 + $0xf20] sm:$0xff]
    %v1055 = vld [vmem:[#allocation7 + $0xf28] sm:$0xff]
    %v1056 = vld [vmem:[#allocation7 + $0xf30] sm:$0xff]
    %v1057 = vld [vmem:[#allocation7 + $0xf38] sm:$0xff]
    %v1058 = vld [vmem:[#allocation7 + $0xf40] sm:$0xff]
    %v1059 = vld [vmem:[#allocation7 + $0xf48] sm:$0xff]
    %v1060 = vld [vmem:[#allocation7 + $0xf50] sm:$0xff]
    %v1061 = vld [vmem:[#allocation7 + $0xf58] sm:$0xff]
    %v1062 = vld [vmem:[#allocation7 + $0xf60] sm:$0xff]
    %v1063 = vld [vmem:[#allocation7 + $0xf68] sm:$0xff]
    %v1064 = vld [vmem:[#allocation7 + $0xf70] sm:$0xff]
    %v1065 = vld [vmem:[#allocation7 + $0xf78] sm:$0xff]
    %v1066 = vld [vmem:[#allocation7 + $0xf80] sm:$0xff]
    %v1067 = vld [vmem:[#allocation7 + $0xf88] sm:$0xff]
    %v1068 = vld [vmem:[#allocation7 + $0xf90] sm:$0xff]
    %v1069 = vld [vmem:[#allocation7 + $0xf98] sm:$0xff]
    %v1070 = vld [vmem:[#allocation7 + $0xfa0] sm:$0xff]
    %v1071 = vld [vmem:[#allocation7 + $0xfa8] sm:$0xff]
    %v1072 = vld [vmem:[#allocation7 + $0xfb0] sm:$0xff]
    %v1073 = vld [vmem:[#allocation7 + $0xfb8] sm:$0xff]
    %v1074 = vld [vmem:[#allocation7 + $0xfc0] sm:$0xff]
    %v1075 = vld [vmem:[#allocation7 + $0xfc8] sm:$0xff]
    %v1076 = vld [vmem:[#allocation7 + $0xfd0] sm:$0xff]
    %v1077 = vld [vmem:[#allocation7 + $0xfd8] sm:$0xff]
    %v1078 = vld [vmem:[#allocation7 + $0xfe0] sm:$0xff]
    %v1079 = vld [vmem:[#allocation7 + $0xfe8] sm:$0xff]
    %v1080 = vld [vmem:[#allocation7 + $0xff0] sm:$0xff]
    %v1081 = vld [vmem:[#allocation7 + $0xff8] sm:$0xff]
    %v1082 = vld [vmem:[#allocation10 + $0x10] sm:$0xf]
    %v1084 = vperm.slane %v1082, 0
    %v1085 = vperm.slane %v1082, 1
    %v1086 = vperm.slane %v1082, 2
    %v1087 = vperm.slane %v1082, 3
    %v1604 = vunpack.c.l.b16 %v570
    %v1605 = vunpack.c.h.b16 %v570
    %v1606 = vunpack.c.l.b16 %v571
    %v1607 = vunpack.c.h.b16 %v571
    %v1608 = vunpack.c.l.b16 %v572
    %v1609 = vunpack.c.h.b16 %v572
    %v1610 = vunpack.c.l.b16 %v573
    %v1611 = vunpack.c.h.b16 %v573
    %v1612 = vunpack.c.l.b16 %v574
    %v1613 = vunpack.c.h.b16 %v574
    %v1614 = vunpack.c.l.b16 %v575
    %v1615 = vunpack.c.h.b16 %v575
    %v1616 = vunpack.c.l.b16 %v576
    %v1617 = vunpack.c.h.b16 %v576
    %v1618 = vunpack.c.l.b16 %v577
    %v1619 = vunpack.c.h.b16 %v577
    %v1620 = vunpack.c.l.b16 %v578
    %v1621 = vunpack.c.h.b16 %v578
    %v1622 = vunpack.c.l.b16 %v579
    %v1623 = vunpack.c.h.b16 %v579
    %v1624 = vunpack.c.l.b16 %v580
    %v1625 = vunpack.c.h.b16 %v580
    %v1626 = vunpack.c.l.b16 %v581
    %v1627 = vunpack.c.h.b16 %v581
    %v1628 = vunpack.c.l.b16 %v582
    %v1629 = vunpack.c.h.b16 %v582
    %v1630 = vunpack.c.l.b16 %v583
    %v1631 = vunpack.c.h.b16 %v583
    %v1632 = vunpack.c.l.b16 %v584
    %v1633 = vunpack.c.h.b16 %v584
    %v1634 = vunpack.c.l.b16 %v585
    %v1635 = vunpack.c.h.b16 %v585
    %v1636 = vunpack.c.l.b16 %v586
    %v1637 = vunpack.c.h.b16 %v586
    %v1638 = vunpack.c.l.b16 %v587
    %v1639 = vunpack.c.h.b16 %v587
    %v1640 = vunpack.c.l.b16 %v588
    %v1641 = vunpack.c.h.b16 %v588
    %v1642 = vunpack.c.l.b16 %v589
    %v1643 = vunpack.c.h.b16 %v589
    %v1644 = vunpack.c.l.b16 %v590
    %v1645 = vunpack.c.h.b16 %v590
    %v1646 = vunpack.c.l.b16 %v591
    %v1647 = vunpack.c.h.b16 %v591
    %v1648 = vunpack.c.l.b16 %v592
    %v1649 = vunpack.c.h.b16 %v592
    %v1650 = vunpack.c.l.b16 %v593
    %v1651 = vunpack.c.h.b16 %v593
    %v1652 = vunpack.c.l.b16 %v594
    %v1653 = vunpack.c.h.b16 %v594
    %v1654 = vunpack.c.l.b16 %v595
    %v1655 = vunpack.c.h.b16 %v595
    %v1656 = vunpack.c.l.b16 %v596
    %v1657 = vunpack.c.h.b16 %v596
    %v1658 = vunpack.c.l.b16 %v597
    %v1659 = vunpack.c.h.b16 %v597
    %v1660 = vunpack.c.l.b16 %v598
    %v1661 = vunpack.c.h.b16 %v598
    %v1662 = vunpack.c.l.b16 %v599
    %v1663 = vunpack.c.h.b16 %v599
    %v1664 = vunpack.c.l.b16 %v600
    %v1665 = vunpack.c.h.b16 %v600
    %v1666 = vunpack.c.l.b16 %v601
    %v1667 = vunpack.c.h.b16 %v601
    %v1668 = vunpack.c.l.b16 %v602
    %v1669 = vunpack.c.h.b16 %v602
    %v1670 = vunpack.c.l.b16 %v603
    %v1671 = vunpack.c.h.b16 %v603
    %v1672 = vunpack.c.l.b16 %v604
    %v1673 = vunpack.c.h.b16 %v604
    %v1674 = vunpack.c.l.b16 %v605
    %v1675 = vunpack.c.h.b16 %v605
    %v1676 = vunpack.c.l.b16 %v606
    %v1677 = vunpack.c.h.b16 %v606
    %v1678 = vunpack.c.l.b16 %v607
    %v1679 = vunpack.c.h.b16 %v607
    %v1680 = vunpack.c.l.b16 %v608
    %v1681 = vunpack.c.h.b16 %v608
    %v1682 = vunpack.c.l.b16 %v609
    %v1683 = vunpack.c.h.b16 %v609
    %v1684 = vunpack.c.l.b16 %v610
    %v1685 = vunpack.c.h.b16 %v610
    %v1686 = vunpack.c.l.b16 %v611
    %v1687 = vunpack.c.h.b16 %v611
    %v1688 = vunpack.c.l.b16 %v612
    %v1689 = vunpack.c.h.b16 %v612
    %v1690 = vunpack.c.l.b16 %v613
    %v1691 = vunpack.c.h.b16 %v613
    %v1692 = vunpack.c.l.b16 %v614
    %v1693 = vunpack.c.h.b16 %v614
    %v1694 = vunpack.c.l.b16 %v615
    %v1695 = vunpack.c.h.b16 %v615
    %v1696 = vunpack.c.l.b16 %v616
    %v1697 = vunpack.c.h.b16 %v616
    %v1698 = vunpack.c.l.b16 %v617
    %v1699 = vunpack.c.h.b16 %v617
    %v1700 = vunpack.c.l.b16 %v618
    %v1701 = vunpack.c.h.b16 %v618
    %v1702 = vunpack.c.l.b16 %v619
    %v1703 = vunpack.c.h.b16 %v619
    %v1704 = vunpack.c.l.b16 %v620
    %v1705 = vunpack.c.h.b16 %v620
    %v1706 = vunpack.c.l.b16 %v621
    %v1707 = vunpack.c.h.b16 %v621
    %v1708 = vunpack.c.l.b16 %v622
    %v1709 = vunpack.c.h.b16 %v622
    %v1710 = vunpack.c.l.b16 %v623
    %v1711 = vunpack.c.h.b16 %v623
    %v1712 = vunpack.c.l.b16 %v624
    %v1713 = vunpack.c.h.b16 %v624
    %v1714 = vunpack.c.l.b16 %v625
    %v1715 = vunpack.c.h.b16 %v625
    %v1716 = vunpack.c.l.b16 %v626
    %v1717 = vunpack.c.h.b16 %v626
    %v1718 = vunpack.c.l.b16 %v627
    %v1719 = vunpack.c.h.b16 %v627
    %v1720 = vunpack.c.l.b16 %v628
    %v1721 = vunpack.c.h.b16 %v628
    %v1722 = vunpack.c.l.b16 %v629
    %v1723 = vunpack.c.h.b16 %v629
    %v1724 = vunpack.c.l.b16 %v630
    %v1725 = vunpack.c.h.b16 %v630
    %v1726 = vunpack.c.l.b16 %v631
    %v1727 = vunpack.c.h.b16 %v631
    %v1728 = vunpack.c.l.b16 %v632
    %v1729 = vunpack.c.h.b16 %v632
    %v1730 = vunpack.c.l.b16 %v633
    %v1731 = vunpack.c.h.b16 %v633
    %v1732 = vunpack.c.l.b16 %v634
    %v1733 = vunpack.c.h.b16 %v634
    %v1734 = vunpack.c.l.b16 %v635
    %v1735 = vunpack.c.h.b16 %v635
    %v1736 = vunpack.c.l.b16 %v636
    %v1737 = vunpack.c.h.b16 %v636
    %v1738 = vunpack.c.l.b16 %v637
    %v1739 = vunpack.c.h.b16 %v637
    %v1740 = vunpack.c.l.b16 %v638
    %v1741 = vunpack.c.h.b16 %v638
    %v1742 = vunpack.c.l.b16 %v639
    %v1743 = vunpack.c.h.b16 %v639
    %v1744 = vunpack.c.l.b16 %v640
    %v1745 = vunpack.c.h.b16 %v640
    %v1746 = vunpack.c.l.b16 %v641
    %v1747 = vunpack.c.h.b16 %v641
    %v1748 = vunpack.c.l.b16 %v642
    %v1749 = vunpack.c.h.b16 %v642
    %v1750 = vunpack.c.l.b16 %v643
    %v1751 = vunpack.c.h.b16 %v643
    %v1752 = vunpack.c.l.b16 %v644
    %v1753 = vunpack.c.h.b16 %v644
    %v1754 = vunpack.c.l.b16 %v645
    %v1755 = vunpack.c.h.b16 %v645
    %v1756 = vunpack.c.l.b16 %v646
    %v1757 = vunpack.c.h.b16 %v646
    %v1758 = vunpack.c.l.b16 %v647
    %v1759 = vunpack.c.h.b16 %v647
    %v1760 = vunpack.c.l.b16 %v648
    %v1761 = vunpack.c.h.b16 %v648
    %v1762 = vunpack.c.l.b16 %v649
    %v1763 = vunpack.c.h.b16 %v649
    %v1764 = vunpack.c.l.b16 %v650
    %v1765 = vunpack.c.h.b16 %v650
    %v1766 = vunpack.c.l.b16 %v651
    %v1767 = vunpack.c.h.b16 %v651
    %v1768 = vunpack.c.l.b16 %v652
    %v1769 = vunpack.c.h.b16 %v652
    %v1770 = vunpack.c.l.b16 %v653
    %v1771 = vunpack.c.h.b16 %v653
    %v1772 = vunpack.c.l.b16 %v654
    %v1773 = vunpack.c.h.b16 %v654
    %v1774 = vunpack.c.l.b16 %v655
    %v1775 = vunpack.c.h.b16 %v655
    %v1776 = vunpack.c.l.b16 %v656
    %v1777 = vunpack.c.h.b16 %v656
    %v1778 = vunpack.c.l.b16 %v657
    %v1779 = vunpack.c.h.b16 %v657
    %v1780 = vunpack.c.l.b16 %v658
    %v1781 = vunpack.c.h.b16 %v658
    %v1782 = vunpack.c.l.b16 %v659
    %v1783 = vunpack.c.h.b16 %v659
    %v1784 = vunpack.c.l.b16 %v660
    %v1785 = vunpack.c.h.b16 %v660
    %v1786 = vunpack.c.l.b16 %v661
    %v1787 = vunpack.c.h.b16 %v661
    %v1788 = vunpack.c.l.b16 %v662
    %v1789 = vunpack.c.h.b16 %v662
    %v1790 = vunpack.c.l.b16 %v663
    %v1791 = vunpack.c.h.b16 %v663
    %v1792 = vunpack.c.l.b16 %v664
    %v1793 = vunpack.c.h.b16 %v664
    %v1794 = vunpack.c.l.b16 %v665
    %v1795 = vunpack.c.h.b16 %v665
    %v1796 = vunpack.c.l.b16 %v666
    %v1797 = vunpack.c.h.b16 %v666
    %v1798 = vunpack.c.l.b16 %v667
    %v1799 = vunpack.c.h.b16 %v667
    %v1800 = vunpack.c.l.b16 %v668
    %v1801 = vunpack.c.h.b16 %v668
    %v1802 = vunpack.c.l.b16 %v669
    %v1803 = vunpack.c.h.b16 %v669
    %v1804 = vunpack.c.l.b16 %v670
    %v1805 = vunpack.c.h.b16 %v670
    %v1806 = vunpack.c.l.b16 %v671
    %v1807 = vunpack.c.h.b16 %v671
    %v1808 = vunpack.c.l.b16 %v672
    %v1809 = vunpack.c.h.b16 %v672
    %v1810 = vunpack.c.l.b16 %v673
    %v1811 = vunpack.c.h.b16 %v673
    %v1812 = vunpack.c.l.b16 %v674
    %v1813 = vunpack.c.h.b16 %v674
    %v1814 = vunpack.c.l.b16 %v675
    %v1815 = vunpack.c.h.b16 %v675
    %v1816 = vunpack.c.l.b16 %v676
    %v1817 = vunpack.c.h.b16 %v676
    %v1818 = vunpack.c.l.b16 %v677
    %v1819 = vunpack.c.h.b16 %v677
    %v1820 = vunpack.c.l.b16 %v678
    %v1821 = vunpack.c.h.b16 %v678
    %v1822 = vunpack.c.l.b16 %v679
    %v1823 = vunpack.c.h.b16 %v679
    %v1824 = vunpack.c.l.b16 %v680
    %v1825 = vunpack.c.h.b16 %v680
    %v1826 = vunpack.c.l.b16 %v681
    %v1827 = vunpack.c.h.b16 %v681
    %v1828 = vunpack.c.l.b16 %v682
    %v1829 = vunpack.c.h.b16 %v682
    %v1830 = vunpack.c.l.b16 %v683
    %v1831 = vunpack.c.h.b16 %v683
    %v1832 = vunpack.c.l.b16 %v684
    %v1833 = vunpack.c.h.b16 %v684
    %v1834 = vunpack.c.l.b16 %v685
    %v1835 = vunpack.c.h.b16 %v685
    %v1836 = vunpack.c.l.b16 %v686
    %v1837 = vunpack.c.h.b16 %v686
    %v1838 = vunpack.c.l.b16 %v687
    %v1839 = vunpack.c.h.b16 %v687
    %v1840 = vunpack.c.l.b16 %v688
    %v1841 = vunpack.c.h.b16 %v688
    %v1842 = vunpack.c.l.b16 %v689
    %v1843 = vunpack.c.h.b16 %v689
    %v1844 = vunpack.c.l.b16 %v690
    %v1845 = vunpack.c.h.b16 %v690
    %v1846 = vunpack.c.l.b16 %v691
    %v1847 = vunpack.c.h.b16 %v691
    %v1848 = vunpack.c.l.b16 %v692
    %v1849 = vunpack.c.h.b16 %v692
    %v1850 = vunpack.c.l.b16 %v693
    %v1851 = vunpack.c.h.b16 %v693
    %v1852 = vunpack.c.l.b16 %v694
    %v1853 = vunpack.c.h.b16 %v694
    %v1854 = vunpack.c.l.b16 %v695
    %v1855 = vunpack.c.h.b16 %v695
    %v1856 = vunpack.c.l.b16 %v696
    %v1857 = vunpack.c.h.b16 %v696
    %v1858 = vunpack.c.l.b16 %v697
    %v1859 = vunpack.c.h.b16 %v697
    %v1860 = vunpack.c.l.b16 %v698
    %v1861 = vunpack.c.h.b16 %v698
    %v1862 = vunpack.c.l.b16 %v699
    %v1863 = vunpack.c.h.b16 %v699
    %v1864 = vunpack.c.l.b16 %v700
    %v1865 = vunpack.c.h.b16 %v700
    %v1866 = vunpack.c.l.b16 %v701
    %v1867 = vunpack.c.h.b16 %v701
    %v1868 = vunpack.c.l.b16 %v702
    %v1869 = vunpack.c.h.b16 %v702
    %v1870 = vunpack.c.l.b16 %v703
    %v1871 = vunpack.c.h.b16 %v703
    %v1872 = vunpack.c.l.b16 %v704
    %v1873 = vunpack.c.h.b16 %v704
    %v1874 = vunpack.c.l.b16 %v705
    %v1875 = vunpack.c.h.b16 %v705
    %v1876 = vunpack.c.l.b16 %v706
    %v1877 = vunpack.c.h.b16 %v706
    %v1878 = vunpack.c.l.b16 %v707
    %v1879 = vunpack.c.h.b16 %v707
    %v1880 = vunpack.c.l.b16 %v708
    %v1881 = vunpack.c.h.b16 %v708
    %v1882 = vunpack.c.l.b16 %v709
    %v1883 = vunpack.c.h.b16 %v709
    %v1884 = vunpack.c.l.b16 %v710
    %v1885 = vunpack.c.h.b16 %v710
    %v1886 = vunpack.c.l.b16 %v711
    %v1887 = vunpack.c.h.b16 %v711
    %v1888 = vunpack.c.l.b16 %v712
    %v1889 = vunpack.c.h.b16 %v712
    %v1890 = vunpack.c.l.b16 %v713
    %v1891 = vunpack.c.h.b16 %v713
    %v1892 = vunpack.c.l.b16 %v714
    %v1893 = vunpack.c.h.b16 %v714
    %v1894 = vunpack.c.l.b16 %v715
    %v1895 = vunpack.c.h.b16 %v715
    %v1896 = vunpack.c.l.b16 %v716
    %v1897 = vunpack.c.h.b16 %v716
    %v1898 = vunpack.c.l.b16 %v717
    %v1899 = vunpack.c.h.b16 %v717
    %v1900 = vunpack.c.l.b16 %v718
    %v1901 = vunpack.c.h.b16 %v718
    %v1902 = vunpack.c.l.b16 %v719
    %v1903 = vunpack.c.h.b16 %v719
    %v1904 = vunpack.c.l.b16 %v720
    %v1905 = vunpack.c.h.b16 %v720
    %v1906 = vunpack.c.l.b16 %v721
    %v1907 = vunpack.c.h.b16 %v721
    %v1908 = vunpack.c.l.b16 %v722
    %v1909 = vunpack.c.h.b16 %v722
    %v1910 = vunpack.c.l.b16 %v723
    %v1911 = vunpack.c.h.b16 %v723
    %v1912 = vunpack.c.l.b16 %v724
    %v1913 = vunpack.c.h.b16 %v724
    %v1914 = vunpack.c.l.b16 %v725
    %v1915 = vunpack.c.h.b16 %v725
    %v1916 = vunpack.c.l.b16 %v726
    %v1917 = vunpack.c.h.b16 %v726
    %v1918 = vunpack.c.l.b16 %v727
    %v1919 = vunpack.c.h.b16 %v727
    %v1920 = vunpack.c.l.b16 %v728
    %v1921 = vunpack.c.h.b16 %v728
    %v1922 = vunpack.c.l.b16 %v729
    %v1923 = vunpack.c.h.b16 %v729
    %v1924 = vunpack.c.l.b16 %v730
    %v1925 = vunpack.c.h.b16 %v730
    %v1926 = vunpack.c.l.b16 %v731
    %v1927 = vunpack.c.h.b16 %v731
    %v1928 = vunpack.c.l.b16 %v732
    %v1929 = vunpack.c.h.b16 %v732
    %v1930 = vunpack.c.l.b16 %v733
    %v1931 = vunpack.c.h.b16 %v733
    %v1932 = vunpack.c.l.b16 %v734
    %v1933 = vunpack.c.h.b16 %v734
    %v1934 = vunpack.c.l.b16 %v735
    %v1935 = vunpack.c.h.b16 %v735
    %v1936 = vunpack.c.l.b16 %v736
    %v1937 = vunpack.c.h.b16 %v736
    %v1938 = vunpack.c.l.b16 %v737
    %v1939 = vunpack.c.h.b16 %v737
    %v1940 = vunpack.c.l.b16 %v738
    %v1941 = vunpack.c.h.b16 %v738
    %v1942 = vunpack.c.l.b16 %v739
    %v1943 = vunpack.c.h.b16 %v739
    %v1944 = vunpack.c.l.b16 %v740
    %v1945 = vunpack.c.h.b16 %v740
    %v1946 = vunpack.c.l.b16 %v741
    %v1947 = vunpack.c.h.b16 %v741
    %v1948 = vunpack.c.l.b16 %v742
    %v1949 = vunpack.c.h.b16 %v742
    %v1950 = vunpack.c.l.b16 %v743
    %v1951 = vunpack.c.h.b16 %v743
    %v1952 = vunpack.c.l.b16 %v744
    %v1953 = vunpack.c.h.b16 %v744
    %v1954 = vunpack.c.l.b16 %v745
    %v1955 = vunpack.c.h.b16 %v745
    %v1956 = vunpack.c.l.b16 %v746
    %v1957 = vunpack.c.h.b16 %v746
    %v1958 = vunpack.c.l.b16 %v747
    %v1959 = vunpack.c.h.b16 %v747
    %v1960 = vunpack.c.l.b16 %v748
    %v1961 = vunpack.c.h.b16 %v748
    %v1962 = vunpack.c.l.b16 %v749
    %v1963 = vunpack.c.h.b16 %v749
    %v1964 = vunpack.c.l.b16 %v750
    %v1965 = vunpack.c.h.b16 %v750
    %v1966 = vunpack.c.l.b16 %v751
    %v1967 = vunpack.c.h.b16 %v751
    %v1968 = vunpack.c.l.b16 %v752
    %v1969 = vunpack.c.h.b16 %v752
    %v1970 = vunpack.c.l.b16 %v753
    %v1971 = vunpack.c.h.b16 %v753
    %v1972 = vunpack.c.l.b16 %v754
    %v1973 = vunpack.c.h.b16 %v754
    %v1974 = vunpack.c.l.b16 %v755
    %v1975 = vunpack.c.h.b16 %v755
    %v1976 = vunpack.c.l.b16 %v756
    %v1977 = vunpack.c.h.b16 %v756
    %v1978 = vunpack.c.l.b16 %v757
    %v1979 = vunpack.c.h.b16 %v757
    %v1980 = vunpack.c.l.b16 %v758
    %v1981 = vunpack.c.h.b16 %v758
    %v1982 = vunpack.c.l.b16 %v759
    %v1983 = vunpack.c.h.b16 %v759
    %v1984 = vunpack.c.l.b16 %v760
    %v1985 = vunpack.c.h.b16 %v760
    %v1986 = vunpack.c.l.b16 %v761
    %v1987 = vunpack.c.h.b16 %v761
    %v1988 = vunpack.c.l.b16 %v762
    %v1989 = vunpack.c.h.b16 %v762
    %v1990 = vunpack.c.l.b16 %v763
    %v1991 = vunpack.c.h.b16 %v763
    %v1992 = vunpack.c.l.b16 %v764
    %v1993 = vunpack.c.h.b16 %v764
    %v1994 = vunpack.c.l.b16 %v765
    %v1995 = vunpack.c.h.b16 %v765
    %v1996 = vunpack.c.l.b16 %v766
    %v1997 = vunpack.c.h.b16 %v766
    %v1998 = vunpack.c.l.b16 %v767
    %v1999 = vunpack.c.h.b16 %v767
    %v2000 = vunpack.c.l.b16 %v768
    %v2001 = vunpack.c.h.b16 %v768
    %v2002 = vunpack.c.l.b16 %v769
    %v2003 = vunpack.c.h.b16 %v769
    %v2004 = vunpack.c.l.b16 %v770
    %v2005 = vunpack.c.h.b16 %v770
    %v2006 = vunpack.c.l.b16 %v771
    %v2007 = vunpack.c.h.b16 %v771
    %v2008 = vunpack.c.l.b16 %v772
    %v2009 = vunpack.c.h.b16 %v772
    %v2010 = vunpack.c.l.b16 %v773
    %v2011 = vunpack.c.h.b16 %v773
    %v2012 = vunpack.c.l.b16 %v774
    %v2013 = vunpack.c.h.b16 %v774
    %v2014 = vunpack.c.l.b16 %v775
    %v2015 = vunpack.c.h.b16 %v775
    %v2016 = vunpack.c.l.b16 %v776
    %v2017 = vunpack.c.h.b16 %v776
    %v2018 = vunpack.c.l.b16 %v777
    %v2019 = vunpack.c.h.b16 %v777
    %v2020 = vunpack.c.l.b16 %v778
    %v2021 = vunpack.c.h.b16 %v778
    %v2022 = vunpack.c.l.b16 %v779
    %v2023 = vunpack.c.h.b16 %v779
    %v2024 = vunpack.c.l.b16 %v780
    %v2025 = vunpack.c.h.b16 %v780
    %v2026 = vunpack.c.l.b16 %v781
    %v2027 = vunpack.c.h.b16 %v781
    %v2028 = vunpack.c.l.b16 %v782
    %v2029 = vunpack.c.h.b16 %v782
    %v2030 = vunpack.c.l.b16 %v783
    %v2031 = vunpack.c.h.b16 %v783
    %v2032 = vunpack.c.l.b16 %v784
    %v2033 = vunpack.c.h.b16 %v784
    %v2034 = vunpack.c.l.b16 %v785
    %v2035 = vunpack.c.h.b16 %v785
    %v2036 = vunpack.c.l.b16 %v786
    %v2037 = vunpack.c.h.b16 %v786
    %v2038 = vunpack.c.l.b16 %v787
    %v2039 = vunpack.c.h.b16 %v787
    %v2040 = vunpack.c.l.b16 %v788
    %v2041 = vunpack.c.h.b16 %v788
    %v2042 = vunpack.c.l.b16 %v789
    %v2043 = vunpack.c.h.b16 %v789
    %v2044 = vunpack.c.l.b16 %v790
    %v2045 = vunpack.c.h.b16 %v790
    %v2046 = vunpack.c.l.b16 %v791
    %v2047 = vunpack.c.h.b16 %v791
    %v2048 = vunpack.c.l.b16 %v792
    %v2049 = vunpack.c.h.b16 %v792
    %v2050 = vunpack.c.l.b16 %v793
    %v2051 = vunpack.c.h.b16 %v793
    %v2052 = vunpack.c.l.b16 %v794
    %v2053 = vunpack.c.h.b16 %v794
    %v2054 = vunpack.c.l.b16 %v795
    %v2055 = vunpack.c.h.b16 %v795
    %v2056 = vunpack.c.l.b16 %v796
    %v2057 = vunpack.c.h.b16 %v796
    %v2058 = vunpack.c.l.b16 %v797
    %v2059 = vunpack.c.h.b16 %v797
    %v2060 = vunpack.c.l.b16 %v798
    %v2061 = vunpack.c.h.b16 %v798
    %v2062 = vunpack.c.l.b16 %v799
    %v2063 = vunpack.c.h.b16 %v799
    %v2064 = vunpack.c.l.b16 %v800
    %v2065 = vunpack.c.h.b16 %v800
    %v2066 = vunpack.c.l.b16 %v801
    %v2067 = vunpack.c.h.b16 %v801
    %v2068 = vunpack.c.l.b16 %v802
    %v2069 = vunpack.c.h.b16 %v802
    %v2070 = vunpack.c.l.b16 %v803
    %v2071 = vunpack.c.h.b16 %v803
    %v2072 = vunpack.c.l.b16 %v804
    %v2073 = vunpack.c.h.b16 %v804
    %v2074 = vunpack.c.l.b16 %v805
    %v2075 = vunpack.c.h.b16 %v805
    %v2076 = vunpack.c.l.b16 %v806
    %v2077 = vunpack.c.h.b16 %v806
    %v2078 = vunpack.c.l.b16 %v807
    %v2079 = vunpack.c.h.b16 %v807
    %v2080 = vunpack.c.l.b16 %v808
    %v2081 = vunpack.c.h.b16 %v808
    %v2082 = vunpack.c.l.b16 %v809
    %v2083 = vunpack.c.h.b16 %v809
    %v2084 = vunpack.c.l.b16 %v810
    %v2085 = vunpack.c.h.b16 %v810
    %v2086 = vunpack.c.l.b16 %v811
    %v2087 = vunpack.c.h.b16 %v811
    %v2088 = vunpack.c.l.b16 %v812
    %v2089 = vunpack.c.h.b16 %v812
    %v2090 = vunpack.c.l.b16 %v813
    %v2091 = vunpack.c.h.b16 %v813
    %v2092 = vunpack.c.l.b16 %v814
    %v2093 = vunpack.c.h.b16 %v814
    %v2094 = vunpack.c.l.b16 %v815
    %v2095 = vunpack.c.h.b16 %v815
    %v2096 = vunpack.c.l.b16 %v816
    %v2097 = vunpack.c.h.b16 %v816
    %v2098 = vunpack.c.l.b16 %v817
    %v2099 = vunpack.c.h.b16 %v817
    %v2100 = vunpack.c.l.b16 %v818
    %v2101 = vunpack.c.h.b16 %v818
    %v2102 = vunpack.c.l.b16 %v819
    %v2103 = vunpack.c.h.b16 %v819
    %v2104 = vunpack.c.l.b16 %v820
    %v2105 = vunpack.c.h.b16 %v820
    %v2106 = vunpack.c.l.b16 %v821
    %v2107 = vunpack.c.h.b16 %v821
    %v2108 = vunpack.c.l.b16 %v822
    %v2109 = vunpack.c.h.b16 %v822
    %v2110 = vunpack.c.l.b16 %v823
    %v2111 = vunpack.c.h.b16 %v823
    %v2112 = vunpack.c.l.b16 %v824
    %v2113 = vunpack.c.h.b16 %v824
    %v2114 = vunpack.c.l.b16 %v825
    %v2115 = vunpack.c.h.b16 %v825
    %v2116 = vunpack.c.l.b16 %v826
    %v2117 = vunpack.c.h.b16 %v826
    %v2118 = vunpack.c.l.b16 %v827
    %v2119 = vunpack.c.h.b16 %v827
    %v2120 = vunpack.c.l.b16 %v828
    %v2121 = vunpack.c.h.b16 %v828
    %v2122 = vunpack.c.l.b16 %v829
    %v2123 = vunpack.c.h.b16 %v829
    %v2124 = vunpack.c.l.b16 %v830
    %v2125 = vunpack.c.h.b16 %v830
    %v2126 = vunpack.c.l.b16 %v831
    %v2127 = vunpack.c.h.b16 %v831
    %v2128 = vunpack.c.l.b16 %v832
    %v2129 = vunpack.c.h.b16 %v832
    %v2130 = vunpack.c.l.b16 %v833
    %v2131 = vunpack.c.h.b16 %v833
    %v2132 = vunpack.c.l.b16 %v834
    %v2133 = vunpack.c.h.b16 %v834
    %v2134 = vunpack.c.l.b16 %v835
    %v2135 = vunpack.c.h.b16 %v835
    %v2136 = vunpack.c.l.b16 %v836
    %v2137 = vunpack.c.h.b16 %v836
    %v2138 = vunpack.c.l.b16 %v837
    %v2139 = vunpack.c.h.b16 %v837
    %v2140 = vunpack.c.l.b16 %v838
    %v2141 = vunpack.c.h.b16 %v838
    %v2142 = vunpack.c.l.b16 %v839
    %v2143 = vunpack.c.h.b16 %v839
    %v2144 = vunpack.c.l.b16 %v840
    %v2145 = vunpack.c.h.b16 %v840
    %v2146 = vunpack.c.l.b16 %v841
    %v2147 = vunpack.c.h.b16 %v841
    %v2148 = vunpack.c.l.b16 %v842
    %v2149 = vunpack.c.h.b16 %v842
    %v2150 = vunpack.c.l.b16 %v843
    %v2151 = vunpack.c.h.b16 %v843
    %v2152 = vunpack.c.l.b16 %v844
    %v2153 = vunpack.c.h.b16 %v844
    %v2154 = vunpack.c.l.b16 %v845
    %v2155 = vunpack.c.h.b16 %v845
    %v2156 = vunpack.c.l.b16 %v846
    %v2157 = vunpack.c.h.b16 %v846
    %v2158 = vunpack.c.l.b16 %v847
    %v2159 = vunpack.c.h.b16 %v847
    %v2160 = vunpack.c.l.b16 %v848
    %v2161 = vunpack.c.h.b16 %v848
    %v2162 = vunpack.c.l.b16 %v849
    %v2163 = vunpack.c.h.b16 %v849
    %v2164 = vunpack.c.l.b16 %v850
    %v2165 = vunpack.c.h.b16 %v850
    %v2166 = vunpack.c.l.b16 %v851
    %v2167 = vunpack.c.h.b16 %v851
    %v2168 = vunpack.c.l.b16 %v852
    %v2169 = vunpack.c.h.b16 %v852
    %v2170 = vunpack.c.l.b16 %v853
    %v2171 = vunpack.c.h.b16 %v853
    %v2172 = vunpack.c.l.b16 %v854
    %v2173 = vunpack.c.h.b16 %v854
    %v2174 = vunpack.c.l.b16 %v855
    %v2175 = vunpack.c.h.b16 %v855
    %v2176 = vunpack.c.l.b16 %v856
    %v2177 = vunpack.c.h.b16 %v856
    %v2178 = vunpack.c.l.b16 %v857
    %v2179 = vunpack.c.h.b16 %v857
    %v2180 = vunpack.c.l.b16 %v858
    %v2181 = vunpack.c.h.b16 %v858
    %v2182 = vunpack.c.l.b16 %v859
    %v2183 = vunpack.c.h.b16 %v859
    %v2184 = vunpack.c.l.b16 %v860
    %v2185 = vunpack.c.h.b16 %v860
    %v2186 = vunpack.c.l.b16 %v861
    %v2187 = vunpack.c.h.b16 %v861
    %v2188 = vunpack.c.l.b16 %v862
    %v2189 = vunpack.c.h.b16 %v862
    %v2190 = vunpack.c.l.b16 %v863
    %v2191 = vunpack.c.h.b16 %v863
    %v2192 = vunpack.c.l.b16 %v864
    %v2193 = vunpack.c.h.b16 %v864
    %v2194 = vunpack.c.l.b16 %v865
    %v2195 = vunpack.c.h.b16 %v865
    %v2196 = vunpack.c.l.b16 %v866
    %v2197 = vunpack.c.h.b16 %v866
    %v2198 = vunpack.c.l.b16 %v867
    %v2199 = vunpack.c.h.b16 %v867
    %v2200 = vunpack.c.l.b16 %v868
    %v2201 = vunpack.c.h.b16 %v868
    %v2202 = vunpack.c.l.b16 %v869
    %v2203 = vunpack.c.h.b16 %v869
    %v2204 = vunpack.c.l.b16 %v870
    %v2205 = vunpack.c.h.b16 %v870
    %v2206 = vunpack.c.l.b16 %v871
    %v2207 = vunpack.c.h.b16 %v871
    %v2208 = vunpack.c.l.b16 %v872
    %v2209 = vunpack.c.h.b16 %v872
    %v2210 = vunpack.c.l.b16 %v873
    %v2211 = vunpack.c.h.b16 %v873
    %v2212 = vunpack.c.l.b16 %v874
    %v2213 = vunpack.c.h.b16 %v874
    %v2214 = vunpack.c.l.b16 %v875
    %v2215 = vunpack.c.h.b16 %v875
    %v2216 = vunpack.c.l.b16 %v876
    %v2217 = vunpack.c.h.b16 %v876
    %v2218 = vunpack.c.l.b16 %v877
    %v2219 = vunpack.c.h.b16 %v877
    %v2220 = vunpack.c.l.b16 %v878
    %v2221 = vunpack.c.h.b16 %v878
    %v2222 = vunpack.c.l.b16 %v879
    %v2223 = vunpack.c.h.b16 %v879
    %v2224 = vunpack.c.l.b16 %v880
    %v2225 = vunpack.c.h.b16 %v880
    %v2226 = vunpack.c.l.b16 %v881
    %v2227 = vunpack.c.h.b16 %v881
    %v2228 = vunpack.c.l.b16 %v882
    %v2229 = vunpack.c.h.b16 %v882
    %v2230 = vunpack.c.l.b16 %v883
    %v2231 = vunpack.c.h.b16 %v883
    %v2232 = vunpack.c.l.b16 %v884
    %v2233 = vunpack.c.h.b16 %v884
    %v2234 = vunpack.c.l.b16 %v885
    %v2235 = vunpack.c.h.b16 %v885
    %v2236 = vunpack.c.l.b16 %v886
    %v2237 = vunpack.c.h.b16 %v886
    %v2238 = vunpack.c.l.b16 %v887
    %v2239 = vunpack.c.h.b16 %v887
    %v2240 = vunpack.c.l.b16 %v888
    %v2241 = vunpack.c.h.b16 %v888
    %v2242 = vunpack.c.l.b16 %v889
    %v2243 = vunpack.c.h.b16 %v889
    %v2244 = vunpack.c.l.b16 %v890
    %v2245 = vunpack.c.h.b16 %v890
    %v2246 = vunpack.c.l.b16 %v891
    %v2247 = vunpack.c.h.b16 %v891
    %v2248 = vunpack.c.l.b16 %v892
    %v2249 = vunpack.c.h.b16 %v892
    %v2250 = vunpack.c.l.b16 %v893
    %v2251 = vunpack.c.h.b16 %v893
    %v2252 = vunpack.c.l.b16 %v894
    %v2253 = vunpack.c.h.b16 %v894
    %v2254 = vunpack.c.l.b16 %v895
    %v2255 = vunpack.c.h.b16 %v895
    %v2256 = vunpack.c.l.b16 %v896
    %v2257 = vunpack.c.h.b16 %v896
    %v2258 = vunpack.c.l.b16 %v897
    %v2259 = vunpack.c.h.b16 %v897
    %v2260 = vunpack.c.l.b16 %v898
    %v2261 = vunpack.c.h.b16 %v898
    %v2262 = vunpack.c.l.b16 %v899
    %v2263 = vunpack.c.h.b16 %v899
    %v2264 = vunpack.c.l.b16 %v900
    %v2265 = vunpack.c.h.b16 %v900
    %v2266 = vunpack.c.l.b16 %v901
    %v2267 = vunpack.c.h.b16 %v901
    %v2268 = vunpack.c.l.b16 %v902
    %v2269 = vunpack.c.h.b16 %v902
    %v2270 = vunpack.c.l.b16 %v903
    %v2271 = vunpack.c.h.b16 %v903
    %v2272 = vunpack.c.l.b16 %v904
    %v2273 = vunpack.c.h.b16 %v904
    %v2274 = vunpack.c.l.b16 %v905
    %v2275 = vunpack.c.h.b16 %v905
    %v2276 = vunpack.c.l.b16 %v906
    %v2277 = vunpack.c.h.b16 %v906
    %v2278 = vunpack.c.l.b16 %v907
    %v2279 = vunpack.c.h.b16 %v907
    %v2280 = vunpack.c.l.b16 %v908
    %v2281 = vunpack.c.h.b16 %v908
    %v2282 = vunpack.c.l.b16 %v909
    %v2283 = vunpack.c.h.b16 %v909
    %v2284 = vunpack.c.l.b16 %v910
    %v2285 = vunpack.c.h.b16 %v910
    %v2286 = vunpack.c.l.b16 %v911
    %v2287 = vunpack.c.h.b16 %v911
    %v2288 = vunpack.c.l.b16 %v912
    %v2289 = vunpack.c.h.b16 %v912
    %v2290 = vunpack.c.l.b16 %v913
    %v2291 = vunpack.c.h.b16 %v913
    %v2292 = vunpack.c.l.b16 %v914
    %v2293 = vunpack.c.h.b16 %v914
    %v2294 = vunpack.c.l.b16 %v915
    %v2295 = vunpack.c.h.b16 %v915
    %v2296 = vunpack.c.l.b16 %v916
    %v2297 = vunpack.c.h.b16 %v916
    %v2298 = vunpack.c.l.b16 %v917
    %v2299 = vunpack.c.h.b16 %v917
    %v2300 = vunpack.c.l.b16 %v918
    %v2301 = vunpack.c.h.b16 %v918
    %v2302 = vunpack.c.l.b16 %v919
    %v2303 = vunpack.c.h.b16 %v919
    %v2304 = vunpack.c.l.b16 %v920
    %v2305 = vunpack.c.h.b16 %v920
    %v2306 = vunpack.c.l.b16 %v921
    %v2307 = vunpack.c.h.b16 %v921
    %v2308 = vunpack.c.l.b16 %v922
    %v2309 = vunpack.c.h.b16 %v922
    %v2310 = vunpack.c.l.b16 %v923
    %v2311 = vunpack.c.h.b16 %v923
    %v2312 = vunpack.c.l.b16 %v924
    %v2313 = vunpack.c.h.b16 %v924
    %v2314 = vunpack.c.l.b16 %v925
    %v2315 = vunpack.c.h.b16 %v925
    %v2316 = vunpack.c.l.b16 %v926
    %v2317 = vunpack.c.h.b16 %v926
    %v2318 = vunpack.c.l.b16 %v927
    %v2319 = vunpack.c.h.b16 %v927
    %v2320 = vunpack.c.l.b16 %v928
    %v2321 = vunpack.c.h.b16 %v928
    %v2322 = vunpack.c.l.b16 %v929
    %v2323 = vunpack.c.h.b16 %v929
    %v2324 = vunpack.c.l.b16 %v930
    %v2325 = vunpack.c.h.b16 %v930
    %v2326 = vunpack.c.l.b16 %v931
    %v2327 = vunpack.c.h.b16 %v931
    %v2328 = vunpack.c.l.b16 %v932
    %v2329 = vunpack.c.h.b16 %v932
    %v2330 = vunpack.c.l.b16 %v933
    %v2331 = vunpack.c.h.b16 %v933
    %v2332 = vunpack.c.l.b16 %v934
    %v2333 = vunpack.c.h.b16 %v934
    %v2334 = vunpack.c.l.b16 %v935
    %v2335 = vunpack.c.h.b16 %v935
    %v2336 = vunpack.c.l.b16 %v936
    %v2337 = vunpack.c.h.b16 %v936
    %v2338 = vunpack.c.l.b16 %v937
    %v2339 = vunpack.c.h.b16 %v937
    %v2340 = vunpack.c.l.b16 %v938
    %v2341 = vunpack.c.h.b16 %v938
    %v2342 = vunpack.c.l.b16 %v939
    %v2343 = vunpack.c.h.b16 %v939
    %v2344 = vunpack.c.l.b16 %v940
    %v2345 = vunpack.c.h.b16 %v940
    %v2346 = vunpack.c.l.b16 %v941
    %v2347 = vunpack.c.h.b16 %v941
    %v2348 = vunpack.c.l.b16 %v942
    %v2349 = vunpack.c.h.b16 %v942
    %v2350 = vunpack.c.l.b16 %v943
    %v2351 = vunpack.c.h.b16 %v943
    %v2352 = vunpack.c.l.b16 %v944
    %v2353 = vunpack.c.h.b16 %v944
    %v2354 = vunpack.c.l.b16 %v945
    %v2355 = vunpack.c.h.b16 %v945
    %v2356 = vunpack.c.l.b16 %v946
    %v2357 = vunpack.c.h.b16 %v946
    %v2358 = vunpack.c.l.b16 %v947
    %v2359 = vunpack.c.h.b16 %v947
    %v2360 = vunpack.c.l.b16 %v948
    %v2361 = vunpack.c.h.b16 %v948
    %v2362 = vunpack.c.l.b16 %v949
    %v2363 = vunpack.c.h.b16 %v949
    %v2364 = vunpack.c.l.b16 %v950
    %v2365 = vunpack.c.h.b16 %v950
    %v2366 = vunpack.c.l.b16 %v951
    %v2367 = vunpack.c.h.b16 %v951
    %v2368 = vunpack.c.l.b16 %v952
    %v2369 = vunpack.c.h.b16 %v952
    %v2370 = vunpack.c.l.b16 %v953
    %v2371 = vunpack.c.h.b16 %v953
    %v2372 = vunpack.c.l.b16 %v954
    %v2373 = vunpack.c.h.b16 %v954
    %v2374 = vunpack.c.l.b16 %v955
    %v2375 = vunpack.c.h.b16 %v955
    %v2376 = vunpack.c.l.b16 %v956
    %v2377 = vunpack.c.h.b16 %v956
    %v2378 = vunpack.c.l.b16 %v957
    %v2379 = vunpack.c.h.b16 %v957
    %v2380 = vunpack.c.l.b16 %v958
    %v2381 = vunpack.c.h.b16 %v958
    %v2382 = vunpack.c.l.b16 %v959
    %v2383 = vunpack.c.h.b16 %v959
    %v2384 = vunpack.c.l.b16 %v960
    %v2385 = vunpack.c.h.b16 %v960
    %v2386 = vunpack.c.l.b16 %v961
    %v2387 = vunpack.c.h.b16 %v961
    %v2388 = vunpack.c.l.b16 %v962
    %v2389 = vunpack.c.h.b16 %v962
    %v2390 = vunpack.c.l.b16 %v963
    %v2391 = vunpack.c.h.b16 %v963
    %v2392 = vunpack.c.l.b16 %v964
    %v2393 = vunpack.c.h.b16 %v964
    %v2394 = vunpack.c.l.b16 %v965
    %v2395 = vunpack.c.h.b16 %v965
    %v2396 = vunpack.c.l.b16 %v966
    %v2397 = vunpack.c.h.b16 %v966
    %v2398 = vunpack.c.l.b16 %v967
    %v2399 = vunpack.c.h.b16 %v967
    %v2400 = vunpack.c.l.b16 %v968
    %v2401 = vunpack.c.h.b16 %v968
    %v2402 = vunpack.c.l.b16 %v969
    %v2403 = vunpack.c.h.b16 %v969
    %v2404 = vunpack.c.l.b16 %v970
    %v2405 = vunpack.c.h.b16 %v970
    %v2406 = vunpack.c.l.b16 %v971
    %v2407 = vunpack.c.h.b16 %v971
    %v2408 = vunpack.c.l.b16 %v972
    %v2409 = vunpack.c.h.b16 %v972
    %v2410 = vunpack.c.l.b16 %v973
    %v2411 = vunpack.c.h.b16 %v973
    %v2412 = vunpack.c.l.b16 %v974
    %v2413 = vunpack.c.h.b16 %v974
    %v2414 = vunpack.c.l.b16 %v975
    %v2415 = vunpack.c.h.b16 %v975
    %v2416 = vunpack.c.l.b16 %v976
    %v2417 = vunpack.c.h.b16 %v976
    %v2418 = vunpack.c.l.b16 %v977
    %v2419 = vunpack.c.h.b16 %v977
    %v2420 = vunpack.c.l.b16 %v978
    %v2421 = vunpack.c.h.b16 %v978
    %v2422 = vunpack.c.l.b16 %v979
    %v2423 = vunpack.c.h.b16 %v979
    %v2424 = vunpack.c.l.b16 %v980
    %v2425 = vunpack.c.h.b16 %v980
    %v2426 = vunpack.c.l.b16 %v981
    %v2427 = vunpack.c.h.b16 %v981
    %v2428 = vunpack.c.l.b16 %v982
    %v2429 = vunpack.c.h.b16 %v982
    %v2430 = vunpack.c.l.b16 %v983
    %v2431 = vunpack.c.h.b16 %v983
    %v2432 = vunpack.c.l.b16 %v984
    %v2433 = vunpack.c.h.b16 %v984
    %v2434 = vunpack.c.l.b16 %v985
    %v2435 = vunpack.c.h.b16 %v985
    %v2436 = vunpack.c.l.b16 %v986
    %v2437 = vunpack.c.h.b16 %v986
    %v2438 = vunpack.c.l.b16 %v987
    %v2439 = vunpack.c.h.b16 %v987
    %v2440 = vunpack.c.l.b16 %v988
    %v2441 = vunpack.c.h.b16 %v988
    %v2442 = vunpack.c.l.b16 %v989
    %v2443 = vunpack.c.h.b16 %v989
    %v2444 = vunpack.c.l.b16 %v990
    %v2445 = vunpack.c.h.b16 %v990
    %v2446 = vunpack.c.l.b16 %v991
    %v2447 = vunpack.c.h.b16 %v991
    %v2448 = vunpack.c.l.b16 %v992
    %v2449 = vunpack.c.h.b16 %v992
    %v2450 = vunpack.c.l.b16 %v993
    %v2451 = vunpack.c.h.b16 %v993
    %v2452 = vunpack.c.l.b16 %v994
    %v2453 = vunpack.c.h.b16 %v994
    %v2454 = vunpack.c.l.b16 %v995
    %v2455 = vunpack.c.h.b16 %v995
    %v2456 = vunpack.c.l.b16 %v996
    %v2457 = vunpack.c.h.b16 %v996
    %v2458 = vunpack.c.l.b16 %v997
    %v2459 = vunpack.c.h.b16 %v997
    %v2460 = vunpack.c.l.b16 %v998
    %v2461 = vunpack.c.h.b16 %v998
    %v2462 = vunpack.c.l.b16 %v999
    %v2463 = vunpack.c.h.b16 %v999
    %v2464 = vunpack.c.l.b16 %v1000
    %v2465 = vunpack.c.h.b16 %v1000
    %v2466 = vunpack.c.l.b16 %v1001
    %v2467 = vunpack.c.h.b16 %v1001
    %v2468 = vunpack.c.l.b16 %v1002
    %v2469 = vunpack.c.h.b16 %v1002
    %v2470 = vunpack.c.l.b16 %v1003
    %v2471 = vunpack.c.h.b16 %v1003
    %v2472 = vunpack.c.l.b16 %v1004
    %v2473 = vunpack.c.h.b16 %v1004
    %v2474 = vunpack.c.l.b16 %v1005
    %v2475 = vunpack.c.h.b16 %v1005
    %v2476 = vunpack.c.l.b16 %v1006
    %v2477 = vunpack.c.h.b16 %v1006
    %v2478 = vunpack.c.l.b16 %v1007
    %v2479 = vunpack.c.h.b16 %v1007
    %v2480 = vunpack.c.l.b16 %v1008
    %v2481 = vunpack.c.h.b16 %v1008
    %v2482 = vunpack.c.l.b16 %v1009
    %v2483 = vunpack.c.h.b16 %v1009
    %v2484 = vunpack.c.l.b16 %v1010
    %v2485 = vunpack.c.h.b16 %v1010
    %v2486 = vunpack.c.l.b16 %v1011
    %v2487 = vunpack.c.h.b16 %v1011
    %v2488 = vunpack.c.l.b16 %v1012
    %v2489 = vunpack.c.h.b16 %v1012
    %v2490 = vunpack.c.l.b16 %v1013
    %v2491 = vunpack.c.h.b16 %v1013
    %v2492 = vunpack.c.l.b16 %v1014
    %v2493 = vunpack.c.h.b16 %v1014
    %v2494 = vunpack.c.l.b16 %v1015
    %v2495 = vunpack.c.h.b16 %v1015
    %v2496 = vunpack.c.l.b16 %v1016
    %v2497 = vunpack.c.h.b16 %v1016
    %v2498 = vunpack.c.l.b16 %v1017
    %v2499 = vunpack.c.h.b16 %v1017
    %v2500 = vunpack.c.l.b16 %v1018
    %v2501 = vunpack.c.h.b16 %v1018
    %v2502 = vunpack.c.l.b16 %v1019
    %v2503 = vunpack.c.h.b16 %v1019
    %v2504 = vunpack.c.l.b16 %v1020
    %v2505 = vunpack.c.h.b16 %v1020
    %v2506 = vunpack.c.l.b16 %v1021
    %v2507 = vunpack.c.h.b16 %v1021
    %v2508 = vunpack.c.l.b16 %v1022
    %v2509 = vunpack.c.h.b16 %v1022
    %v2510 = vunpack.c.l.b16 %v1023
    %v2511 = vunpack.c.h.b16 %v1023
    %v2512 = vunpack.c.l.b16 %v1024
    %v2513 = vunpack.c.h.b16 %v1024
    %v2514 = vunpack.c.l.b16 %v1025
    %v2515 = vunpack.c.h.b16 %v1025
    %v2516 = vunpack.c.l.b16 %v1026
    %v2517 = vunpack.c.h.b16 %v1026
    %v2518 = vunpack.c.l.b16 %v1027
    %v2519 = vunpack.c.h.b16 %v1027
    %v2520 = vunpack.c.l.b16 %v1028
    %v2521 = vunpack.c.h.b16 %v1028
    %v2522 = vunpack.c.l.b16 %v1029
    %v2523 = vunpack.c.h.b16 %v1029
    %v2524 = vunpack.c.l.b16 %v1030
    %v2525 = vunpack.c.h.b16 %v1030
    %v2526 = vunpack.c.l.b16 %v1031
    %v2527 = vunpack.c.h.b16 %v1031
    %v2528 = vunpack.c.l.b16 %v1032
    %v2529 = vunpack.c.h.b16 %v1032
    %v2530 = vunpack.c.l.b16 %v1033
    %v2531 = vunpack.c.h.b16 %v1033
    %v2532 = vunpack.c.l.b16 %v1034
    %v2533 = vunpack.c.h.b16 %v1034
    %v2534 = vunpack.c.l.b16 %v1035
    %v2535 = vunpack.c.h.b16 %v1035
    %v2536 = vunpack.c.l.b16 %v1036
    %v2537 = vunpack.c.h.b16 %v1036
    %v2538 = vunpack.c.l.b16 %v1037
    %v2539 = vunpack.c.h.b16 %v1037
    %v2540 = vunpack.c.l.b16 %v1038
    %v2541 = vunpack.c.h.b16 %v1038
    %v2542 = vunpack.c.l.b16 %v1039
    %v2543 = vunpack.c.h.b16 %v1039
    %v2544 = vunpack.c.l.b16 %v1040
    %v2545 = vunpack.c.h.b16 %v1040
    %v2546 = vunpack.c.l.b16 %v1041
    %v2547 = vunpack.c.h.b16 %v1041
    %v2548 = vunpack.c.l.b16 %v1042
    %v2549 = vunpack.c.h.b16 %v1042
    %v2550 = vunpack.c.l.b16 %v1043
    %v2551 = vunpack.c.h.b16 %v1043
    %v2552 = vunpack.c.l.b16 %v1044
    %v2553 = vunpack.c.h.b16 %v1044
    %v2554 = vunpack.c.l.b16 %v1045
    %v2555 = vunpack.c.h.b16 %v1045
    %v2556 = vunpack.c.l.b16 %v1046
    %v2557 = vunpack.c.h.b16 %v1046
    %v2558 = vunpack.c.l.b16 %v1047
    %v2559 = vunpack.c.h.b16 %v1047
    %v2560 = vunpack.c.l.b16 %v1048
    %v2561 = vunpack.c.h.b16 %v1048
    %v2562 = vunpack.c.l.b16 %v1049
    %v2563 = vunpack.c.h.b16 %v1049
    %v2564 = vunpack.c.l.b16 %v1050
    %v2565 = vunpack.c.h.b16 %v1050
    %v2566 = vunpack.c.l.b16 %v1051
    %v2567 = vunpack.c.h.b16 %v1051
    %v2568 = vunpack.c.l.b16 %v1052
    %v2569 = vunpack.c.h.b16 %v1052
    %v2570 = vunpack.c.l.b16 %v1053
    %v2571 = vunpack.c.h.b16 %v1053
    %v2572 = vunpack.c.l.b16 %v1054
    %v2573 = vunpack.c.h.b16 %v1054
    %v2574 = vunpack.c.l.b16 %v1055
    %v2575 = vunpack.c.h.b16 %v1055
    %v2576 = vunpack.c.l.b16 %v1056
    %v2577 = vunpack.c.h.b16 %v1056
    %v2578 = vunpack.c.l.b16 %v1057
    %v2579 = vunpack.c.h.b16 %v1057
    %v2580 = vunpack.c.l.b16 %v1058
    %v2581 = vunpack.c.h.b16 %v1058
    %v2582 = vunpack.c.l.b16 %v1059
    %v2583 = vunpack.c.h.b16 %v1059
    %v2584 = vunpack.c.l.b16 %v1060
    %v2585 = vunpack.c.h.b16 %v1060
    %v2586 = vunpack.c.l.b16 %v1061
    %v2587 = vunpack.c.h.b16 %v1061
    %v2588 = vunpack.c.l.b16 %v1062
    %v2589 = vunpack.c.h.b16 %v1062
    %v2590 = vunpack.c.l.b16 %v1063
    %v2591 = vunpack.c.h.b16 %v1063
    %v2592 = vunpack.c.l.b16 %v1064
    %v2593 = vunpack.c.h.b16 %v1064
    %v2594 = vunpack.c.l.b16 %v1065
    %v2595 = vunpack.c.h.b16 %v1065
    %v2596 = vunpack.c.l.b16 %v1066
    %v2597 = vunpack.c.h.b16 %v1066
    %v2598 = vunpack.c.l.b16 %v1067
    %v2599 = vunpack.c.h.b16 %v1067
    %v2600 = vunpack.c.l.b16 %v1068
    %v2601 = vunpack.c.h.b16 %v1068
    %v2602 = vunpack.c.l.b16 %v1069
    %v2603 = vunpack.c.h.b16 %v1069
    %v2604 = vunpack.c.l.b16 %v1070
    %v2605 = vunpack.c.h.b16 %v1070
    %v2606 = vunpack.c.l.b16 %v1071
    %v2607 = vunpack.c.h.b16 %v1071
    %v2608 = vunpack.c.l.b16 %v1072
    %v2609 = vunpack.c.h.b16 %v1072
    %v2610 = vunpack.c.l.b16 %v1073
    %v2611 = vunpack.c.h.b16 %v1073
    %v2612 = vunpack.c.l.b16 %v1074
    %v2613 = vunpack.c.h.b16 %v1074
    %v2614 = vunpack.c.l.b16 %v1075
    %v2615 = vunpack.c.h.b16 %v1075
    %v2616 = vunpack.c.l.b16 %v1076
    %v2617 = vunpack.c.h.b16 %v1076
    %v2618 = vunpack.c.l.b16 %v1077
    %v2619 = vunpack.c.h.b16 %v1077
    %v2620 = vunpack.c.l.b16 %v1078
    %v2621 = vunpack.c.h.b16 %v1078
    %v2622 = vunpack.c.l.b16 %v1079
    %v2623 = vunpack.c.h.b16 %v1079
    %v2624 = vunpack.c.l.b16 %v1080
    %v2625 = vunpack.c.h.b16 %v1080
    %v2626 = vunpack.c.l.b16 %v1081
    %v2627 = vunpack.c.h.b16 %v1081
    %v2628 = vpack.c.b16 %v1608, %v1604
    %v2629 = vpack.c.b16 %v1609, %v1605
    %v2630 = vpack.c.b16 %v1610, %v1606
    %v2631 = vpack.c.b16 %v1611, %v1607
    %v2632 = vpack.c.b16 %v1616, %v1612
    %v2633 = vpack.c.b16 %v1617, %v1613
    %v2634 = vpack.c.b16 %v1618, %v1614
    %v2635 = vpack.c.b16 %v1619, %v1615
    %v2636 = vpack.c.b16 %v1624, %v1620
    %v2637 = vpack.c.b16 %v1625, %v1621
    %v2638 = vpack.c.b16 %v1626, %v1622
    %v2639 = vpack.c.b16 %v1627, %v1623
    %v2640 = vpack.c.b16 %v1632, %v1628
    %v2641 = vpack.c.b16 %v1633, %v1629
    %v2642 = vpack.c.b16 %v1634, %v1630
    %v2643 = vpack.c.b16 %v1635, %v1631
    %v2644 = vpack.c.b16 %v1640, %v1636
    %v2645 = vpack.c.b16 %v1641, %v1637
    %v2646 = vpack.c.b16 %v1642, %v1638
    %v2647 = vpack.c.b16 %v1643, %v1639
    %v2648 = vpack.c.b16 %v1648, %v1644
    %v2649 = vpack.c.b16 %v1649, %v1645
    %v2650 = vpack.c.b16 %v1650, %v1646
    %v2651 = vpack.c.b16 %v1651, %v1647
    %v2652 = vpack.c.b16 %v1656, %v1652
    %v2653 = vpack.c.b16 %v1657, %v1653
    %v2654 = vpack.c.b16 %v1658, %v1654
    %v2655 = vpack.c.b16 %v1659, %v1655
    %v2656 = vpack.c.b16 %v1664, %v1660
    %v2657 = vpack.c.b16 %v1665, %v1661
    %v2658 = vpack.c.b16 %v1666, %v1662
    %v2659 = vpack.c.b16 %v1667, %v1663
    %v2660 = vpack.c.b16 %v1672, %v1668
    %v2661 = vpack.c.b16 %v1673, %v1669
    %v2662 = vpack.c.b16 %v1674, %v1670
    %v2663 = vpack.c.b16 %v1675, %v1671
    %v2664 = vpack.c.b16 %v1680, %v1676
    %v2665 = vpack.c.b16 %v1681, %v1677
    %v2666 = vpack.c.b16 %v1682, %v1678
    %v2667 = vpack.c.b16 %v1683, %v1679
    %v2668 = vpack.c.b16 %v1688, %v1684
    %v2669 = vpack.c.b16 %v1689, %v1685
    %v2670 = vpack.c.b16 %v1690, %v1686
    %v2671 = vpack.c.b16 %v1691, %v1687
    %v2672 = vpack.c.b16 %v1696, %v1692
    %v2673 = vpack.c.b16 %v1697, %v1693
    %v2674 = vpack.c.b16 %v1698, %v1694
    %v2675 = vpack.c.b16 %v1699, %v1695
    %v2676 = vpack.c.b16 %v1704, %v1700
    %v2677 = vpack.c.b16 %v1705, %v1701
    %v2678 = vpack.c.b16 %v1706, %v1702
    %v2679 = vpack.c.b16 %v1707, %v1703
    %v2680 = vpack.c.b16 %v1712, %v1708
    %v2681 = vpack.c.b16 %v1713, %v1709
    %v2682 = vpack.c.b16 %v1714, %v1710
    %v2683 = vpack.c.b16 %v1715, %v1711
    %v2684 = vpack.c.b16 %v1720, %v1716
    %v2685 = vpack.c.b16 %v1721, %v1717
    %v2686 = vpack.c.b16 %v1722, %v1718
    %v2687 = vpack.c.b16 %v1723, %v1719
    %v2688 = vpack.c.b16 %v1728, %v1724
    %v2689 = vpack.c.b16 %v1729, %v1725
    %v2690 = vpack.c.b16 %v1730, %v1726
    %v2691 = vpack.c.b16 %v1731, %v1727
    %v2692 = vpack.c.b16 %v1736, %v1732
    %v2693 = vpack.c.b16 %v1737, %v1733
    %v2694 = vpack.c.b16 %v1738, %v1734
    %v2695 = vpack.c.b16 %v1739, %v1735
    %v2696 = vpack.c.b16 %v1744, %v1740
    %v2697 = vpack.c.b16 %v1745, %v1741
    %v2698 = vpack.c.b16 %v1746, %v1742
    %v2699 = vpack.c.b16 %v1747, %v1743
    %v2700 = vpack.c.b16 %v1752, %v1748
    %v2701 = vpack.c.b16 %v1753, %v1749
    %v2702 = vpack.c.b16 %v1754, %v1750
    %v2703 = vpack.c.b16 %v1755, %v1751
    %v2704 = vpack.c.b16 %v1760, %v1756
    %v2705 = vpack.c.b16 %v1761, %v1757
    %v2706 = vpack.c.b16 %v1762, %v1758
    %v2707 = vpack.c.b16 %v1763, %v1759
    %v2708 = vpack.c.b16 %v1768, %v1764
    %v2709 = vpack.c.b16 %v1769, %v1765
    %v2710 = vpack.c.b16 %v1770, %v1766
    %v2711 = vpack.c.b16 %v1771, %v1767
    %v2712 = vpack.c.b16 %v1776, %v1772
    %v2713 = vpack.c.b16 %v1777, %v1773
    %v2714 = vpack.c.b16 %v1778, %v1774
    %v2715 = vpack.c.b16 %v1779, %v1775
    %v2716 = vpack.c.b16 %v1784, %v1780
    %v2717 = vpack.c.b16 %v1785, %v1781
    %v2718 = vpack.c.b16 %v1786, %v1782
    %v2719 = vpack.c.b16 %v1787, %v1783
    %v2720 = vpack.c.b16 %v1792, %v1788
    %v2721 = vpack.c.b16 %v1793, %v1789
    %v2722 = vpack.c.b16 %v1794, %v1790
    %v2723 = vpack.c.b16 %v1795, %v1791
    %v2724 = vpack.c.b16 %v1800, %v1796
    %v2725 = vpack.c.b16 %v1801, %v1797
    %v2726 = vpack.c.b16 %v1802, %v1798
    %v2727 = vpack.c.b16 %v1803, %v1799
    %v2728 = vpack.c.b16 %v1808, %v1804
    %v2729 = vpack.c.b16 %v1809, %v1805
    %v2730 = vpack.c.b16 %v1810, %v1806
    %v2731 = vpack.c.b16 %v1811, %v1807
    %v2732 = vpack.c.b16 %v1816, %v1812
    %v2733 = vpack.c.b16 %v1817, %v1813
    %v2734 = vpack.c.b16 %v1818, %v1814
    %v2735 = vpack.c.b16 %v1819, %v1815
    %v2736 = vpack.c.b16 %v1824, %v1820
    %v2737 = vpack.c.b16 %v1825, %v1821
    %v2738 = vpack.c.b16 %v1826, %v1822
    %v2739 = vpack.c.b16 %v1827, %v1823
    %v2740 = vpack.c.b16 %v1832, %v1828
    %v2741 = vpack.c.b16 %v1833, %v1829
    %v2742 = vpack.c.b16 %v1834, %v1830
    %v2743 = vpack.c.b16 %v1835, %v1831
    %v2744 = vpack.c.b16 %v1840, %v1836
    %v2745 = vpack.c.b16 %v1841, %v1837
    %v2746 = vpack.c.b16 %v1842, %v1838
    %v2747 = vpack.c.b16 %v1843, %v1839
    %v2748 = vpack.c.b16 %v1848, %v1844
    %v2749 = vpack.c.b16 %v1849, %v1845
    %v2750 = vpack.c.b16 %v1850, %v1846
    %v2751 = vpack.c.b16 %v1851, %v1847
    %v2752 = vpack.c.b16 %v1856, %v1852
    %v2753 = vpack.c.b16 %v1857, %v1853
    %v2754 = vpack.c.b16 %v1858, %v1854
    %v2755 = vpack.c.b16 %v1859, %v1855
    %v2756 = vpack.c.b16 %v1864, %v1860
    %v2757 = vpack.c.b16 %v1865, %v1861
    %v2758 = vpack.c.b16 %v1866, %v1862
    %v2759 = vpack.c.b16 %v1867, %v1863
    %v2760 = vpack.c.b16 %v1872, %v1868
    %v2761 = vpack.c.b16 %v1873, %v1869
    %v2762 = vpack.c.b16 %v1874, %v1870
    %v2763 = vpack.c.b16 %v1875, %v1871
    %v2764 = vpack.c.b16 %v1880, %v1876
    %v2765 = vpack.c.b16 %v1881, %v1877
    %v2766 = vpack.c.b16 %v1882, %v1878
    %v2767 = vpack.c.b16 %v1883, %v1879
    %v2768 = vpack.c.b16 %v1888, %v1884
    %v2769 = vpack.c.b16 %v1889, %v1885
    %v2770 = vpack.c.b16 %v1890, %v1886
    %v2771 = vpack.c.b16 %v1891, %v1887
    %v2772 = vpack.c.b16 %v1896, %v1892
    %v2773 = vpack.c.b16 %v1897, %v1893
    %v2774 = vpack.c.b16 %v1898, %v1894
    %v2775 = vpack.c.b16 %v1899, %v1895
    %v2776 = vpack.c.b16 %v1904, %v1900
    %v2777 = vpack.c.b16 %v1905, %v1901
    %v2778 = vpack.c.b16 %v1906, %v1902
    %v2779 = vpack.c.b16 %v1907, %v1903
    %v2780 = vpack.c.b16 %v1912, %v1908
    %v2781 = vpack.c.b16 %v1913, %v1909
    %v2782 = vpack.c.b16 %v1914, %v1910
    %v2783 = vpack.c.b16 %v1915, %v1911
    %v2784 = vpack.c.b16 %v1920, %v1916
    %v2785 = vpack.c.b16 %v1921, %v1917
    %v2786 = vpack.c.b16 %v1922, %v1918
    %v2787 = vpack.c.b16 %v1923, %v1919
    %v2788 = vpack.c.b16 %v1928, %v1924
    %v2789 = vpack.c.b16 %v1929, %v1925
    %v2790 = vpack.c.b16 %v1930, %v1926
    %v2791 = vpack.c.b16 %v1931, %v1927
    %v2792 = vpack.c.b16 %v1936, %v1932
    %v2793 = vpack.c.b16 %v1937, %v1933
    %v2794 = vpack.c.b16 %v1938, %v1934
    %v2795 = vpack.c.b16 %v1939, %v1935
    %v2796 = vpack.c.b16 %v1944, %v1940
    %v2797 = vpack.c.b16 %v1945, %v1941
    %v2798 = vpack.c.b16 %v1946, %v1942
    %v2799 = vpack.c.b16 %v1947, %v1943
    %v2800 = vpack.c.b16 %v1952, %v1948
    %v2801 = vpack.c.b16 %v1953, %v1949
    %v2802 = vpack.c.b16 %v1954, %v1950
    %v2803 = vpack.c.b16 %v1955, %v1951
    %v2804 = vpack.c.b16 %v1960, %v1956
    %v2805 = vpack.c.b16 %v1961, %v1957
    %v2806 = vpack.c.b16 %v1962, %v1958
    %v2807 = vpack.c.b16 %v1963, %v1959
    %v2808 = vpack.c.b16 %v1968, %v1964
    %v2809 = vpack.c.b16 %v1969, %v1965
    %v2810 = vpack.c.b16 %v1970, %v1966
    %v2811 = vpack.c.b16 %v1971, %v1967
    %v2812 = vpack.c.b16 %v1976, %v1972
    %v2813 = vpack.c.b16 %v1977, %v1973
    %v2814 = vpack.c.b16 %v1978, %v1974
    %v2815 = vpack.c.b16 %v1979, %v1975
    %v2816 = vpack.c.b16 %v1984, %v1980
    %v2817 = vpack.c.b16 %v1985, %v1981
    %v2818 = vpack.c.b16 %v1986, %v1982
    %v2819 = vpack.c.b16 %v1987, %v1983
    %v2820 = vpack.c.b16 %v1992, %v1988
    %v2821 = vpack.c.b16 %v1993, %v1989
    %v2822 = vpack.c.b16 %v1994, %v1990
    %v2823 = vpack.c.b16 %v1995, %v1991
    %v2824 = vpack.c.b16 %v2000, %v1996
    %v2825 = vpack.c.b16 %v2001, %v1997
    %v2826 = vpack.c.b16 %v2002, %v1998
    %v2827 = vpack.c.b16 %v2003, %v1999
    %v2828 = vpack.c.b16 %v2008, %v2004
    %v2829 = vpack.c.b16 %v2009, %v2005
    %v2830 = vpack.c.b16 %v2010, %v2006
    %v2831 = vpack.c.b16 %v2011, %v2007
    %v2832 = vpack.c.b16 %v2016, %v2012
    %v2833 = vpack.c.b16 %v2017, %v2013
    %v2834 = vpack.c.b16 %v2018, %v2014
    %v2835 = vpack.c.b16 %v2019, %v2015
    %v2836 = vpack.c.b16 %v2024, %v2020
    %v2837 = vpack.c.b16 %v2025, %v2021
    %v2838 = vpack.c.b16 %v2026, %v2022
    %v2839 = vpack.c.b16 %v2027, %v2023
    %v2840 = vpack.c.b16 %v2032, %v2028
    %v2841 = vpack.c.b16 %v2033, %v2029
    %v2842 = vpack.c.b16 %v2034, %v2030
    %v2843 = vpack.c.b16 %v2035, %v2031
    %v2844 = vpack.c.b16 %v2040, %v2036
    %v2845 = vpack.c.b16 %v2041, %v2037
    %v2846 = vpack.c.b16 %v2042, %v2038
    %v2847 = vpack.c.b16 %v2043, %v2039
    %v2848 = vpack.c.b16 %v2048, %v2044
    %v2849 = vpack.c.b16 %v2049, %v2045
    %v2850 = vpack.c.b16 %v2050, %v2046
    %v2851 = vpack.c.b16 %v2051, %v2047
    %v2852 = vpack.c.b16 %v2056, %v2052
    %v2853 = vpack.c.b16 %v2057, %v2053
    %v2854 = vpack.c.b16 %v2058, %v2054
    %v2855 = vpack.c.b16 %v2059, %v2055
    %v2856 = vpack.c.b16 %v2064, %v2060
    %v2857 = vpack.c.b16 %v2065, %v2061
    %v2858 = vpack.c.b16 %v2066, %v2062
    %v2859 = vpack.c.b16 %v2067, %v2063
    %v2860 = vpack.c.b16 %v2072, %v2068
    %v2861 = vpack.c.b16 %v2073, %v2069
    %v2862 = vpack.c.b16 %v2074, %v2070
    %v2863 = vpack.c.b16 %v2075, %v2071
    %v2864 = vpack.c.b16 %v2080, %v2076
    %v2865 = vpack.c.b16 %v2081, %v2077
    %v2866 = vpack.c.b16 %v2082, %v2078
    %v2867 = vpack.c.b16 %v2083, %v2079
    %v2868 = vpack.c.b16 %v2088, %v2084
    %v2869 = vpack.c.b16 %v2089, %v2085
    %v2870 = vpack.c.b16 %v2090, %v2086
    %v2871 = vpack.c.b16 %v2091, %v2087
    %v2872 = vpack.c.b16 %v2096, %v2092
    %v2873 = vpack.c.b16 %v2097, %v2093
    %v2874 = vpack.c.b16 %v2098, %v2094
    %v2875 = vpack.c.b16 %v2099, %v2095
    %v2876 = vpack.c.b16 %v2104, %v2100
    %v2877 = vpack.c.b16 %v2105, %v2101
    %v2878 = vpack.c.b16 %v2106, %v2102
    %v2879 = vpack.c.b16 %v2107, %v2103
    %v2880 = vpack.c.b16 %v2112, %v2108
    %v2881 = vpack.c.b16 %v2113, %v2109
    %v2882 = vpack.c.b16 %v2114, %v2110
    %v2883 = vpack.c.b16 %v2115, %v2111
    %v2884 = vpack.c.b16 %v2120, %v2116
    %v2885 = vpack.c.b16 %v2121, %v2117
    %v2886 = vpack.c.b16 %v2122, %v2118
    %v2887 = vpack.c.b16 %v2123, %v2119
    %v2888 = vpack.c.b16 %v2128, %v2124
    %v2889 = vpack.c.b16 %v2129, %v2125
    %v2890 = vpack.c.b16 %v2130, %v2126
    %v2891 = vpack.c.b16 %v2131, %v2127
    %v2892 = vpack.c.b16 %v2136, %v2132
    %v2893 = vpack.c.b16 %v2137, %v2133
    %v2894 = vpack.c.b16 %v2138, %v2134
    %v2895 = vpack.c.b16 %v2139, %v2135
    %v2896 = vpack.c.b16 %v2144, %v2140
    %v2897 = vpack.c.b16 %v2145, %v2141
    %v2898 = vpack.c.b16 %v2146, %v2142
    %v2899 = vpack.c.b16 %v2147, %v2143
    %v2900 = vpack.c.b16 %v2152, %v2148
    %v2901 = vpack.c.b16 %v2153, %v2149
    %v2902 = vpack.c.b16 %v2154, %v2150
    %v2903 = vpack.c.b16 %v2155, %v2151
    %v2904 = vpack.c.b16 %v2160, %v2156
    %v2905 = vpack.c.b16 %v2161, %v2157
    %v2906 = vpack.c.b16 %v2162, %v2158
    %v2907 = vpack.c.b16 %v2163, %v2159
    %v2908 = vpack.c.b16 %v2168, %v2164
    %v2909 = vpack.c.b16 %v2169, %v2165
    %v2910 = vpack.c.b16 %v2170, %v2166
    %v2911 = vpack.c.b16 %v2171, %v2167
    %v2912 = vpack.c.b16 %v2176, %v2172
    %v2913 = vpack.c.b16 %v2177, %v2173
    %v2914 = vpack.c.b16 %v2178, %v2174
    %v2915 = vpack.c.b16 %v2179, %v2175
    %v2916 = vpack.c.b16 %v2184, %v2180
    %v2917 = vpack.c.b16 %v2185, %v2181
    %v2918 = vpack.c.b16 %v2186, %v2182
    %v2919 = vpack.c.b16 %v2187, %v2183
    %v2920 = vpack.c.b16 %v2192, %v2188
    %v2921 = vpack.c.b16 %v2193, %v2189
    %v2922 = vpack.c.b16 %v2194, %v2190
    %v2923 = vpack.c.b16 %v2195, %v2191
    %v2924 = vpack.c.b16 %v2200, %v2196
    %v2925 = vpack.c.b16 %v2201, %v2197
    %v2926 = vpack.c.b16 %v2202, %v2198
    %v2927 = vpack.c.b16 %v2203, %v2199
    %v2928 = vpack.c.b16 %v2208, %v2204
    %v2929 = vpack.c.b16 %v2209, %v2205
    %v2930 = vpack.c.b16 %v2210, %v2206
    %v2931 = vpack.c.b16 %v2211, %v2207
    %v2932 = vpack.c.b16 %v2216, %v2212
    %v2933 = vpack.c.b16 %v2217, %v2213
    %v2934 = vpack.c.b16 %v2218, %v2214
    %v2935 = vpack.c.b16 %v2219, %v2215
    %v2936 = vpack.c.b16 %v2224, %v2220
    %v2937 = vpack.c.b16 %v2225, %v2221
    %v2938 = vpack.c.b16 %v2226, %v2222
    %v2939 = vpack.c.b16 %v2227, %v2223
    %v2940 = vpack.c.b16 %v2232, %v2228
    %v2941 = vpack.c.b16 %v2233, %v2229
    %v2942 = vpack.c.b16 %v2234, %v2230
    %v2943 = vpack.c.b16 %v2235, %v2231
    %v2944 = vpack.c.b16 %v2240, %v2236
    %v2945 = vpack.c.b16 %v2241, %v2237
    %v2946 = vpack.c.b16 %v2242, %v2238
    %v2947 = vpack.c.b16 %v2243, %v2239
    %v2948 = vpack.c.b16 %v2248, %v2244
    %v2949 = vpack.c.b16 %v2249, %v2245
    %v2950 = vpack.c.b16 %v2250, %v2246
    %v2951 = vpack.c.b16 %v2251, %v2247
    %v2952 = vpack.c.b16 %v2256, %v2252
    %v2953 = vpack.c.b16 %v2257, %v2253
    %v2954 = vpack.c.b16 %v2258, %v2254
    %v2955 = vpack.c.b16 %v2259, %v2255
    %v2956 = vpack.c.b16 %v2264, %v2260
    %v2957 = vpack.c.b16 %v2265, %v2261
    %v2958 = vpack.c.b16 %v2266, %v2262
    %v2959 = vpack.c.b16 %v2267, %v2263
    %v2960 = vpack.c.b16 %v2272, %v2268
    %v2961 = vpack.c.b16 %v2273, %v2269
    %v2962 = vpack.c.b16 %v2274, %v2270
    %v2963 = vpack.c.b16 %v2275, %v2271
    %v2964 = vpack.c.b16 %v2280, %v2276
    %v2965 = vpack.c.b16 %v2281, %v2277
    %v2966 = vpack.c.b16 %v2282, %v2278
    %v2967 = vpack.c.b16 %v2283, %v2279
    %v2968 = vpack.c.b16 %v2288, %v2284
    %v2969 = vpack.c.b16 %v2289, %v2285
    %v2970 = vpack.c.b16 %v2290, %v2286
    %v2971 = vpack.c.b16 %v2291, %v2287
    %v2972 = vpack.c.b16 %v2296, %v2292
    %v2973 = vpack.c.b16 %v2297, %v2293
    %v2974 = vpack.c.b16 %v2298, %v2294
    %v2975 = vpack.c.b16 %v2299, %v2295
    %v2976 = vpack.c.b16 %v2304, %v2300
    %v2977 = vpack.c.b16 %v2305, %v2301
    %v2978 = vpack.c.b16 %v2306, %v2302
    %v2979 = vpack.c.b16 %v2307, %v2303
    %v2980 = vpack.c.b16 %v2312, %v2308
    %v2981 = vpack.c.b16 %v2313, %v2309
    %v2982 = vpack.c.b16 %v2314, %v2310
    %v2983 = vpack.c.b16 %v2315, %v2311
    %v2984 = vpack.c.b16 %v2320, %v2316
    %v2985 = vpack.c.b16 %v2321, %v2317
    %v2986 = vpack.c.b16 %v2322, %v2318
    %v2987 = vpack.c.b16 %v2323, %v2319
    %v2988 = vpack.c.b16 %v2328, %v2324
    %v2989 = vpack.c.b16 %v2329, %v2325
    %v2990 = vpack.c.b16 %v2330, %v2326
    %v2991 = vpack.c.b16 %v2331, %v2327
    %v2992 = vpack.c.b16 %v2336, %v2332
    %v2993 = vpack.c.b16 %v2337, %v2333
    %v2994 = vpack.c.b16 %v2338, %v2334
    %v2995 = vpack.c.b16 %v2339, %v2335
    %v2996 = vpack.c.b16 %v2344, %v2340
    %v2997 = vpack.c.b16 %v2345, %v2341
    %v2998 = vpack.c.b16 %v2346, %v2342
    %v2999 = vpack.c.b16 %v2347, %v2343
    %v3000 = vpack.c.b16 %v2352, %v2348
    %v3001 = vpack.c.b16 %v2353, %v2349
    %v3002 = vpack.c.b16 %v2354, %v2350
    %v3003 = vpack.c.b16 %v2355, %v2351
    %v3004 = vpack.c.b16 %v2360, %v2356
    %v3005 = vpack.c.b16 %v2361, %v2357
    %v3006 = vpack.c.b16 %v2362, %v2358
    %v3007 = vpack.c.b16 %v2363, %v2359
    %v3008 = vpack.c.b16 %v2368, %v2364
    %v3009 = vpack.c.b16 %v2369, %v2365
    %v3010 = vpack.c.b16 %v2370, %v2366
    %v3011 = vpack.c.b16 %v2371, %v2367
    %v3012 = vpack.c.b16 %v2376, %v2372
    %v3013 = vpack.c.b16 %v2377, %v2373
    %v3014 = vpack.c.b16 %v2378, %v2374
    %v3015 = vpack.c.b16 %v2379, %v2375
    %v3016 = vpack.c.b16 %v2384, %v2380
    %v3017 = vpack.c.b16 %v2385, %v2381
    %v3018 = vpack.c.b16 %v2386, %v2382
    %v3019 = vpack.c.b16 %v2387, %v2383
    %v3020 = vpack.c.b16 %v2392, %v2388
    %v3021 = vpack.c.b16 %v2393, %v2389
    %v3022 = vpack.c.b16 %v2394, %v2390
    %v3023 = vpack.c.b16 %v2395, %v2391
    %v3024 = vpack.c.b16 %v2400, %v2396
    %v3025 = vpack.c.b16 %v2401, %v2397
    %v3026 = vpack.c.b16 %v2402, %v2398
    %v3027 = vpack.c.b16 %v2403, %v2399
    %v3028 = vpack.c.b16 %v2408, %v2404
    %v3029 = vpack.c.b16 %v2409, %v2405
    %v3030 = vpack.c.b16 %v2410, %v2406
    %v3031 = vpack.c.b16 %v2411, %v2407
    %v3032 = vpack.c.b16 %v2416, %v2412
    %v3033 = vpack.c.b16 %v2417, %v2413
    %v3034 = vpack.c.b16 %v2418, %v2414
    %v3035 = vpack.c.b16 %v2419, %v2415
    %v3036 = vpack.c.b16 %v2424, %v2420
    %v3037 = vpack.c.b16 %v2425, %v2421
    %v3038 = vpack.c.b16 %v2426, %v2422
    %v3039 = vpack.c.b16 %v2427, %v2423
    %v3040 = vpack.c.b16 %v2432, %v2428
    %v3041 = vpack.c.b16 %v2433, %v2429
    %v3042 = vpack.c.b16 %v2434, %v2430
    %v3043 = vpack.c.b16 %v2435, %v2431
    %v3044 = vpack.c.b16 %v2440, %v2436
    %v3045 = vpack.c.b16 %v2441, %v2437
    %v3046 = vpack.c.b16 %v2442, %v2438
    %v3047 = vpack.c.b16 %v2443, %v2439
    %v3048 = vpack.c.b16 %v2448, %v2444
    %v3049 = vpack.c.b16 %v2449, %v2445
    %v3050 = vpack.c.b16 %v2450, %v2446
    %v3051 = vpack.c.b16 %v2451, %v2447
    %v3052 = vpack.c.b16 %v2456, %v2452
    %v3053 = vpack.c.b16 %v2457, %v2453
    %v3054 = vpack.c.b16 %v2458, %v2454
    %v3055 = vpack.c.b16 %v2459, %v2455
    %v3056 = vpack.c.b16 %v2464, %v2460
    %v3057 = vpack.c.b16 %v2465, %v2461
    %v3058 = vpack.c.b16 %v2466, %v2462
    %v3059 = vpack.c.b16 %v2467, %v2463
    %v3060 = vpack.c.b16 %v2472, %v2468
    %v3061 = vpack.c.b16 %v2473, %v2469
    %v3062 = vpack.c.b16 %v2474, %v2470
    %v3063 = vpack.c.b16 %v2475, %v2471
    %v3064 = vpack.c.b16 %v2480, %v2476
    %v3065 = vpack.c.b16 %v2481, %v2477
    %v3066 = vpack.c.b16 %v2482, %v2478
    %v3067 = vpack.c.b16 %v2483, %v2479
    %v3068 = vpack.c.b16 %v2488, %v2484
    %v3069 = vpack.c.b16 %v2489, %v2485
    %v3070 = vpack.c.b16 %v2490, %v2486
    %v3071 = vpack.c.b16 %v2491, %v2487
    %v3072 = vpack.c.b16 %v2496, %v2492
    %v3073 = vpack.c.b16 %v2497, %v2493
    %v3074 = vpack.c.b16 %v2498, %v2494
    %v3075 = vpack.c.b16 %v2499, %v2495
    %v3076 = vpack.c.b16 %v2504, %v2500
    %v3077 = vpack.c.b16 %v2505, %v2501
    %v3078 = vpack.c.b16 %v2506, %v2502
    %v3079 = vpack.c.b16 %v2507, %v2503
    %v3080 = vpack.c.b16 %v2512, %v2508
    %v3081 = vpack.c.b16 %v2513, %v2509
    %v3082 = vpack.c.b16 %v2514, %v2510
    %v3083 = vpack.c.b16 %v2515, %v2511
    %v3084 = vpack.c.b16 %v2520, %v2516
    %v3085 = vpack.c.b16 %v2521, %v2517
    %v3086 = vpack.c.b16 %v2522, %v2518
    %v3087 = vpack.c.b16 %v2523, %v2519
    %v3088 = vpack.c.b16 %v2528, %v2524
    %v3089 = vpack.c.b16 %v2529, %v2525
    %v3090 = vpack.c.b16 %v2530, %v2526
    %v3091 = vpack.c.b16 %v2531, %v2527
    %v3092 = vpack.c.b16 %v2536, %v2532
    %v3093 = vpack.c.b16 %v2537, %v2533
    %v3094 = vpack.c.b16 %v2538, %v2534
    %v3095 = vpack.c.b16 %v2539, %v2535
    %v3096 = vpack.c.b16 %v2544, %v2540
    %v3097 = vpack.c.b16 %v2545, %v2541
    %v3098 = vpack.c.b16 %v2546, %v2542
    %v3099 = vpack.c.b16 %v2547, %v2543
    %v3100 = vpack.c.b16 %v2552, %v2548
    %v3101 = vpack.c.b16 %v2553, %v2549
    %v3102 = vpack.c.b16 %v2554, %v2550
    %v3103 = vpack.c.b16 %v2555, %v2551
    %v3104 = vpack.c.b16 %v2560, %v2556
    %v3105 = vpack.c.b16 %v2561, %v2557
    %v3106 = vpack.c.b16 %v2562, %v2558
    %v3107 = vpack.c.b16 %v2563, %v2559
    %v3108 = vpack.c.b16 %v2568, %v2564
    %v3109 = vpack.c.b16 %v2569, %v2565
    %v3110 = vpack.c.b16 %v2570, %v2566
    %v3111 = vpack.c.b16 %v2571, %v2567
    %v3112 = vpack.c.b16 %v2576, %v2572
    %v3113 = vpack.c.b16 %v2577, %v2573
    %v3114 = vpack.c.b16 %v2578, %v2574
    %v3115 = vpack.c.b16 %v2579, %v2575
    %v3116 = vpack.c.b16 %v2584, %v2580
    %v3117 = vpack.c.b16 %v2585, %v2581
    %v3118 = vpack.c.b16 %v2586, %v2582
    %v3119 = vpack.c.b16 %v2587, %v2583
    %v3120 = vpack.c.b16 %v2592, %v2588
    %v3121 = vpack.c.b16 %v2593, %v2589
    %v3122 = vpack.c.b16 %v2594, %v2590
    %v3123 = vpack.c.b16 %v2595, %v2591
    %v3124 = vpack.c.b16 %v2600, %v2596
    %v3125 = vpack.c.b16 %v2601, %v2597
    %v3126 = vpack.c.b16 %v2602, %v2598
    %v3127 = vpack.c.b16 %v2603, %v2599
    %v3128 = vpack.c.b16 %v2608, %v2604
    %v3129 = vpack.c.b16 %v2609, %v2605
    %v3130 = vpack.c.b16 %v2610, %v2606
    %v3131 = vpack.c.b16 %v2611, %v2607
    %v3132 = vpack.c.b16 %v2616, %v2612
    %v3133 = vpack.c.b16 %v2617, %v2613
    %v3134 = vpack.c.b16 %v2618, %v2614
    %v3135 = vpack.c.b16 %v2619, %v2615
    %v3136 = vpack.c.b16 %v2624, %v2620
    %v3137 = vpack.c.b16 %v2625, %v2621
    %v3138 = vpack.c.b16 %v2626, %v2622
    %v3139 = vpack.c.b16 %v2627, %v2623
    %3652 = vmatpush.bf16.msra.mxu0 %v2656
    %3653 = vmatpush.bf16.msra.mxu0 %v2652
    %3654 = vmatpush.bf16.msra.mxu0 %v2648
    %3655 = vmatpush.bf16.msra.mxu0 %v2644
    %3656 = vmatpush.bf16.msra.mxu0 %v2640
    %3657 = vmatpush.bf16.msra.mxu0 %v2636
    %3658 = vmatpush.bf16.msra.mxu0 %v2632
    %3659 = vmatpush.bf16.msra.mxu0 %v2628
    %3660 = vmatmul.bf16.gmra.mxu0 %v554
    %v3661 = vpop.f32.mrf.mxu0
    %v3662 = vadd.f32 %v1084, %v3661
    %v3663 = vpop.f32.mrf.mxu0
    %3664 = vdwg.mxu0
    %3665 = vmatpush.bf16.msra.mxu0 %v2688
    %3666 = vmatpush.bf16.msra.mxu0 %v2684
    %3667 = vmatpush.bf16.msra.mxu0 %v2680
    %3668 = vmatpush.bf16.msra.mxu0 %v2676
    %3669 = vmatpush.bf16.msra.mxu0 %v2672
    %3670 = vmatpush.bf16.msra.mxu0 %v2668
    %3671 = vmatpush.bf16.msra.mxu0 %v2664
    %3672 = vmatpush.bf16.msra.mxu0 %v2660
    %3673 = vmatmul.bf16.gmra.mxu0 %v555
    %v3674 = vpop.f32.mrf.mxu0
    %v3675 = vadd.f32 %v3662, %v3674
    %v3676 = vpop.f32.mrf.mxu0
    %3677 = vdwg.mxu0
    %3678 = vmatpush.bf16.msra.mxu0 %v2720
    %3679 = vmatpush.bf16.msra.mxu0 %v2716
    %3680 = vmatpush.bf16.msra.mxu0 %v2712
    %3681 = vmatpush.bf16.msra.mxu0 %v2708
    %3682 = vmatpush.bf16.msra.mxu0 %v2704
    %3683 = vmatpush.bf16.msra.mxu0 %v2700
    %3684 = vmatpush.bf16.msra.mxu0 %v2696
    %3685 = vmatpush.bf16.msra.mxu0 %v2692
    %3686 = vmatmul.bf16.gmra.mxu0 %v556
    %v3687 = vpop.f32.mrf.mxu0
    %v3688 = vadd.f32 %v3675, %v3687
    %v3689 = vpop.f32.mrf.mxu0
    %3690 = vdwg.mxu0
    %3691 = vmatpush.bf16.msra.mxu0 %v2752
    %3692 = vmatpush.bf16.msra.mxu0 %v2748
    %3693 = vmatpush.bf16.msra.mxu0 %v2744
    %3694 = vmatpush.bf16.msra.mxu0 %v2740
    %3695 = vmatpush.bf16.msra.mxu0 %v2736
    %3696 = vmatpush.bf16.msra.mxu0 %v2732
    %3697 = vmatpush.bf16.msra.mxu0 %v2728
    %3698 = vmatpush.bf16.msra.mxu0 %v2724
    %3699 = vmatmul.bf16.gmra.mxu0 %v557
    %v3700 = vpop.f32.mrf.mxu0
    %v3701 = vadd.f32 %v3688, %v3700
    %v3702 = vpop.f32.mrf.mxu0
    %3703 = vdwg.mxu0
    %3704 = vmatpush.bf16.msra.mxu0 %v2784
    %3705 = vmatpush.bf16.msra.mxu0 %v2780
    %3706 = vmatpush.bf16.msra.mxu0 %v2776
    %3707 = vmatpush.bf16.msra.mxu0 %v2772
    %3708 = vmatpush.bf16.msra.mxu0 %v2768
    %3709 = vmatpush.bf16.msra.mxu0 %v2764
    %3710 = vmatpush.bf16.msra.mxu0 %v2760
    %3711 = vmatpush.bf16.msra.mxu0 %v2756
    %3712 = vmatmul.bf16.gmra.mxu0 %v558
    %v3713 = vpop.f32.mrf.mxu0
    %v3714 = vadd.f32 %v3701, %v3713
    %v3715 = vpop.f32.mrf.mxu0
    %3716 = vdwg.mxu0
    %3717 = vmatpush.bf16.msra.mxu0 %v2816
    %3718 = vmatpush.bf16.msra.mxu0 %v2812
    %3719 = vmatpush.bf16.msra.mxu0 %v2808
    %3720 = vmatpush.bf16.msra.mxu0 %v2804
    %3721 = vmatpush.bf16.msra.mxu0 %v2800
    %3722 = vmatpush.bf16.msra.mxu0 %v2796
    %3723 = vmatpush.bf16.msra.mxu0 %v2792
    %3724 = vmatpush.bf16.msra.mxu0 %v2788
    %3725 = vmatmul.bf16.gmra.mxu0 %v559
    %v3726 = vpop.f32.mrf.mxu0
    %v3727 = vadd.f32 %v3714, %v3726
    %v3728 = vpop.f32.mrf.mxu0
    %3729 = vdwg.mxu0
    %3730 = vmatpush.bf16.msra.mxu0 %v2848
    %3731 = vmatpush.bf16.msra.mxu0 %v2844
    %3732 = vmatpush.bf16.msra.mxu0 %v2840
    %3733 = vmatpush.bf16.msra.mxu0 %v2836
    %3734 = vmatpush.bf16.msra.mxu0 %v2832
    %3735 = vmatpush.bf16.msra.mxu0 %v2828
    %3736 = vmatpush.bf16.msra.mxu0 %v2824
    %3737 = vmatpush.bf16.msra.mxu0 %v2820
    %3738 = vmatmul.bf16.gmra.mxu0 %v560
    %v3739 = vpop.f32.mrf.mxu0
    %v3740 = vadd.f32 %v3727, %v3739
    %v3741 = vpop.f32.mrf.mxu0
    %3742 = vdwg.mxu0
    %3743 = vmatpush.bf16.msra.mxu0 %v2880
    %3744 = vmatpush.bf16.msra.mxu0 %v2876
    %3745 = vmatpush.bf16.msra.mxu0 %v2872
    %3746 = vmatpush.bf16.msra.mxu0 %v2868
    %3747 = vmatpush.bf16.msra.mxu0 %v2864
    %3748 = vmatpush.bf16.msra.mxu0 %v2860
    %3749 = vmatpush.bf16.msra.mxu0 %v2856
    %3750 = vmatpush.bf16.msra.mxu0 %v2852
    %3751 = vmatmul.bf16.gmra.mxu0 %v561
    %v3752 = vpop.f32.mrf.mxu0
    %v3753 = vadd.f32 %v3740, %v3752
    %v3754 = vpop.f32.mrf.mxu0
    %3755 = vdwg.mxu0
    %3756 = vmatpush.bf16.msra.mxu0 %v2912
    %3757 = vmatpush.bf16.msra.mxu0 %v2908
    %3758 = vmatpush.bf16.msra.mxu0 %v2904
    %3759 = vmatpush.bf16.msra.mxu0 %v2900
    %3760 = vmatpush.bf16.msra.mxu0 %v2896
    %3761 = vmatpush.bf16.msra.mxu0 %v2892
    %3762 = vmatpush.bf16.msra.mxu0 %v2888
    %3763 = vmatpush.bf16.msra.mxu0 %v2884
    %3764 = vmatmul.bf16.gmra.mxu0 %v562
    %v3765 = vpop.f32.mrf.mxu0
    %v3766 = vadd.f32 %v3753, %v3765
    %v3767 = vpop.f32.mrf.mxu0
    %3768 = vdwg.mxu0
    %3769 = vmatpush.bf16.msra.mxu0 %v2944
    %3770 = vmatpush.bf16.msra.mxu0 %v2940
    %3771 = vmatpush.bf16.msra.mxu0 %v2936
    %3772 = vmatpush.bf16.msra.mxu0 %v2932
    %3773 = vmatpush.bf16.msra.mxu0 %v2928
    %3774 = vmatpush.bf16.msra.mxu0 %v2924
    %3775 = vmatpush.bf16.msra.mxu0 %v2920
    %3776 = vmatpush.bf16.msra.mxu0 %v2916
    %3777 = vmatmul.bf16.gmra.mxu0 %v563
    %v3778 = vpop.f32.mrf.mxu0
    %v3779 = vadd.f32 %v3766, %v3778
    %v3780 = vpop.f32.mrf.mxu0
    %3781 = vdwg.mxu0
    %3782 = vmatpush.bf16.msra.mxu0 %v2976
    %3783 = vmatpush.bf16.msra.mxu0 %v2972
    %3784 = vmatpush.bf16.msra.mxu0 %v2968
    %3785 = vmatpush.bf16.msra.mxu0 %v2964
    %3786 = vmatpush.bf16.msra.mxu0 %v2960
    %3787 = vmatpush.bf16.msra.mxu0 %v2956
    %3788 = vmatpush.bf16.msra.mxu0 %v2952
    %3789 = vmatpush.bf16.msra.mxu0 %v2948
    %3790 = vmatmul.bf16.gmra.mxu0 %v564
    %v3791 = vpop.f32.mrf.mxu0
    %v3792 = vadd.f32 %v3779, %v3791
    %v3793 = vpop.f32.mrf.mxu0
    %3794 = vdwg.mxu0
    %3795 = vmatpush.bf16.msra.mxu0 %v3008
    %3796 = vmatpush.bf16.msra.mxu0 %v3004
    %3797 = vmatpush.bf16.msra.mxu0 %v3000
    %3798 = vmatpush.bf16.msra.mxu0 %v2996
    %3799 = vmatpush.bf16.msra.mxu0 %v2992
    %3800 = vmatpush.bf16.msra.mxu0 %v2988
    %3801 = vmatpush.bf16.msra.mxu0 %v2984
    %3802 = vmatpush.bf16.msra.mxu0 %v2980
    %3803 = vmatmul.bf16.gmra.mxu0 %v565
    %v3804 = vpop.f32.mrf.mxu0
    %v3805 = vadd.f32 %v3792, %v3804
    %v3806 = vpop.f32.mrf.mxu0
    %3807 = vdwg.mxu0
    %3808 = vmatpush.bf16.msra.mxu0 %v3040
    %3809 = vmatpush.bf16.msra.mxu0 %v3036
    %3810 = vmatpush.bf16.msra.mxu0 %v3032
    %3811 = vmatpush.bf16.msra.mxu0 %v3028
    %3812 = vmatpush.bf16.msra.mxu0 %v3024
    %3813 = vmatpush.bf16.msra.mxu0 %v3020
    %3814 = vmatpush.bf16.msra.mxu0 %v3016
    %3815 = vmatpush.bf16.msra.mxu0 %v3012
    %3816 = vmatmul.bf16.gmra.mxu0 %v566
    %v3817 = vpop.f32.mrf.mxu0
    %v3818 = vadd.f32 %v3805, %v3817
    %v3819 = vpop.f32.mrf.mxu0
    %3820 = vdwg.mxu0
    %3821 = vmatpush.bf16.msra.mxu0 %v3072
    %3822 = vmatpush.bf16.msra.mxu0 %v3068
    %3823 = vmatpush.bf16.msra.mxu0 %v3064
    %3824 = vmatpush.bf16.msra.mxu0 %v3060
    %3825 = vmatpush.bf16.msra.mxu0 %v3056
    %3826 = vmatpush.bf16.msra.mxu0 %v3052
    %3827 = vmatpush.bf16.msra.mxu0 %v3048
    %3828 = vmatpush.bf16.msra.mxu0 %v3044
    %3829 = vmatmul.bf16.gmra.mxu0 %v567
    %v3830 = vpop.f32.mrf.mxu0
    %v3831 = vadd.f32 %v3818, %v3830
    %v3832 = vpop.f32.mrf.mxu0
    %3833 = vdwg.mxu0
    %3834 = vmatpush.bf16.msra.mxu0 %v3104
    %3835 = vmatpush.bf16.msra.mxu0 %v3100
    %3836 = vmatpush.bf16.msra.mxu0 %v3096
    %3837 = vmatpush.bf16.msra.mxu0 %v3092
    %3838 = vmatpush.bf16.msra.mxu0 %v3088
    %3839 = vmatpush.bf16.msra.mxu0 %v3084
    %3840 = vmatpush.bf16.msra.mxu0 %v3080
    %3841 = vmatpush.bf16.msra.mxu0 %v3076
    %3842 = vmatmul.bf16.gmra.mxu0 %v568
    %v3843 = vpop.f32.mrf.mxu0
    %v3844 = vadd.f32 %v3831, %v3843
    %v3845 = vpop.f32.mrf.mxu0
    %3846 = vdwg.mxu0
    %3847 = vmatpush.bf16.msra.mxu0 %v3136
    %3848 = vmatpush.bf16.msra.mxu0 %v3132
    %3849 = vmatpush.bf16.msra.mxu0 %v3128
    %3850 = vmatpush.bf16.msra.mxu0 %v3124
    %3851 = vmatpush.bf16.msra.mxu0 %v3120
    %3852 = vmatpush.bf16.msra.mxu0 %v3116
    %3853 = vmatpush.bf16.msra.mxu0 %v3112
    %3854 = vmatpush.bf16.msra.mxu0 %v3108
    %3855 = vmatmul.bf16.gmra.mxu0 %v569
    %v3856 = vpop.f32.mrf.mxu0
    %v3857 = vadd.f32 %v3844, %v3856
    %v3858 = vpop.f32.mrf.mxu0
    %3859 = vdwg.mxu0
    %3860 = vmatpush.bf16.msra.mxu0 %v2657
    %3861 = vmatpush.bf16.msra.mxu0 %v2653
    %3862 = vmatpush.bf16.msra.mxu0 %v2649
    %3863 = vmatpush.bf16.msra.mxu0 %v2645
    %3864 = vmatpush.bf16.msra.mxu0 %v2641
    %3865 = vmatpush.bf16.msra.mxu0 %v2637
    %3866 = vmatpush.bf16.msra.mxu0 %v2633
    %3867 = vmatpush.bf16.msra.mxu0 %v2629
    %3868 = vmatmul.bf16.gmra.mxu0 %v554
    %v3869 = vpop.f32.mrf.mxu0
    %v3870 = vadd.f32 %v1085, %v3869
    %v3871 = vpop.f32.mrf.mxu0
    %3872 = vdwg.mxu0
    %3873 = vmatpush.bf16.msra.mxu0 %v2689
    %3874 = vmatpush.bf16.msra.mxu0 %v2685
    %3875 = vmatpush.bf16.msra.mxu0 %v2681
    %3876 = vmatpush.bf16.msra.mxu0 %v2677
    %3877 = vmatpush.bf16.msra.mxu0 %v2673
    %3878 = vmatpush.bf16.msra.mxu0 %v2669
    %3879 = vmatpush.bf16.msra.mxu0 %v2665
    %3880 = vmatpush.bf16.msra.mxu0 %v2661
    %3881 = vmatmul.bf16.gmra.mxu0 %v555
    %v3882 = vpop.f32.mrf.mxu0
    %v3883 = vadd.f32 %v3870, %v3882
    %v3884 = vpop.f32.mrf.mxu0
    %3885 = vdwg.mxu0
    %3886 = vmatpush.bf16.msra.mxu0 %v2721
    %3887 = vmatpush.bf16.msra.mxu0 %v2717
    %3888 = vmatpush.bf16.msra.mxu0 %v2713
    %3889 = vmatpush.bf16.msra.mxu0 %v2709
    %3890 = vmatpush.bf16.msra.mxu0 %v2705
    %3891 = vmatpush.bf16.msra.mxu0 %v2701
    %3892 = vmatpush.bf16.msra.mxu0 %v2697
    %3893 = vmatpush.bf16.msra.mxu0 %v2693
    %3894 = vmatmul.bf16.gmra.mxu0 %v556
    %v3895 = vpop.f32.mrf.mxu0
    %v3896 = vadd.f32 %v3883, %v3895
    %v3897 = vpop.f32.mrf.mxu0
    %3898 = vdwg.mxu0
    %3899 = vmatpush.bf16.msra.mxu0 %v2753
    %3900 = vmatpush.bf16.msra.mxu0 %v2749
    %3901 = vmatpush.bf16.msra.mxu0 %v2745
    %3902 = vmatpush.bf16.msra.mxu0 %v2741
    %3903 = vmatpush.bf16.msra.mxu0 %v2737
    %3904 = vmatpush.bf16.msra.mxu0 %v2733
    %3905 = vmatpush.bf16.msra.mxu0 %v2729
    %3906 = vmatpush.bf16.msra.mxu0 %v2725
    %3907 = vmatmul.bf16.gmra.mxu0 %v557
    %v3908 = vpop.f32.mrf.mxu0
    %v3909 = vadd.f32 %v3896, %v3908
    %v3910 = vpop.f32.mrf.mxu0
    %3911 = vdwg.mxu0
    %3912 = vmatpush.bf16.msra.mxu0 %v2785
    %3913 = vmatpush.bf16.msra.mxu0 %v2781
    %3914 = vmatpush.bf16.msra.mxu0 %v2777
    %3915 = vmatpush.bf16.msra.mxu0 %v2773
    %3916 = vmatpush.bf16.msra.mxu0 %v2769
    %3917 = vmatpush.bf16.msra.mxu0 %v2765
    %3918 = vmatpush.bf16.msra.mxu0 %v2761
    %3919 = vmatpush.bf16.msra.mxu0 %v2757
    %3920 = vmatmul.bf16.gmra.mxu0 %v558
    %v3921 = vpop.f32.mrf.mxu0
    %v3922 = vadd.f32 %v3909, %v3921
    %v3923 = vpop.f32.mrf.mxu0
    %3924 = vdwg.mxu0
    %3925 = vmatpush.bf16.msra.mxu0 %v2817
    %3926 = vmatpush.bf16.msra.mxu0 %v2813
    %3927 = vmatpush.bf16.msra.mxu0 %v2809
    %3928 = vmatpush.bf16.msra.mxu0 %v2805
    %3929 = vmatpush.bf16.msra.mxu0 %v2801
    %3930 = vmatpush.bf16.msra.mxu0 %v2797
    %3931 = vmatpush.bf16.msra.mxu0 %v2793
    %3932 = vmatpush.bf16.msra.mxu0 %v2789
    %3933 = vmatmul.bf16.gmra.mxu0 %v559
    %v3934 = vpop.f32.mrf.mxu0
    %v3935 = vadd.f32 %v3922, %v3934
    %v3936 = vpop.f32.mrf.mxu0
    %3937 = vdwg.mxu0
    %3938 = vmatpush.bf16.msra.mxu0 %v2849
    %3939 = vmatpush.bf16.msra.mxu0 %v2845
    %3940 = vmatpush.bf16.msra.mxu0 %v2841
    %3941 = vmatpush.bf16.msra.mxu0 %v2837
    %3942 = vmatpush.bf16.msra.mxu0 %v2833
    %3943 = vmatpush.bf16.msra.mxu0 %v2829
    %3944 = vmatpush.bf16.msra.mxu0 %v2825
    %3945 = vmatpush.bf16.msra.mxu0 %v2821
    %3946 = vmatmul.bf16.gmra.mxu0 %v560
    %v3947 = vpop.f32.mrf.mxu0
    %v3948 = vadd.f32 %v3935, %v3947
    %v3949 = vpop.f32.mrf.mxu0
    %3950 = vdwg.mxu0
    %3951 = vmatpush.bf16.msra.mxu0 %v2881
    %3952 = vmatpush.bf16.msra.mxu0 %v2877
    %3953 = vmatpush.bf16.msra.mxu0 %v2873
    %3954 = vmatpush.bf16.msra.mxu0 %v2869
    %3955 = vmatpush.bf16.msra.mxu0 %v2865
    %3956 = vmatpush.bf16.msra.mxu0 %v2861
    %3957 = vmatpush.bf16.msra.mxu0 %v2857
    %3958 = vmatpush.bf16.msra.mxu0 %v2853
    %3959 = vmatmul.bf16.gmra.mxu0 %v561
    %v3960 = vpop.f32.mrf.mxu0
    %v3961 = vadd.f32 %v3948, %v3960
    %v3962 = vpop.f32.mrf.mxu0
    %3963 = vdwg.mxu0
    %3964 = vmatpush.bf16.msra.mxu0 %v2913
    %3965 = vmatpush.bf16.msra.mxu0 %v2909
    %3966 = vmatpush.bf16.msra.mxu0 %v2905
    %3967 = vmatpush.bf16.msra.mxu0 %v2901
    %3968 = vmatpush.bf16.msra.mxu0 %v2897
    %3969 = vmatpush.bf16.msra.mxu0 %v2893
    %3970 = vmatpush.bf16.msra.mxu0 %v2889
    %3971 = vmatpush.bf16.msra.mxu0 %v2885
    %3972 = vmatmul.bf16.gmra.mxu0 %v562
    %v3973 = vpop.f32.mrf.mxu0
    %v3974 = vadd.f32 %v3961, %v3973
    %v3975 = vpop.f32.mrf.mxu0
    %3976 = vdwg.mxu0
    %3977 = vmatpush.bf16.msra.mxu0 %v2945
    %3978 = vmatpush.bf16.msra.mxu0 %v2941
    %3979 = vmatpush.bf16.msra.mxu0 %v2937
    %3980 = vmatpush.bf16.msra.mxu0 %v2933
    %3981 = vmatpush.bf16.msra.mxu0 %v2929
    %3982 = vmatpush.bf16.msra.mxu0 %v2925
    %3983 = vmatpush.bf16.msra.mxu0 %v2921
    %3984 = vmatpush.bf16.msra.mxu0 %v2917
    %3985 = vmatmul.bf16.gmra.mxu0 %v563
    %v3986 = vpop.f32.mrf.mxu0
    %v3987 = vadd.f32 %v3974, %v3986
    %v3988 = vpop.f32.mrf.mxu0
    %3989 = vdwg.mxu0
    %3990 = vmatpush.bf16.msra.mxu0 %v2977
    %3991 = vmatpush.bf16.msra.mxu0 %v2973
    %3992 = vmatpush.bf16.msra.mxu0 %v2969
    %3993 = vmatpush.bf16.msra.mxu0 %v2965
    %3994 = vmatpush.bf16.msra.mxu0 %v2961
    %3995 = vmatpush.bf16.msra.mxu0 %v2957
    %3996 = vmatpush.bf16.msra.mxu0 %v2953
    %3997 = vmatpush.bf16.msra.mxu0 %v2949
    %3998 = vmatmul.bf16.gmra.mxu0 %v564
    %v3999 = vpop.f32.mrf.mxu0
    %v4000 = vadd.f32 %v3987, %v3999
    %v4001 = vpop.f32.mrf.mxu0
    %4002 = vdwg.mxu0
    %4003 = vmatpush.bf16.msra.mxu0 %v3009
    %4004 = vmatpush.bf16.msra.mxu0 %v3005
    %4005 = vmatpush.bf16.msra.mxu0 %v3001
    %4006 = vmatpush.bf16.msra.mxu0 %v2997
    %4007 = vmatpush.bf16.msra.mxu0 %v2993
    %4008 = vmatpush.bf16.msra.mxu0 %v2989
    %4009 = vmatpush.bf16.msra.mxu0 %v2985
    %4010 = vmatpush.bf16.msra.mxu0 %v2981
    %4011 = vmatmul.bf16.gmra.mxu0 %v565
    %v4012 = vpop.f32.mrf.mxu0
    %v4013 = vadd.f32 %v4000, %v4012
    %v4014 = vpop.f32.mrf.mxu0
    %4015 = vdwg.mxu0
    %4016 = vmatpush.bf16.msra.mxu0 %v3041
    %4017 = vmatpush.bf16.msra.mxu0 %v3037
    %4018 = vmatpush.bf16.msra.mxu0 %v3033
    %4019 = vmatpush.bf16.msra.mxu0 %v3029
    %4020 = vmatpush.bf16.msra.mxu0 %v3025
    %4021 = vmatpush.bf16.msra.mxu0 %v3021
    %4022 = vmatpush.bf16.msra.mxu0 %v3017
    %4023 = vmatpush.bf16.msra.mxu0 %v3013
    %4024 = vmatmul.bf16.gmra.mxu0 %v566
    %v4025 = vpop.f32.mrf.mxu0
    %v4026 = vadd.f32 %v4013, %v4025
    %v4027 = vpop.f32.mrf.mxu0
    %4028 = vdwg.mxu0
    %4029 = vmatpush.bf16.msra.mxu0 %v3073
    %4030 = vmatpush.bf16.msra.mxu0 %v3069
    %4031 = vmatpush.bf16.msra.mxu0 %v3065
    %4032 = vmatpush.bf16.msra.mxu0 %v3061
    %4033 = vmatpush.bf16.msra.mxu0 %v3057
    %4034 = vmatpush.bf16.msra.mxu0 %v3053
    %4035 = vmatpush.bf16.msra.mxu0 %v3049
    %4036 = vmatpush.bf16.msra.mxu0 %v3045
    %4037 = vmatmul.bf16.gmra.mxu0 %v567
    %v4038 = vpop.f32.mrf.mxu0
    %v4039 = vadd.f32 %v4026, %v4038
    %v4040 = vpop.f32.mrf.mxu0
    %4041 = vdwg.mxu0
    %4042 = vmatpush.bf16.msra.mxu0 %v3105
    %4043 = vmatpush.bf16.msra.mxu0 %v3101
    %4044 = vmatpush.bf16.msra.mxu0 %v3097
    %4045 = vmatpush.bf16.msra.mxu0 %v3093
    %4046 = vmatpush.bf16.msra.mxu0 %v3089
    %4047 = vmatpush.bf16.msra.mxu0 %v3085
    %4048 = vmatpush.bf16.msra.mxu0 %v3081
    %4049 = vmatpush.bf16.msra.mxu0 %v3077
    %4050 = vmatmul.bf16.gmra.mxu0 %v568
    %v4051 = vpop.f32.mrf.mxu0
    %v4052 = vadd.f32 %v4039, %v4051
    %v4053 = vpop.f32.mrf.mxu0
    %4054 = vdwg.mxu0
    %4055 = vmatpush.bf16.msra.mxu0 %v3137
    %4056 = vmatpush.bf16.msra.mxu0 %v3133
    %4057 = vmatpush.bf16.msra.mxu0 %v3129
    %4058 = vmatpush.bf16.msra.mxu0 %v3125
    %4059 = vmatpush.bf16.msra.mxu0 %v3121
    %4060 = vmatpush.bf16.msra.mxu0 %v3117
    %4061 = vmatpush.bf16.msra.mxu0 %v3113
    %4062 = vmatpush.bf16.msra.mxu0 %v3109
    %4063 = vmatmul.bf16.gmra.mxu0 %v569
    %v4064 = vpop.f32.mrf.mxu0
    %v4065 = vadd.f32 %v4052, %v4064
    %v4066 = vpop.f32.mrf.mxu0
    %4067 = vdwg.mxu0
    %4068 = vmatpush.bf16.msra.mxu0 %v2658
    %4069 = vmatpush.bf16.msra.mxu0 %v2654
    %4070 = vmatpush.bf16.msra.mxu0 %v2650
    %4071 = vmatpush.bf16.msra.mxu0 %v2646
    %4072 = vmatpush.bf16.msra.mxu0 %v2642
    %4073 = vmatpush.bf16.msra.mxu0 %v2638
    %4074 = vmatpush.bf16.msra.mxu0 %v2634
    %4075 = vmatpush.bf16.msra.mxu0 %v2630
    %4076 = vmatmul.bf16.gmra.mxu0 %v554
    %v4077 = vpop.f32.mrf.mxu0
    %v4078 = vadd.f32 %v1086, %v4077
    %v4079 = vpop.f32.mrf.mxu0
    %4080 = vdwg.mxu0
    %4081 = vmatpush.bf16.msra.mxu0 %v2690
    %4082 = vmatpush.bf16.msra.mxu0 %v2686
    %4083 = vmatpush.bf16.msra.mxu0 %v2682
    %4084 = vmatpush.bf16.msra.mxu0 %v2678
    %4085 = vmatpush.bf16.msra.mxu0 %v2674
    %4086 = vmatpush.bf16.msra.mxu0 %v2670
    %4087 = vmatpush.bf16.msra.mxu0 %v2666
    %4088 = vmatpush.bf16.msra.mxu0 %v2662
    %4089 = vmatmul.bf16.gmra.mxu0 %v555
    %v4090 = vpop.f32.mrf.mxu0
    %v4091 = vadd.f32 %v4078, %v4090
    %v4092 = vpop.f32.mrf.mxu0
    %4093 = vdwg.mxu0
    %4094 = vmatpush.bf16.msra.mxu0 %v2722
    %4095 = vmatpush.bf16.msra.mxu0 %v2718
    %4096 = vmatpush.bf16.msra.mxu0 %v2714
    %4097 = vmatpush.bf16.msra.mxu0 %v2710
    %4098 = vmatpush.bf16.msra.mxu0 %v2706
    %4099 = vmatpush.bf16.msra.mxu0 %v2702
    %4100 = vmatpush.bf16.msra.mxu0 %v2698
    %4101 = vmatpush.bf16.msra.mxu0 %v2694
    %4102 = vmatmul.bf16.gmra.mxu0 %v556
    %v4103 = vpop.f32.mrf.mxu0
    %v4104 = vadd.f32 %v4091, %v4103
    %v4105 = vpop.f32.mrf.mxu0
    %4106 = vdwg.mxu0
    %4107 = vmatpush.bf16.msra.mxu0 %v2754
    %4108 = vmatpush.bf16.msra.mxu0 %v2750
    %4109 = vmatpush.bf16.msra.mxu0 %v2746
    %4110 = vmatpush.bf16.msra.mxu0 %v2742
    %4111 = vmatpush.bf16.msra.mxu0 %v2738
    %4112 = vmatpush.bf16.msra.mxu0 %v2734
    %4113 = vmatpush.bf16.msra.mxu0 %v2730
    %4114 = vmatpush.bf16.msra.mxu0 %v2726
    %4115 = vmatmul.bf16.gmra.mxu0 %v557
    %v4116 = vpop.f32.mrf.mxu0
    %v4117 = vadd.f32 %v4104, %v4116
    %v4118 = vpop.f32.mrf.mxu0
    %4119 = vdwg.mxu0
    %4120 = vmatpush.bf16.msra.mxu0 %v2786
    %4121 = vmatpush.bf16.msra.mxu0 %v2782
    %4122 = vmatpush.bf16.msra.mxu0 %v2778
    %4123 = vmatpush.bf16.msra.mxu0 %v2774
    %4124 = vmatpush.bf16.msra.mxu0 %v2770
    %4125 = vmatpush.bf16.msra.mxu0 %v2766
    %4126 = vmatpush.bf16.msra.mxu0 %v2762
    %4127 = vmatpush.bf16.msra.mxu0 %v2758
    %4128 = vmatmul.bf16.gmra.mxu0 %v558
    %v4129 = vpop.f32.mrf.mxu0
    %v4130 = vadd.f32 %v4117, %v4129
    %v4131 = vpop.f32.mrf.mxu0
    %4132 = vdwg.mxu0
    %4133 = vmatpush.bf16.msra.mxu0 %v2818
    %4134 = vmatpush.bf16.msra.mxu0 %v2814
    %4135 = vmatpush.bf16.msra.mxu0 %v2810
    %4136 = vmatpush.bf16.msra.mxu0 %v2806
    %4137 = vmatpush.bf16.msra.mxu0 %v2802
    %4138 = vmatpush.bf16.msra.mxu0 %v2798
    %4139 = vmatpush.bf16.msra.mxu0 %v2794
    %4140 = vmatpush.bf16.msra.mxu0 %v2790
    %4141 = vmatmul.bf16.gmra.mxu0 %v559
    %v4142 = vpop.f32.mrf.mxu0
    %v4143 = vadd.f32 %v4130, %v4142
    %v4144 = vpop.f32.mrf.mxu0
    %4145 = vdwg.mxu0
    %4146 = vmatpush.bf16.msra.mxu0 %v2850
    %4147 = vmatpush.bf16.msra.mxu0 %v2846
    %4148 = vmatpush.bf16.msra.mxu0 %v2842
    %4149 = vmatpush.bf16.msra.mxu0 %v2838
    %4150 = vmatpush.bf16.msra.mxu0 %v2834
    %4151 = vmatpush.bf16.msra.mxu0 %v2830
    %4152 = vmatpush.bf16.msra.mxu0 %v2826
    %4153 = vmatpush.bf16.msra.mxu0 %v2822
    %4154 = vmatmul.bf16.gmra.mxu0 %v560
    %v4155 = vpop.f32.mrf.mxu0
    %v4156 = vadd.f32 %v4143, %v4155
    %v4157 = vpop.f32.mrf.mxu0
    %4158 = vdwg.mxu0
    %4159 = vmatpush.bf16.msra.mxu0 %v2882
    %4160 = vmatpush.bf16.msra.mxu0 %v2878
    %4161 = vmatpush.bf16.msra.mxu0 %v2874
    %4162 = vmatpush.bf16.msra.mxu0 %v2870
    %4163 = vmatpush.bf16.msra.mxu0 %v2866
    %4164 = vmatpush.bf16.msra.mxu0 %v2862
    %4165 = vmatpush.bf16.msra.mxu0 %v2858
    %4166 = vmatpush.bf16.msra.mxu0 %v2854
    %4167 = vmatmul.bf16.gmra.mxu0 %v561
    %v4168 = vpop.f32.mrf.mxu0
    %v4169 = vadd.f32 %v4156, %v4168
    %v4170 = vpop.f32.mrf.mxu0
    %4171 = vdwg.mxu0
    %4172 = vmatpush.bf16.msra.mxu0 %v2914
    %4173 = vmatpush.bf16.msra.mxu0 %v2910
    %4174 = vmatpush.bf16.msra.mxu0 %v2906
    %4175 = vmatpush.bf16.msra.mxu0 %v2902
    %4176 = vmatpush.bf16.msra.mxu0 %v2898
    %4177 = vmatpush.bf16.msra.mxu0 %v2894
    %4178 = vmatpush.bf16.msra.mxu0 %v2890
    %4179 = vmatpush.bf16.msra.mxu0 %v2886
    %4180 = vmatmul.bf16.gmra.mxu0 %v562
    %v4181 = vpop.f32.mrf.mxu0
    %v4182 = vadd.f32 %v4169, %v4181
    %v4183 = vpop.f32.mrf.mxu0
    %4184 = vdwg.mxu0
    %4185 = vmatpush.bf16.msra.mxu0 %v2946
    %4186 = vmatpush.bf16.msra.mxu0 %v2942
    %4187 = vmatpush.bf16.msra.mxu0 %v2938
    %4188 = vmatpush.bf16.msra.mxu0 %v2934
    %4189 = vmatpush.bf16.msra.mxu0 %v2930
    %4190 = vmatpush.bf16.msra.mxu0 %v2926
    %4191 = vmatpush.bf16.msra.mxu0 %v2922
    %4192 = vmatpush.bf16.msra.mxu0 %v2918
    %4193 = vmatmul.bf16.gmra.mxu0 %v563
    %v4194 = vpop.f32.mrf.mxu0
    %v4195 = vadd.f32 %v4182, %v4194
    %v4196 = vpop.f32.mrf.mxu0
    %4197 = vdwg.mxu0
    %4198 = vmatpush.bf16.msra.mxu0 %v2978
    %4199 = vmatpush.bf16.msra.mxu0 %v2974
    %4200 = vmatpush.bf16.msra.mxu0 %v2970
    %4201 = vmatpush.bf16.msra.mxu0 %v2966
    %4202 = vmatpush.bf16.msra.mxu0 %v2962
    %4203 = vmatpush.bf16.msra.mxu0 %v2958
    %4204 = vmatpush.bf16.msra.mxu0 %v2954
    %4205 = vmatpush.bf16.msra.mxu0 %v2950
    %4206 = vmatmul.bf16.gmra.mxu0 %v564
    %v4207 = vpop.f32.mrf.mxu0
    %v4208 = vadd.f32 %v4195, %v4207
    %v4209 = vpop.f32.mrf.mxu0
    %4210 = vdwg.mxu0
    %4211 = vmatpush.bf16.msra.mxu0 %v3010
    %4212 = vmatpush.bf16.msra.mxu0 %v3006
    %4213 = vmatpush.bf16.msra.mxu0 %v3002
    %4214 = vmatpush.bf16.msra.mxu0 %v2998
    %4215 = vmatpush.bf16.msra.mxu0 %v2994
    %4216 = vmatpush.bf16.msra.mxu0 %v2990
    %4217 = vmatpush.bf16.msra.mxu0 %v2986
    %4218 = vmatpush.bf16.msra.mxu0 %v2982
    %4219 = vmatmul.bf16.gmra.mxu0 %v565
    %v4220 = vpop.f32.mrf.mxu0
    %v4221 = vadd.f32 %v4208, %v4220
    %v4222 = vpop.f32.mrf.mxu0
    %4223 = vdwg.mxu0
    %4224 = vmatpush.bf16.msra.mxu0 %v3042
    %4225 = vmatpush.bf16.msra.mxu0 %v3038
    %4226 = vmatpush.bf16.msra.mxu0 %v3034
    %4227 = vmatpush.bf16.msra.mxu0 %v3030
    %4228 = vmatpush.bf16.msra.mxu0 %v3026
    %4229 = vmatpush.bf16.msra.mxu0 %v3022
    %4230 = vmatpush.bf16.msra.mxu0 %v3018
    %4231 = vmatpush.bf16.msra.mxu0 %v3014
    %4232 = vmatmul.bf16.gmra.mxu0 %v566
    %v4233 = vpop.f32.mrf.mxu0
    %v4234 = vadd.f32 %v4221, %v4233
    %v4235 = vpop.f32.mrf.mxu0
    %4236 = vdwg.mxu0
    %4237 = vmatpush.bf16.msra.mxu0 %v3074
    %4238 = vmatpush.bf16.msra.mxu0 %v3070
    %4239 = vmatpush.bf16.msra.mxu0 %v3066
    %4240 = vmatpush.bf16.msra.mxu0 %v3062
    %4241 = vmatpush.bf16.msra.mxu0 %v3058
    %4242 = vmatpush.bf16.msra.mxu0 %v3054
    %4243 = vmatpush.bf16.msra.mxu0 %v3050
    %4244 = vmatpush.bf16.msra.mxu0 %v3046
    %4245 = vmatmul.bf16.gmra.mxu0 %v567
    %v4246 = vpop.f32.mrf.mxu0
    %v4247 = vadd.f32 %v4234, %v4246
    %v4248 = vpop.f32.mrf.mxu0
    %4249 = vdwg.mxu0
    %4250 = vmatpush.bf16.msra.mxu0 %v3106
    %4251 = vmatpush.bf16.msra.mxu0 %v3102
    %4252 = vmatpush.bf16.msra.mxu0 %v3098
    %4253 = vmatpush.bf16.msra.mxu0 %v3094
    %4254 = vmatpush.bf16.msra.mxu0 %v3090
    %4255 = vmatpush.bf16.msra.mxu0 %v3086
    %4256 = vmatpush.bf16.msra.mxu0 %v3082
    %4257 = vmatpush.bf16.msra.mxu0 %v3078
    %4258 = vmatmul.bf16.gmra.mxu0 %v568
    %v4259 = vpop.f32.mrf.mxu0
    %v4260 = vadd.f32 %v4247, %v4259
    %v4261 = vpop.f32.mrf.mxu0
    %4262 = vdwg.mxu0
    %4263 = vmatpush.bf16.msra.mxu0 %v3138
    %4264 = vmatpush.bf16.msra.mxu0 %v3134
    %4265 = vmatpush.bf16.msra.mxu0 %v3130
    %4266 = vmatpush.bf16.msra.mxu0 %v3126
    %4267 = vmatpush.bf16.msra.mxu0 %v3122
    %4268 = vmatpush.bf16.msra.mxu0 %v3118
    %4269 = vmatpush.bf16.msra.mxu0 %v3114
    %4270 = vmatpush.bf16.msra.mxu0 %v3110
    %4271 = vmatmul.bf16.gmra.mxu0 %v569
    %v4272 = vpop.f32.mrf.mxu0
    %v4273 = vadd.f32 %v4260, %v4272
    %v4274 = vpop.f32.mrf.mxu0
    %4275 = vdwg.mxu0
    %4276 = vmatpush.bf16.msra.mxu0 %v2659
    %4277 = vmatpush.bf16.msra.mxu0 %v2655
    %4278 = vmatpush.bf16.msra.mxu0 %v2651
    %4279 = vmatpush.bf16.msra.mxu0 %v2647
    %4280 = vmatpush.bf16.msra.mxu0 %v2643
    %4281 = vmatpush.bf16.msra.mxu0 %v2639
    %4282 = vmatpush.bf16.msra.mxu0 %v2635
    %4283 = vmatpush.bf16.msra.mxu0 %v2631
    %4284 = vmatmul.bf16.gmra.mxu0 %v554
    %v4285 = vpop.f32.mrf.mxu0
    %v4286 = vadd.f32 %v1087, %v4285
    %v4287 = vpop.f32.mrf.mxu0
    %4288 = vdwg.mxu0
    %4289 = vmatpush.bf16.msra.mxu0 %v2691
    %4290 = vmatpush.bf16.msra.mxu0 %v2687
    %4291 = vmatpush.bf16.msra.mxu0 %v2683
    %4292 = vmatpush.bf16.msra.mxu0 %v2679
    %4293 = vmatpush.bf16.msra.mxu0 %v2675
    %4294 = vmatpush.bf16.msra.mxu0 %v2671
    %4295 = vmatpush.bf16.msra.mxu0 %v2667
    %4296 = vmatpush.bf16.msra.mxu0 %v2663
    %4297 = vmatmul.bf16.gmra.mxu0 %v555
    %v4298 = vpop.f32.mrf.mxu0
    %v4299 = vadd.f32 %v4286, %v4298
    %v4300 = vpop.f32.mrf.mxu0
    %4301 = vdwg.mxu0
    %4302 = vmatpush.bf16.msra.mxu0 %v2723
    %4303 = vmatpush.bf16.msra.mxu0 %v2719
    %4304 = vmatpush.bf16.msra.mxu0 %v2715
    %4305 = vmatpush.bf16.msra.mxu0 %v2711
    %4306 = vmatpush.bf16.msra.mxu0 %v2707
    %4307 = vmatpush.bf16.msra.mxu0 %v2703
    %4308 = vmatpush.bf16.msra.mxu0 %v2699
    %4309 = vmatpush.bf16.msra.mxu0 %v2695
    %4310 = vmatmul.bf16.gmra.mxu0 %v556
    %v4311 = vpop.f32.mrf.mxu0
    %v4312 = vadd.f32 %v4299, %v4311
    %v4313 = vpop.f32.mrf.mxu0
    %4314 = vdwg.mxu0
    %4315 = vmatpush.bf16.msra.mxu0 %v2755
    %4316 = vmatpush.bf16.msra.mxu0 %v2751
    %4317 = vmatpush.bf16.msra.mxu0 %v2747
    %4318 = vmatpush.bf16.msra.mxu0 %v2743
    %4319 = vmatpush.bf16.msra.mxu0 %v2739
    %4320 = vmatpush.bf16.msra.mxu0 %v2735
    %4321 = vmatpush.bf16.msra.mxu0 %v2731
    %4322 = vmatpush.bf16.msra.mxu0 %v2727
    %4323 = vmatmul.bf16.gmra.mxu0 %v557
    %v4324 = vpop.f32.mrf.mxu0
    %v4325 = vadd.f32 %v4312, %v4324
    %v4326 = vpop.f32.mrf.mxu0
    %4327 = vdwg.mxu0
    %4328 = vmatpush.bf16.msra.mxu0 %v2787
    %4329 = vmatpush.bf16.msra.mxu0 %v2783
    %4330 = vmatpush.bf16.msra.mxu0 %v2779
    %4331 = vmatpush.bf16.msra.mxu0 %v2775
    %4332 = vmatpush.bf16.msra.mxu0 %v2771
    %4333 = vmatpush.bf16.msra.mxu0 %v2767
    %4334 = vmatpush.bf16.msra.mxu0 %v2763
    %4335 = vmatpush.bf16.msra.mxu0 %v2759
    %4336 = vmatmul.bf16.gmra.mxu0 %v558
    %v4337 = vpop.f32.mrf.mxu0
    %v4338 = vadd.f32 %v4325, %v4337
    %v4339 = vpop.f32.mrf.mxu0
    %4340 = vdwg.mxu0
    %4341 = vmatpush.bf16.msra.mxu0 %v2819
    %4342 = vmatpush.bf16.msra.mxu0 %v2815
    %4343 = vmatpush.bf16.msra.mxu0 %v2811
    %4344 = vmatpush.bf16.msra.mxu0 %v2807
    %4345 = vmatpush.bf16.msra.mxu0 %v2803
    %4346 = vmatpush.bf16.msra.mxu0 %v2799
    %4347 = vmatpush.bf16.msra.mxu0 %v2795
    %4348 = vmatpush.bf16.msra.mxu0 %v2791
    %4349 = vmatmul.bf16.gmra.mxu0 %v559
    %v4350 = vpop.f32.mrf.mxu0
    %v4351 = vadd.f32 %v4338, %v4350
    %v4352 = vpop.f32.mrf.mxu0
    %4353 = vdwg.mxu0
    %4354 = vmatpush.bf16.msra.mxu0 %v2851
    %4355 = vmatpush.bf16.msra.mxu0 %v2847
    %4356 = vmatpush.bf16.msra.mxu0 %v2843
    %4357 = vmatpush.bf16.msra.mxu0 %v2839
    %4358 = vmatpush.bf16.msra.mxu0 %v2835
    %4359 = vmatpush.bf16.msra.mxu0 %v2831
    %4360 = vmatpush.bf16.msra.mxu0 %v2827
    %4361 = vmatpush.bf16.msra.mxu0 %v2823
    %4362 = vmatmul.bf16.gmra.mxu0 %v560
    %v4363 = vpop.f32.mrf.mxu0
    %v4364 = vadd.f32 %v4351, %v4363
    %v4365 = vpop.f32.mrf.mxu0
    %4366 = vdwg.mxu0
    %4367 = vmatpush.bf16.msra.mxu0 %v2883
    %4368 = vmatpush.bf16.msra.mxu0 %v2879
    %4369 = vmatpush.bf16.msra.mxu0 %v2875
    %4370 = vmatpush.bf16.msra.mxu0 %v2871
    %4371 = vmatpush.bf16.msra.mxu0 %v2867
    %4372 = vmatpush.bf16.msra.mxu0 %v2863
    %4373 = vmatpush.bf16.msra.mxu0 %v2859
    %4374 = vmatpush.bf16.msra.mxu0 %v2855
    %4375 = vmatmul.bf16.gmra.mxu0 %v561
    %v4376 = vpop.f32.mrf.mxu0
    %v4377 = vadd.f32 %v4364, %v4376
    %v4378 = vpop.f32.mrf.mxu0
    %4379 = vdwg.mxu0
    %4380 = vmatpush.bf16.msra.mxu0 %v2915
    %4381 = vmatpush.bf16.msra.mxu0 %v2911
    %4382 = vmatpush.bf16.msra.mxu0 %v2907
    %4383 = vmatpush.bf16.msra.mxu0 %v2903
    %4384 = vmatpush.bf16.msra.mxu0 %v2899
    %4385 = vmatpush.bf16.msra.mxu0 %v2895
    %4386 = vmatpush.bf16.msra.mxu0 %v2891
    %4387 = vmatpush.bf16.msra.mxu0 %v2887
    %4388 = vmatmul.bf16.gmra.mxu0 %v562
    %v4389 = vpop.f32.mrf.mxu0
    %v4390 = vadd.f32 %v4377, %v4389
    %v4391 = vpop.f32.mrf.mxu0
    %4392 = vdwg.mxu0
    %4393 = vmatpush.bf16.msra.mxu0 %v2947
    %4394 = vmatpush.bf16.msra.mxu0 %v2943
    %4395 = vmatpush.bf16.msra.mxu0 %v2939
    %4396 = vmatpush.bf16.msra.mxu0 %v2935
    %4397 = vmatpush.bf16.msra.mxu0 %v2931
    %4398 = vmatpush.bf16.msra.mxu0 %v2927
    %4399 = vmatpush.bf16.msra.mxu0 %v2923
    %4400 = vmatpush.bf16.msra.mxu0 %v2919
    %4401 = vmatmul.bf16.gmra.mxu0 %v563
    %v4402 = vpop.f32.mrf.mxu0
    %v4403 = vadd.f32 %v4390, %v4402
    %v4404 = vpop.f32.mrf.mxu0
    %4405 = vdwg.mxu0
    %4406 = vmatpush.bf16.msra.mxu0 %v2979
    %4407 = vmatpush.bf16.msra.mxu0 %v2975
    %4408 = vmatpush.bf16.msra.mxu0 %v2971
    %4409 = vmatpush.bf16.msra.mxu0 %v2967
    %4410 = vmatpush.bf16.msra.mxu0 %v2963
    %4411 = vmatpush.bf16.msra.mxu0 %v2959
    %4412 = vmatpush.bf16.msra.mxu0 %v2955
    %4413 = vmatpush.bf16.msra.mxu0 %v2951
    %4414 = vmatmul.bf16.gmra.mxu0 %v564
    %v4415 = vpop.f32.mrf.mxu0
    %v4416 = vadd.f32 %v4403, %v4415
    %v4417 = vpop.f32.mrf.mxu0
    %4418 = vdwg.mxu0
    %4419 = vmatpush.bf16.msra.mxu0 %v3011
    %4420 = vmatpush.bf16.msra.mxu0 %v3007
    %4421 = vmatpush.bf16.msra.mxu0 %v3003
    %4422 = vmatpush.bf16.msra.mxu0 %v2999
    %4423 = vmatpush.bf16.msra.mxu0 %v2995
    %4424 = vmatpush.bf16.msra.mxu0 %v2991
    %4425 = vmatpush.bf16.msra.mxu0 %v2987
    %4426 = vmatpush.bf16.msra.mxu0 %v2983
    %4427 = vmatmul.bf16.gmra.mxu0 %v565
    %v4428 = vpop.f32.mrf.mxu0
    %v4429 = vadd.f32 %v4416, %v4428
    %v4430 = vpop.f32.mrf.mxu0
    %4431 = vdwg.mxu0
    %4432 = vmatpush.bf16.msra.mxu0 %v3043
    %4433 = vmatpush.bf16.msra.mxu0 %v3039
    %4434 = vmatpush.bf16.msra.mxu0 %v3035
    %4435 = vmatpush.bf16.msra.mxu0 %v3031
    %4436 = vmatpush.bf16.msra.mxu0 %v3027
    %4437 = vmatpush.bf16.msra.mxu0 %v3023
    %4438 = vmatpush.bf16.msra.mxu0 %v3019
    %4439 = vmatpush.bf16.msra.mxu0 %v3015
    %4440 = vmatmul.bf16.gmra.mxu0 %v566
    %v4441 = vpop.f32.mrf.mxu0
    %v4442 = vadd.f32 %v4429, %v4441
    %v4443 = vpop.f32.mrf.mxu0
    %4444 = vdwg.mxu0
    %4445 = vmatpush.bf16.msra.mxu0 %v3075
    %4446 = vmatpush.bf16.msra.mxu0 %v3071
    %4447 = vmatpush.bf16.msra.mxu0 %v3067
    %4448 = vmatpush.bf16.msra.mxu0 %v3063
    %4449 = vmatpush.bf16.msra.mxu0 %v3059
    %4450 = vmatpush.bf16.msra.mxu0 %v3055
    %4451 = vmatpush.bf16.msra.mxu0 %v3051
    %4452 = vmatpush.bf16.msra.mxu0 %v3047
    %4453 = vmatmul.bf16.gmra.mxu0 %v567
    %v4454 = vpop.f32.mrf.mxu0
    %v4455 = vadd.f32 %v4442, %v4454
    %v4456 = vpop.f32.mrf.mxu0
    %4457 = vdwg.mxu0
    %4458 = vmatpush.bf16.msra.mxu0 %v3107
    %4459 = vmatpush.bf16.msra.mxu0 %v3103
    %4460 = vmatpush.bf16.msra.mxu0 %v3099
    %4461 = vmatpush.bf16.msra.mxu0 %v3095
    %4462 = vmatpush.bf16.msra.mxu0 %v3091
    %4463 = vmatpush.bf16.msra.mxu0 %v3087
    %4464 = vmatpush.bf16.msra.mxu0 %v3083
    %4465 = vmatpush.bf16.msra.mxu0 %v3079
    %4466 = vmatmul.bf16.gmra.mxu0 %v568
    %v4467 = vpop.f32.mrf.mxu0
    %v4468 = vadd.f32 %v4455, %v4467
    %v4469 = vpop.f32.mrf.mxu0
    %4470 = vdwg.mxu0
    %4471 = vmatpush.bf16.msra.mxu0 %v3139
    %4472 = vmatpush.bf16.msra.mxu0 %v3135
    %4473 = vmatpush.bf16.msra.mxu0 %v3131
    %4474 = vmatpush.bf16.msra.mxu0 %v3127
    %4475 = vmatpush.bf16.msra.mxu0 %v3123
    %4476 = vmatpush.bf16.msra.mxu0 %v3119
    %4477 = vmatpush.bf16.msra.mxu0 %v3115
    %4478 = vmatpush.bf16.msra.mxu0 %v3111
    %4479 = vmatmul.bf16.gmra.mxu0 %v569
    %v4480 = vpop.f32.mrf.mxu0
    %v4481 = vadd.f32 %v4468, %v4480
    %v4482 = vpop.f32.mrf.mxu0
    %4483 = vdwg.mxu0
    %v4484 = vmax.f32 %v3857, 0.0
    %v4485 = vmax.f32 %v4065, 0.0
    %v4486 = vmax.f32 %v4273, 0.0
    %v4487 = vmax.f32 %v4481, 0.0
    %v4488 = vpack.c.bf16 %v4484, %v4484
    %v4489 = vpack.c.bf16 %v4485, %v4485
    %v4490 = vpack.c.bf16 %v4486, %v4486
    %v4491 = vpack.c.bf16 %v4487, %v4487
    %v4492 = vld [vmem:[#allocation8] sm:$0xff]
    %v4493 = vld [vmem:[#allocation8 + $0x8] sm:$0xff]
    %v4494 = vld [vmem:[#allocation8 + $0x14] sm:$0xff]
    %v4495 = vld [vmem:[#allocation8 + $0x1c] sm:$0xff]
    %v4496 = vld [vmem:[#allocation8 + $0x28] sm:$0xff]
    %v4497 = vld [vmem:[#allocation8 + $0x30] sm:$0xff]
    %v4498 = vld [vmem:[#allocation8 + $0x3c] sm:$0xff]
    %v4499 = vld [vmem:[#allocation8 + $0x44] sm:$0xff]
    %v4500 = vld [vmem:[#allocation8 + $0x50] sm:$0xff]
    %v4501 = vld [vmem:[#allocation8 + $0x58] sm:$0xff]
    %v4502 = vld [vmem:[#allocation8 + $0x64] sm:$0xff]
    %v4503 = vld [vmem:[#allocation8 + $0x6c] sm:$0xff]
    %v4504 = vld [vmem:[#allocation8 + $0x78] sm:$0xff]
    %v4505 = vld [vmem:[#allocation8 + $0x80] sm:$0xff]
    %v4506 = vld [vmem:[#allocation8 + $0x8c] sm:$0xff]
    %v4507 = vld [vmem:[#allocation8 + $0x94] sm:$0xff]
    %v4508 = vld [vmem:[#allocation8 + $0xa0] sm:$0xff]
    %v4509 = vld [vmem:[#allocation8 + $0xa8] sm:$0xff]
    %v4510 = vld [vmem:[#allocation8 + $0xb4] sm:$0xff]
    %v4511 = vld [vmem:[#allocation8 + $0xbc] sm:$0xff]
    %v4512 = vld [vmem:[#allocation8 + $0xc8] sm:$0xff]
    %v4513 = vld [vmem:[#allocation8 + $0xd0] sm:$0xff]
    %v4514 = vld [vmem:[#allocation8 + $0xdc] sm:$0xff]
    %v4515 = vld [vmem:[#allocation8 + $0xe4] sm:$0xff]
    %v4516 = vld [vmem:[#allocation8 + $0xf0] sm:$0xff]
    %v4517 = vld [vmem:[#allocation8 + $0xf8] sm:$0xff]
    %v4518 = vld [vmem:[#allocation8 + $0x104] sm:$0xff]
    %v4519 = vld [vmem:[#allocation8 + $0x10c] sm:$0xff]
    %v4520 = vld [vmem:[#allocation8 + $0x118] sm:$0xff]
    %v4521 = vld [vmem:[#allocation8 + $0x120] sm:$0xff]
    %v4522 = vld [vmem:[#allocation8 + $0x12c] sm:$0xff]
    %v4523 = vld [vmem:[#allocation8 + $0x134] sm:$0xff]
    %v4524 = vld [vmem:[#allocation8 + $0x140] sm:$0xff]
    %v4525 = vld [vmem:[#allocation8 + $0x148] sm:$0xff]
    %v4526 = vld [vmem:[#allocation8 + $0x154] sm:$0xff]
    %v4527 = vld [vmem:[#allocation8 + $0x15c] sm:$0xff]
    %v4528 = vld [vmem:[#allocation8 + $0x168] sm:$0xff]
    %v4529 = vld [vmem:[#allocation8 + $0x170] sm:$0xff]
    %v4530 = vld [vmem:[#allocation8 + $0x17c] sm:$0xff]
    %v4531 = vld [vmem:[#allocation8 + $0x184] sm:$0xff]
    %v4532 = vld [vmem:[#allocation8 + $0x190] sm:$0xff]
    %v4533 = vld [vmem:[#allocation8 + $0x198] sm:$0xff]
    %v4534 = vld [vmem:[#allocation8 + $0x1a4] sm:$0xff]
    %v4535 = vld [vmem:[#allocation8 + $0x1ac] sm:$0xff]
    %v4536 = vld [vmem:[#allocation8 + $0x1b8] sm:$0xff]
    %v4537 = vld [vmem:[#allocation8 + $0x1c0] sm:$0xff]
    %v4538 = vld [vmem:[#allocation8 + $0x1cc] sm:$0xff]
    %v4539 = vld [vmem:[#allocation8 + $0x1d4] sm:$0xff]
    %v4540 = vld [vmem:[#allocation8 + $0x1e0] sm:$0xff]
    %v4541 = vld [vmem:[#allocation8 + $0x1e8] sm:$0xff]
    %v4542 = vld [vmem:[#allocation8 + $0x1f4] sm:$0xff]
    %v4543 = vld [vmem:[#allocation8 + $0x1fc] sm:$0xff]
    %v4544 = vld [vmem:[#allocation8 + $0x208] sm:$0xff]
    %v4545 = vld [vmem:[#allocation8 + $0x210] sm:$0xff]
    %v4546 = vld [vmem:[#allocation8 + $0x21c] sm:$0xff]
    %v4547 = vld [vmem:[#allocation8 + $0x224] sm:$0xff]
    %v4548 = vld [vmem:[#allocation8 + $0x230] sm:$0xff]
    %v4549 = vld [vmem:[#allocation8 + $0x238] sm:$0xff]
    %v4550 = vld [vmem:[#allocation8 + $0x244] sm:$0xff]
    %v4551 = vld [vmem:[#allocation8 + $0x24c] sm:$0xff]
    %v4552 = vld [vmem:[#allocation8 + $0x258] sm:$0xff]
    %v4553 = vld [vmem:[#allocation8 + $0x260] sm:$0xff]
    %v4554 = vld [vmem:[#allocation8 + $0x26c] sm:$0xff]
    %v4555 = vld [vmem:[#allocation8 + $0x274] sm:$0xff]
    %v4556 = vld [vmem:[#allocation8 + $0x280] sm:$0xff]
    %v4557 = vld [vmem:[#allocation8 + $0x288] sm:$0xff]
    %v4558 = vld [vmem:[#allocation8 + $0x294] sm:$0xff]
    %v4559 = vld [vmem:[#allocation8 + $0x29c] sm:$0xff]
    %v4560 = vld [vmem:[#allocation8 + $0x2a8] sm:$0xff]
    %v4561 = vld [vmem:[#allocation8 + $0x2b0] sm:$0xff]
    %v4562 = vld [vmem:[#allocation8 + $0x2bc] sm:$0xff]
    %v4563 = vld [vmem:[#allocation8 + $0x2c4] sm:$0xff]
    %v4564 = vld [vmem:[#allocation8 + $0x2d0] sm:$0xff]
    %v4565 = vld [vmem:[#allocation8 + $0x2d8] sm:$0xff]
    %v4566 = vld [vmem:[#allocation8 + $0x2e4] sm:$0xff]
    %v4567 = vld [vmem:[#allocation8 + $0x2ec] sm:$0xff]
    %v4568 = vld [vmem:[#allocation8 + $0x2f8] sm:$0xff]
    %v4569 = vld [vmem:[#allocation8 + $0x300] sm:$0xff]
    %v4570 = vld [vmem:[#allocation8 + $0x30c] sm:$0xff]
    %v4571 = vld [vmem:[#allocation8 + $0x314] sm:$0xff]
    %v4572 = vld [vmem:[#allocation8 + $0x320] sm:$0xff]
    %v4573 = vld [vmem:[#allocation8 + $0x328] sm:$0xff]
    %v4574 = vld [vmem:[#allocation8 + $0x334] sm:$0xff]
    %v4575 = vld [vmem:[#allocation8 + $0x33c] sm:$0xff]
    %v4576 = vld [vmem:[#allocation8 + $0x348] sm:$0xff]
    %v4577 = vld [vmem:[#allocation8 + $0x350] sm:$0xff]
    %v4578 = vld [vmem:[#allocation8 + $0x35c] sm:$0xff]
    %v4579 = vld [vmem:[#allocation8 + $0x364] sm:$0xff]
    %v4580 = vld [vmem:[#allocation8 + $0x370] sm:$0xff]
    %v4581 = vld [vmem:[#allocation8 + $0x378] sm:$0xff]
    %v4582 = vld [vmem:[#allocation8 + $0x384] sm:$0xff]
    %v4583 = vld [vmem:[#allocation8 + $0x38c] sm:$0xff]
    %v4584 = vld [vmem:[#allocation8 + $0x398] sm:$0xff]
    %v4585 = vld [vmem:[#allocation8 + $0x3a0] sm:$0xff]
    %v4586 = vld [vmem:[#allocation8 + $0x3ac] sm:$0xff]
    %v4587 = vld [vmem:[#allocation8 + $0x3b4] sm:$0xff]
    %v4588 = vld [vmem:[#allocation8 + $0x3c0] sm:$0xff]
    %v4589 = vld [vmem:[#allocation8 + $0x3c8] sm:$0xff]
    %v4590 = vld [vmem:[#allocation8 + $0x3d4] sm:$0xff]
    %v4591 = vld [vmem:[#allocation8 + $0x3dc] sm:$0xff]
    %v4592 = vld [vmem:[#allocation8 + $0x3e8] sm:$0xff]
    %v4593 = vld [vmem:[#allocation8 + $0x3f0] sm:$0xff]
    %v4594 = vld [vmem:[#allocation8 + $0x3fc] sm:$0xff]
    %v4595 = vld [vmem:[#allocation8 + $0x404] sm:$0xff]
    %v4596 = vld [vmem:[#allocation8 + $0x410] sm:$0xff]
    %v4597 = vld [vmem:[#allocation8 + $0x418] sm:$0xff]
    %v4598 = vld [vmem:[#allocation8 + $0x424] sm:$0xff]
    %v4599 = vld [vmem:[#allocation8 + $0x42c] sm:$0xff]
    %v4600 = vld [vmem:[#allocation8 + $0x438] sm:$0xff]
    %v4601 = vld [vmem:[#allocation8 + $0x440] sm:$0xff]
    %v4602 = vld [vmem:[#allocation8 + $0x44c] sm:$0xff]
    %v4603 = vld [vmem:[#allocation8 + $0x454] sm:$0xff]
    %v4604 = vld [vmem:[#allocation8 + $0x460] sm:$0xff]
    %v4605 = vld [vmem:[#allocation8 + $0x468] sm:$0xff]
    %v4606 = vld [vmem:[#allocation8 + $0x474] sm:$0xff]
    %v4607 = vld [vmem:[#allocation8 + $0x47c] sm:$0xff]
    %v4608 = vld [vmem:[#allocation8 + $0x488] sm:$0xff]
    %v4609 = vld [vmem:[#allocation8 + $0x490] sm:$0xff]
    %v4610 = vld [vmem:[#allocation8 + $0x49c] sm:$0xff]
    %v4611 = vld [vmem:[#allocation8 + $0x4a4] sm:$0xff]
    %v4612 = vld [vmem:[#allocation8 + $0x4b0] sm:$0xff]
    %v4613 = vld [vmem:[#allocation8 + $0x4b8] sm:$0xff]
    %v4614 = vld [vmem:[#allocation8 + $0x4c4] sm:$0xff]
    %v4615 = vld [vmem:[#allocation8 + $0x4cc] sm:$0xff]
    %v4616 = vld [vmem:[#allocation8 + $0x4d8] sm:$0xff]
    %v4617 = vld [vmem:[#allocation8 + $0x4e0] sm:$0xff]
    %v4618 = vld [vmem:[#allocation8 + $0x4ec] sm:$0xff]
    %v4619 = vld [vmem:[#allocation8 + $0x4f4] sm:$0xff]
    %v4620 = vld [vmem:[#allocation10 + $0x14] sm:$0xf]
    %v4622 = vperm.slane %v4620, 0
    %v4623 = vperm.slane %v4620, 1
    %v4624 = vperm.slane %v4620, 2
    %v4625 = vperm.slane %v4620, 3
    %v4758 = vunpack.c.l.b16 %v4492
    %v4759 = vunpack.c.h.b16 %v4492
    %v4760 = vunpack.c.l.b16 %v4493
    %v4761 = vunpack.c.h.b16 %v4493
    %v4762 = vunpack.c.l.b16 %v4494
    %v4763 = vunpack.c.h.b16 %v4494
    %v4764 = vunpack.c.l.b16 %v4495
    %v4765 = vunpack.c.h.b16 %v4495
    %v4766 = vunpack.c.l.b16 %v4496
    %v4767 = vunpack.c.h.b16 %v4496
    %v4768 = vunpack.c.l.b16 %v4497
    %v4769 = vunpack.c.h.b16 %v4497
    %v4770 = vunpack.c.l.b16 %v4498
    %v4771 = vunpack.c.h.b16 %v4498
    %v4772 = vunpack.c.l.b16 %v4499
    %v4773 = vunpack.c.h.b16 %v4499
    %v4774 = vunpack.c.l.b16 %v4500
    %v4775 = vunpack.c.h.b16 %v4500
    %v4776 = vunpack.c.l.b16 %v4501
    %v4777 = vunpack.c.h.b16 %v4501
    %v4778 = vunpack.c.l.b16 %v4502
    %v4779 = vunpack.c.h.b16 %v4502
    %v4780 = vunpack.c.l.b16 %v4503
    %v4781 = vunpack.c.h.b16 %v4503
    %v4782 = vunpack.c.l.b16 %v4504
    %v4783 = vunpack.c.h.b16 %v4504
    %v4784 = vunpack.c.l.b16 %v4505
    %v4785 = vunpack.c.h.b16 %v4505
    %v4786 = vunpack.c.l.b16 %v4506
    %v4787 = vunpack.c.h.b16 %v4506
    %v4788 = vunpack.c.l.b16 %v4507
    %v4789 = vunpack.c.h.b16 %v4507
    %v4790 = vunpack.c.l.b16 %v4508
    %v4791 = vunpack.c.h.b16 %v4508
    %v4792 = vunpack.c.l.b16 %v4509
    %v4793 = vunpack.c.h.b16 %v4509
    %v4794 = vunpack.c.l.b16 %v4510
    %v4795 = vunpack.c.h.b16 %v4510
    %v4796 = vunpack.c.l.b16 %v4511
    %v4797 = vunpack.c.h.b16 %v4511
    %v4798 = vunpack.c.l.b16 %v4512
    %v4799 = vunpack.c.h.b16 %v4512
    %v4800 = vunpack.c.l.b16 %v4513
    %v4801 = vunpack.c.h.b16 %v4513
    %v4802 = vunpack.c.l.b16 %v4514
    %v4803 = vunpack.c.h.b16 %v4514
    %v4804 = vunpack.c.l.b16 %v4515
    %v4805 = vunpack.c.h.b16 %v4515
    %v4806 = vunpack.c.l.b16 %v4516
    %v4807 = vunpack.c.h.b16 %v4516
    %v4808 = vunpack.c.l.b16 %v4517
    %v4809 = vunpack.c.h.b16 %v4517
    %v4810 = vunpack.c.l.b16 %v4518
    %v4811 = vunpack.c.h.b16 %v4518
    %v4812 = vunpack.c.l.b16 %v4519
    %v4813 = vunpack.c.h.b16 %v4519
    %v4814 = vunpack.c.l.b16 %v4520
    %v4815 = vunpack.c.h.b16 %v4520
    %v4816 = vunpack.c.l.b16 %v4521
    %v4817 = vunpack.c.h.b16 %v4521
    %v4818 = vunpack.c.l.b16 %v4522
    %v4819 = vunpack.c.h.b16 %v4522
    %v4820 = vunpack.c.l.b16 %v4523
    %v4821 = vunpack.c.h.b16 %v4523
    %v4822 = vunpack.c.l.b16 %v4524
    %v4823 = vunpack.c.h.b16 %v4524
    %v4824 = vunpack.c.l.b16 %v4525
    %v4825 = vunpack.c.h.b16 %v4525
    %v4826 = vunpack.c.l.b16 %v4526
    %v4827 = vunpack.c.h.b16 %v4526
    %v4828 = vunpack.c.l.b16 %v4527
    %v4829 = vunpack.c.h.b16 %v4527
    %v4830 = vunpack.c.l.b16 %v4528
    %v4831 = vunpack.c.h.b16 %v4528
    %v4832 = vunpack.c.l.b16 %v4529
    %v4833 = vunpack.c.h.b16 %v4529
    %v4834 = vunpack.c.l.b16 %v4530
    %v4835 = vunpack.c.h.b16 %v4530
    %v4836 = vunpack.c.l.b16 %v4531
    %v4837 = vunpack.c.h.b16 %v4531
    %v4838 = vunpack.c.l.b16 %v4532
    %v4839 = vunpack.c.h.b16 %v4532
    %v4840 = vunpack.c.l.b16 %v4533
    %v4841 = vunpack.c.h.b16 %v4533
    %v4842 = vunpack.c.l.b16 %v4534
    %v4843 = vunpack.c.h.b16 %v4534
    %v4844 = vunpack.c.l.b16 %v4535
    %v4845 = vunpack.c.h.b16 %v4535
    %v4846 = vunpack.c.l.b16 %v4536
    %v4847 = vunpack.c.h.b16 %v4536
    %v4848 = vunpack.c.l.b16 %v4537
    %v4849 = vunpack.c.h.b16 %v4537
    %v4850 = vunpack.c.l.b16 %v4538
    %v4851 = vunpack.c.h.b16 %v4538
    %v4852 = vunpack.c.l.b16 %v4539
    %v4853 = vunpack.c.h.b16 %v4539
    %v4854 = vunpack.c.l.b16 %v4540
    %v4855 = vunpack.c.h.b16 %v4540
    %v4856 = vunpack.c.l.b16 %v4541
    %v4857 = vunpack.c.h.b16 %v4541
    %v4858 = vunpack.c.l.b16 %v4542
    %v4859 = vunpack.c.h.b16 %v4542
    %v4860 = vunpack.c.l.b16 %v4543
    %v4861 = vunpack.c.h.b16 %v4543
    %v4862 = vunpack.c.l.b16 %v4544
    %v4863 = vunpack.c.h.b16 %v4544
    %v4864 = vunpack.c.l.b16 %v4545
    %v4865 = vunpack.c.h.b16 %v4545
    %v4866 = vunpack.c.l.b16 %v4546
    %v4867 = vunpack.c.h.b16 %v4546
    %v4868 = vunpack.c.l.b16 %v4547
    %v4869 = vunpack.c.h.b16 %v4547
    %v4870 = vunpack.c.l.b16 %v4548
    %v4871 = vunpack.c.h.b16 %v4548
    %v4872 = vunpack.c.l.b16 %v4549
    %v4873 = vunpack.c.h.b16 %v4549
    %v4874 = vunpack.c.l.b16 %v4550
    %v4875 = vunpack.c.h.b16 %v4550
    %v4876 = vunpack.c.l.b16 %v4551
    %v4877 = vunpack.c.h.b16 %v4551
    %v4878 = vunpack.c.l.b16 %v4552
    %v4879 = vunpack.c.h.b16 %v4552
    %v4880 = vunpack.c.l.b16 %v4553
    %v4881 = vunpack.c.h.b16 %v4553
    %v4882 = vunpack.c.l.b16 %v4554
    %v4883 = vunpack.c.h.b16 %v4554
    %v4884 = vunpack.c.l.b16 %v4555
    %v4885 = vunpack.c.h.b16 %v4555
    %v4886 = vunpack.c.l.b16 %v4556
    %v4887 = vunpack.c.h.b16 %v4556
    %v4888 = vunpack.c.l.b16 %v4557
    %v4889 = vunpack.c.h.b16 %v4557
    %v4890 = vunpack.c.l.b16 %v4558
    %v4891 = vunpack.c.h.b16 %v4558
    %v4892 = vunpack.c.l.b16 %v4559
    %v4893 = vunpack.c.h.b16 %v4559
    %v4894 = vunpack.c.l.b16 %v4560
    %v4895 = vunpack.c.h.b16 %v4560
    %v4896 = vunpack.c.l.b16 %v4561
    %v4897 = vunpack.c.h.b16 %v4561
    %v4898 = vunpack.c.l.b16 %v4562
    %v4899 = vunpack.c.h.b16 %v4562
    %v4900 = vunpack.c.l.b16 %v4563
    %v4901 = vunpack.c.h.b16 %v4563
    %v4902 = vunpack.c.l.b16 %v4564
    %v4903 = vunpack.c.h.b16 %v4564
    %v4904 = vunpack.c.l.b16 %v4565
    %v4905 = vunpack.c.h.b16 %v4565
    %v4906 = vunpack.c.l.b16 %v4566
    %v4907 = vunpack.c.h.b16 %v4566
    %v4908 = vunpack.c.l.b16 %v4567
    %v4909 = vunpack.c.h.b16 %v4567
    %v4910 = vunpack.c.l.b16 %v4568
    %v4911 = vunpack.c.h.b16 %v4568
    %v4912 = vunpack.c.l.b16 %v4569
    %v4913 = vunpack.c.h.b16 %v4569
    %v4914 = vunpack.c.l.b16 %v4570
    %v4915 = vunpack.c.h.b16 %v4570
    %v4916 = vunpack.c.l.b16 %v4571
    %v4917 = vunpack.c.h.b16 %v4571
    %v4918 = vunpack.c.l.b16 %v4572
    %v4919 = vunpack.c.h.b16 %v4572
    %v4920 = vunpack.c.l.b16 %v4573
    %v4921 = vunpack.c.h.b16 %v4573
    %v4922 = vunpack.c.l.b16 %v4574
    %v4923 = vunpack.c.h.b16 %v4574
    %v4924 = vunpack.c.l.b16 %v4575
    %v4925 = vunpack.c.h.b16 %v4575
    %v4926 = vunpack.c.l.b16 %v4576
    %v4927 = vunpack.c.h.b16 %v4576
    %v4928 = vunpack.c.l.b16 %v4577
    %v4929 = vunpack.c.h.b16 %v4577
    %v4930 = vunpack.c.l.b16 %v4578
    %v4931 = vunpack.c.h.b16 %v4578
    %v4932 = vunpack.c.l.b16 %v4579
    %v4933 = vunpack.c.h.b16 %v4579
    %v4934 = vunpack.c.l.b16 %v4580
    %v4935 = vunpack.c.h.b16 %v4580
    %v4936 = vunpack.c.l.b16 %v4581
    %v4937 = vunpack.c.h.b16 %v4581
    %v4938 = vunpack.c.l.b16 %v4582
    %v4939 = vunpack.c.h.b16 %v4582
    %v4940 = vunpack.c.l.b16 %v4583
    %v4941 = vunpack.c.h.b16 %v4583
    %v4942 = vunpack.c.l.b16 %v4584
    %v4943 = vunpack.c.h.b16 %v4584
    %v4944 = vunpack.c.l.b16 %v4585
    %v4945 = vunpack.c.h.b16 %v4585
    %v4946 = vunpack.c.l.b16 %v4586
    %v4947 = vunpack.c.h.b16 %v4586
    %v4948 = vunpack.c.l.b16 %v4587
    %v4949 = vunpack.c.h.b16 %v4587
    %v4950 = vunpack.c.l.b16 %v4588
    %v4951 = vunpack.c.h.b16 %v4588
    %v4952 = vunpack.c.l.b16 %v4589
    %v4953 = vunpack.c.h.b16 %v4589
    %v4954 = vunpack.c.l.b16 %v4590
    %v4955 = vunpack.c.h.b16 %v4590
    %v4956 = vunpack.c.l.b16 %v4591
    %v4957 = vunpack.c.h.b16 %v4591
    %v4958 = vunpack.c.l.b16 %v4592
    %v4959 = vunpack.c.h.b16 %v4592
    %v4960 = vunpack.c.l.b16 %v4593
    %v4961 = vunpack.c.h.b16 %v4593
    %v4962 = vunpack.c.l.b16 %v4594
    %v4963 = vunpack.c.h.b16 %v4594
    %v4964 = vunpack.c.l.b16 %v4595
    %v4965 = vunpack.c.h.b16 %v4595
    %v4966 = vunpack.c.l.b16 %v4596
    %v4967 = vunpack.c.h.b16 %v4596
    %v4968 = vunpack.c.l.b16 %v4597
    %v4969 = vunpack.c.h.b16 %v4597
    %v4970 = vunpack.c.l.b16 %v4598
    %v4971 = vunpack.c.h.b16 %v4598
    %v4972 = vunpack.c.l.b16 %v4599
    %v4973 = vunpack.c.h.b16 %v4599
    %v4974 = vunpack.c.l.b16 %v4600
    %v4975 = vunpack.c.h.b16 %v4600
    %v4976 = vunpack.c.l.b16 %v4601
    %v4977 = vunpack.c.h.b16 %v4601
    %v4978 = vunpack.c.l.b16 %v4602
    %v4979 = vunpack.c.h.b16 %v4602
    %v4980 = vunpack.c.l.b16 %v4603
    %v4981 = vunpack.c.h.b16 %v4603
    %v4982 = vunpack.c.l.b16 %v4604
    %v4983 = vunpack.c.h.b16 %v4604
    %v4984 = vunpack.c.l.b16 %v4605
    %v4985 = vunpack.c.h.b16 %v4605
    %v4986 = vunpack.c.l.b16 %v4606
    %v4987 = vunpack.c.h.b16 %v4606
    %v4988 = vunpack.c.l.b16 %v4607
    %v4989 = vunpack.c.h.b16 %v4607
    %v4990 = vunpack.c.l.b16 %v4608
    %v4991 = vunpack.c.h.b16 %v4608
    %v4992 = vunpack.c.l.b16 %v4609
    %v4993 = vunpack.c.h.b16 %v4609
    %v4994 = vunpack.c.l.b16 %v4610
    %v4995 = vunpack.c.h.b16 %v4610
    %v4996 = vunpack.c.l.b16 %v4611
    %v4997 = vunpack.c.h.b16 %v4611
    %v4998 = vunpack.c.l.b16 %v4612
    %v4999 = vunpack.c.h.b16 %v4612
    %v5000 = vunpack.c.l.b16 %v4613
    %v5001 = vunpack.c.h.b16 %v4613
    %v5002 = vunpack.c.l.b16 %v4614
    %v5003 = vunpack.c.h.b16 %v4614
    %v5004 = vunpack.c.l.b16 %v4615
    %v5005 = vunpack.c.h.b16 %v4615
    %v5006 = vunpack.c.l.b16 %v4616
    %v5007 = vunpack.c.h.b16 %v4616
    %v5008 = vunpack.c.l.b16 %v4617
    %v5009 = vunpack.c.h.b16 %v4617
    %v5010 = vunpack.c.l.b16 %v4618
    %v5011 = vunpack.c.h.b16 %v4618
    %v5012 = vunpack.c.l.b16 %v4619
    %v5013 = vunpack.c.h.b16 %v4619
    %v5014 = vpack.c.b16 %v4762, %v4758
    %v5015 = vpack.c.b16 %v4763, %v4759
    %v5016 = vpack.c.b16 %v4764, %v4760
    %v5017 = vpack.c.b16 %v4765, %v4761
    %v5018 = vpack.c.b16 %v4770, %v4766
    %v5019 = vpack.c.b16 %v4771, %v4767
    %v5020 = vpack.c.b16 %v4772, %v4768
    %v5021 = vpack.c.b16 %v4773, %v4769
    %v5022 = vpack.c.b16 %v4778, %v4774
    %v5023 = vpack.c.b16 %v4779, %v4775
    %v5024 = vpack.c.b16 %v4780, %v4776
    %v5025 = vpack.c.b16 %v4781, %v4777
    %v5026 = vpack.c.b16 %v4786, %v4782
    %v5027 = vpack.c.b16 %v4787, %v4783
    %v5028 = vpack.c.b16 %v4788, %v4784
    %v5029 = vpack.c.b16 %v4789, %v4785
    %v5030 = vpack.c.b16 %v4794, %v4790
    %v5031 = vpack.c.b16 %v4795, %v4791
    %v5032 = vpack.c.b16 %v4796, %v4792
    %v5033 = vpack.c.b16 %v4797, %v4793
    %v5034 = vpack.c.b16 %v4802, %v4798
    %v5035 = vpack.c.b16 %v4803, %v4799
    %v5036 = vpack.c.b16 %v4804, %v4800
    %v5037 = vpack.c.b16 %v4805, %v4801
    %v5038 = vpack.c.b16 %v4810, %v4806
    %v5039 = vpack.c.b16 %v4811, %v4807
    %v5040 = vpack.c.b16 %v4812, %v4808
    %v5041 = vpack.c.b16 %v4813, %v4809
    %v5042 = vpack.c.b16 %v4818, %v4814
    %v5043 = vpack.c.b16 %v4819, %v4815
    %v5044 = vpack.c.b16 %v4820, %v4816
    %v5045 = vpack.c.b16 %v4821, %v4817
    %v5046 = vpack.c.b16 %v4826, %v4822
    %v5047 = vpack.c.b16 %v4827, %v4823
    %v5048 = vpack.c.b16 %v4828, %v4824
    %v5049 = vpack.c.b16 %v4829, %v4825
    %v5050 = vpack.c.b16 %v4834, %v4830
    %v5051 = vpack.c.b16 %v4835, %v4831
    %v5052 = vpack.c.b16 %v4836, %v4832
    %v5053 = vpack.c.b16 %v4837, %v4833
    %v5054 = vpack.c.b16 %v4842, %v4838
    %v5055 = vpack.c.b16 %v4843, %v4839
    %v5056 = vpack.c.b16 %v4844, %v4840
    %v5057 = vpack.c.b16 %v4845, %v4841
    %v5058 = vpack.c.b16 %v4850, %v4846
    %v5059 = vpack.c.b16 %v4851, %v4847
    %v5060 = vpack.c.b16 %v4852, %v4848
    %v5061 = vpack.c.b16 %v4853, %v4849
    %v5062 = vpack.c.b16 %v4858, %v4854
    %v5063 = vpack.c.b16 %v4859, %v4855
    %v5064 = vpack.c.b16 %v4860, %v4856
    %v5065 = vpack.c.b16 %v4861, %v4857
    %v5066 = vpack.c.b16 %v4866, %v4862
    %v5067 = vpack.c.b16 %v4867, %v4863
    %v5068 = vpack.c.b16 %v4868, %v4864
    %v5069 = vpack.c.b16 %v4869, %v4865
    %v5070 = vpack.c.b16 %v4874, %v4870
    %v5071 = vpack.c.b16 %v4875, %v4871
    %v5072 = vpack.c.b16 %v4876, %v4872
    %v5073 = vpack.c.b16 %v4877, %v4873
    %v5074 = vpack.c.b16 %v4882, %v4878
    %v5075 = vpack.c.b16 %v4883, %v4879
    %v5076 = vpack.c.b16 %v4884, %v4880
    %v5077 = vpack.c.b16 %v4885, %v4881
    %v5078 = vpack.c.b16 %v4890, %v4886
    %v5079 = vpack.c.b16 %v4891, %v4887
    %v5080 = vpack.c.b16 %v4892, %v4888
    %v5081 = vpack.c.b16 %v4893, %v4889
    %v5082 = vpack.c.b16 %v4898, %v4894
    %v5083 = vpack.c.b16 %v4899, %v4895
    %v5084 = vpack.c.b16 %v4900, %v4896
    %v5085 = vpack.c.b16 %v4901, %v4897
    %v5086 = vpack.c.b16 %v4906, %v4902
    %v5087 = vpack.c.b16 %v4907, %v4903
    %v5088 = vpack.c.b16 %v4908, %v4904
    %v5089 = vpack.c.b16 %v4909, %v4905
    %v5090 = vpack.c.b16 %v4914, %v4910
    %v5091 = vpack.c.b16 %v4915, %v4911
    %v5092 = vpack.c.b16 %v4916, %v4912
    %v5093 = vpack.c.b16 %v4917, %v4913
    %v5094 = vpack.c.b16 %v4922, %v4918
    %v5095 = vpack.c.b16 %v4923, %v4919
    %v5096 = vpack.c.b16 %v4924, %v4920
    %v5097 = vpack.c.b16 %v4925, %v4921
    %v5098 = vpack.c.b16 %v4930, %v4926
    %v5099 = vpack.c.b16 %v4931, %v4927
    %v5100 = vpack.c.b16 %v4932, %v4928
    %v5101 = vpack.c.b16 %v4933, %v4929
    %v5102 = vpack.c.b16 %v4938, %v4934
    %v5103 = vpack.c.b16 %v4939, %v4935
    %v5104 = vpack.c.b16 %v4940, %v4936
    %v5105 = vpack.c.b16 %v4941, %v4937
    %v5106 = vpack.c.b16 %v4946, %v4942
    %v5107 = vpack.c.b16 %v4947, %v4943
    %v5108 = vpack.c.b16 %v4948, %v4944
    %v5109 = vpack.c.b16 %v4949, %v4945
    %v5110 = vpack.c.b16 %v4954, %v4950
    %v5111 = vpack.c.b16 %v4955, %v4951
    %v5112 = vpack.c.b16 %v4956, %v4952
    %v5113 = vpack.c.b16 %v4957, %v4953
    %v5114 = vpack.c.b16 %v4962, %v4958
    %v5115 = vpack.c.b16 %v4963, %v4959
    %v5116 = vpack.c.b16 %v4964, %v4960
    %v5117 = vpack.c.b16 %v4965, %v4961
    %v5118 = vpack.c.b16 %v4970, %v4966
    %v5119 = vpack.c.b16 %v4971, %v4967
    %v5120 = vpack.c.b16 %v4972, %v4968
    %v5121 = vpack.c.b16 %v4973, %v4969
    %v5122 = vpack.c.b16 %v4978, %v4974
    %v5123 = vpack.c.b16 %v4979, %v4975
    %v5124 = vpack.c.b16 %v4980, %v4976
    %v5125 = vpack.c.b16 %v4981, %v4977
    %v5126 = vpack.c.b16 %v4986, %v4982
    %v5127 = vpack.c.b16 %v4987, %v4983
    %v5128 = vpack.c.b16 %v4988, %v4984
    %v5129 = vpack.c.b16 %v4989, %v4985
    %v5130 = vpack.c.b16 %v4994, %v4990
    %v5131 = vpack.c.b16 %v4995, %v4991
    %v5132 = vpack.c.b16 %v4996, %v4992
    %v5133 = vpack.c.b16 %v4997, %v4993
    %v5134 = vpack.c.b16 %v5002, %v4998
    %v5135 = vpack.c.b16 %v5003, %v4999
    %v5136 = vpack.c.b16 %v5004, %v5000
    %v5137 = vpack.c.b16 %v5005, %v5001
    %v5138 = vpack.c.b16 %v5010, %v5006
    %v5139 = vpack.c.b16 %v5011, %v5007
    %v5140 = vpack.c.b16 %v5012, %v5008
    %v5141 = vpack.c.b16 %v5013, %v5009
    %5270 = vmatpush.bf16.msra.mxu0 %v5042
    %5271 = vmatpush.bf16.msra.mxu0 %v5038
    %5272 = vmatpush.bf16.msra.mxu0 %v5034
    %5273 = vmatpush.bf16.msra.mxu0 %v5030
    %5274 = vmatpush.bf16.msra.mxu0 %v5026
    %5275 = vmatpush.bf16.msra.mxu0 %v5022
    %5276 = vmatpush.bf16.msra.mxu0 %v5018
    %5277 = vmatpush.bf16.msra.mxu0 %v5014
    %5278 = vmatmul.bf16.gmra.mxu0 %v4488
    %v5279 = vpop.f32.mrf.mxu0
    %v5280 = vadd.f32 %v4622, %v5279
    %v5281 = vpop.f32.mrf.mxu0
    %5282 = vdwg.mxu0
    %5283 = vmatpush.bf16.msra.mxu0 %v5074
    %5284 = vmatpush.bf16.msra.mxu0 %v5070
    %5285 = vmatpush.bf16.msra.mxu0 %v5066
    %5286 = vmatpush.bf16.msra.mxu0 %v5062
    %5287 = vmatpush.bf16.msra.mxu0 %v5058
    %5288 = vmatpush.bf16.msra.mxu0 %v5054
    %5289 = vmatpush.bf16.msra.mxu0 %v5050
    %5290 = vmatpush.bf16.msra.mxu0 %v5046
    %5291 = vmatmul.bf16.gmra.mxu0 %v4489
    %v5292 = vpop.f32.mrf.mxu0
    %v5293 = vadd.f32 %v5280, %v5292
    %v5294 = vpop.f32.mrf.mxu0
    %5295 = vdwg.mxu0
    %5296 = vmatpush.bf16.msra.mxu0 %v5106
    %5297 = vmatpush.bf16.msra.mxu0 %v5102
    %5298 = vmatpush.bf16.msra.mxu0 %v5098
    %5299 = vmatpush.bf16.msra.mxu0 %v5094
    %5300 = vmatpush.bf16.msra.mxu0 %v5090
    %5301 = vmatpush.bf16.msra.mxu0 %v5086
    %5302 = vmatpush.bf16.msra.mxu0 %v5082
    %5303 = vmatpush.bf16.msra.mxu0 %v5078
    %5304 = vmatmul.bf16.gmra.mxu0 %v4490
    %v5305 = vpop.f32.mrf.mxu0
    %v5306 = vadd.f32 %v5293, %v5305
    %v5307 = vpop.f32.mrf.mxu0
    %5308 = vdwg.mxu0
    %5309 = vmatpush.bf16.msra.mxu0 %v5138
    %5310 = vmatpush.bf16.msra.mxu0 %v5134
    %5311 = vmatpush.bf16.msra.mxu0 %v5130
    %5312 = vmatpush.bf16.msra.mxu0 %v5126
    %5313 = vmatpush.bf16.msra.mxu0 %v5122
    %5314 = vmatpush.bf16.msra.mxu0 %v5118
    %5315 = vmatpush.bf16.msra.mxu0 %v5114
    %5316 = vmatpush.bf16.msra.mxu0 %v5110
    %5317 = vmatmul.bf16.gmra.mxu0 %v4491
    %v5318 = vpop.f32.mrf.mxu0
    %v5319 = vadd.f32 %v5306, %v5318
    %v5320 = vpop.f32.mrf.mxu0
    %5321 = vdwg.mxu0
    %5322 = vmatpush.bf16.msra.mxu0 %v5043
    %5323 = vmatpush.bf16.msra.mxu0 %v5039
    %5324 = vmatpush.bf16.msra.mxu0 %v5035
    %5325 = vmatpush.bf16.msra.mxu0 %v5031
    %5326 = vmatpush.bf16.msra.mxu0 %v5027
    %5327 = vmatpush.bf16.msra.mxu0 %v5023
    %5328 = vmatpush.bf16.msra.mxu0 %v5019
    %5329 = vmatpush.bf16.msra.mxu0 %v5015
    %5330 = vmatmul.bf16.gmra.mxu0 %v4488
    %v5331 = vpop.f32.mrf.mxu0
    %v5332 = vadd.f32 %v4623, %v5331
    %v5333 = vpop.f32.mrf.mxu0
    %5334 = vdwg.mxu0
    %5335 = vmatpush.bf16.msra.mxu0 %v5075
    %5336 = vmatpush.bf16.msra.mxu0 %v5071
    %5337 = vmatpush.bf16.msra.mxu0 %v5067
    %5338 = vmatpush.bf16.msra.mxu0 %v5063
    %5339 = vmatpush.bf16.msra.mxu0 %v5059
    %5340 = vmatpush.bf16.msra.mxu0 %v5055
    %5341 = vmatpush.bf16.msra.mxu0 %v5051
    %5342 = vmatpush.bf16.msra.mxu0 %v5047
    %5343 = vmatmul.bf16.gmra.mxu0 %v4489
    %v5344 = vpop.f32.mrf.mxu0
    %v5345 = vadd.f32 %v5332, %v5344
    %v5346 = vpop.f32.mrf.mxu0
    %5347 = vdwg.mxu0
    %5348 = vmatpush.bf16.msra.mxu0 %v5107
    %5349 = vmatpush.bf16.msra.mxu0 %v5103
    %5350 = vmatpush.bf16.msra.mxu0 %v5099
    %5351 = vmatpush.bf16.msra.mxu0 %v5095
    %5352 = vmatpush.bf16.msra.mxu0 %v5091
    %5353 = vmatpush.bf16.msra.mxu0 %v5087
    %5354 = vmatpush.bf16.msra.mxu0 %v5083
    %5355 = vmatpush.bf16.msra.mxu0 %v5079
    %5356 = vmatmul.bf16.gmra.mxu0 %v4490
    %v5357 = vpop.f32.mrf.mxu0
    %v5358 = vadd.f32 %v5345, %v5357
    %v5359 = vpop.f32.mrf.mxu0
    %5360 = vdwg.mxu0
    %5361 = vmatpush.bf16.msra.mxu0 %v5139
    %5362 = vmatpush.bf16.msra.mxu0 %v5135
    %5363 = vmatpush.bf16.msra.mxu0 %v5131
    %5364 = vmatpush.bf16.msra.mxu0 %v5127
    %5365 = vmatpush.bf16.msra.mxu0 %v5123
    %5366 = vmatpush.bf16.msra.mxu0 %v5119
    %5367 = vmatpush.bf16.msra.mxu0 %v5115
    %5368 = vmatpush.bf16.msra.mxu0 %v5111
    %5369 = vmatmul.bf16.gmra.mxu0 %v4491
    %v5370 = vpop.f32.mrf.mxu0
    %v5371 = vadd.f32 %v5358, %v5370
    %v5372 = vpop.f32.mrf.mxu0
    %5373 = vdwg.mxu0
    %5374 = vmatpush.bf16.msra.mxu0 %v5044
    %5375 = vmatpush.bf16.msra.mxu0 %v5040
    %5376 = vmatpush.bf16.msra.mxu0 %v5036
    %5377 = vmatpush.bf16.msra.mxu0 %v5032
    %5378 = vmatpush.bf16.msra.mxu0 %v5028
    %5379 = vmatpush.bf16.msra.mxu0 %v5024
    %5380 = vmatpush.bf16.msra.mxu0 %v5020
    %5381 = vmatpush.bf16.msra.mxu0 %v5016
    %5382 = vmatmul.bf16.gmra.mxu0 %v4488
    %v5383 = vpop.f32.mrf.mxu0
    %v5384 = vadd.f32 %v4624, %v5383
    %v5385 = vpop.f32.mrf.mxu0
    %5386 = vdwg.mxu0
    %5387 = vmatpush.bf16.msra.mxu0 %v5076
    %5388 = vmatpush.bf16.msra.mxu0 %v5072
    %5389 = vmatpush.bf16.msra.mxu0 %v5068
    %5390 = vmatpush.bf16.msra.mxu0 %v5064
    %5391 = vmatpush.bf16.msra.mxu0 %v5060
    %5392 = vmatpush.bf16.msra.mxu0 %v5056
    %5393 = vmatpush.bf16.msra.mxu0 %v5052
    %5394 = vmatpush.bf16.msra.mxu0 %v5048
    %5395 = vmatmul.bf16.gmra.mxu0 %v4489
    %v5396 = vpop.f32.mrf.mxu0
    %v5397 = vadd.f32 %v5384, %v5396
    %v5398 = vpop.f32.mrf.mxu0
    %5399 = vdwg.mxu0
    %5400 = vmatpush.bf16.msra.mxu0 %v5108
    %5401 = vmatpush.bf16.msra.mxu0 %v5104
    %5402 = vmatpush.bf16.msra.mxu0 %v5100
    %5403 = vmatpush.bf16.msra.mxu0 %v5096
    %5404 = vmatpush.bf16.msra.mxu0 %v5092
    %5405 = vmatpush.bf16.msra.mxu0 %v5088
    %5406 = vmatpush.bf16.msra.mxu0 %v5084
    %5407 = vmatpush.bf16.msra.mxu0 %v5080
    %5408 = vmatmul.bf16.gmra.mxu0 %v4490
    %v5409 = vpop.f32.mrf.mxu0
    %v5410 = vadd.f32 %v5397, %v5409
    %v5411 = vpop.f32.mrf.mxu0
    %5412 = vdwg.mxu0
    %5413 = vmatpush.bf16.msra.mxu0 %v5140
    %5414 = vmatpush.bf16.msra.mxu0 %v5136
    %5415 = vmatpush.bf16.msra.mxu0 %v5132
    %5416 = vmatpush.bf16.msra.mxu0 %v5128
    %5417 = vmatpush.bf16.msra.mxu0 %v5124
    %5418 = vmatpush.bf16.msra.mxu0 %v5120
    %5419 = vmatpush.bf16.msra.mxu0 %v5116
    %5420 = vmatpush.bf16.msra.mxu0 %v5112
    %5421 = vmatmul.bf16.gmra.mxu0 %v4491
    %v5422 = vpop.f32.mrf.mxu0
    %v5423 = vadd.f32 %v5410, %v5422
    %v5424 = vpop.f32.mrf.mxu0
    %5425 = vdwg.mxu0
    %5426 = vmatpush.bf16.msra.mxu0 %v5045
    %5427 = vmatpush.bf16.msra.mxu0 %v5041
    %5428 = vmatpush.bf16.msra.mxu0 %v5037
    %5429 = vmatpush.bf16.msra.mxu0 %v5033
    %5430 = vmatpush.bf16.msra.mxu0 %v5029
    %5431 = vmatpush.bf16.msra.mxu0 %v5025
    %5432 = vmatpush.bf16.msra.mxu0 %v5021
    %5433 = vmatpush.bf16.msra.mxu0 %v5017
    %5434 = vmatmul.bf16.gmra.mxu0 %v4488
    %v5435 = vpop.f32.mrf.mxu0
    %v5436 = vadd.f32 %v4625, %v5435
    %v5437 = vpop.f32.mrf.mxu0
    %5438 = vdwg.mxu0
    %5439 = vmatpush.bf16.msra.mxu0 %v5077
    %5440 = vmatpush.bf16.msra.mxu0 %v5073
    %5441 = vmatpush.bf16.msra.mxu0 %v5069
    %5442 = vmatpush.bf16.msra.mxu0 %v5065
    %5443 = vmatpush.bf16.msra.mxu0 %v5061
    %5444 = vmatpush.bf16.msra.mxu0 %v5057
    %5445 = vmatpush.bf16.msra.mxu0 %v5053
    %5446 = vmatpush.bf16.msra.mxu0 %v5049
    %5447 = vmatmul.bf16.gmra.mxu0 %v4489
    %v5448 = vpop.f32.mrf.mxu0
    %v5449 = vadd.f32 %v5436, %v5448
    %v5450 = vpop.f32.mrf.mxu0
    %5451 = vdwg.mxu0
    %5452 = vmatpush.bf16.msra.mxu0 %v5109
    %5453 = vmatpush.bf16.msra.mxu0 %v5105
    %5454 = vmatpush.bf16.msra.mxu0 %v5101
    %5455 = vmatpush.bf16.msra.mxu0 %v5097
    %5456 = vmatpush.bf16.msra.mxu0 %v5093
    %5457 = vmatpush.bf16.msra.mxu0 %v5089
    %5458 = vmatpush.bf16.msra.mxu0 %v5085
    %5459 = vmatpush.bf16.msra.mxu0 %v5081
    %5460 = vmatmul.bf16.gmra.mxu0 %v4490
    %v5461 = vpop.f32.mrf.mxu0
    %v5462 = vadd.f32 %v5449, %v5461
    %v5463 = vpop.f32.mrf.mxu0
    %5464 = vdwg.mxu0
    %5465 = vmatpush.bf16.msra.mxu0 %v5141
    %5466 = vmatpush.bf16.msra.mxu0 %v5137
    %5467 = vmatpush.bf16.msra.mxu0 %v5133
    %5468 = vmatpush.bf16.msra.mxu0 %v5129
    %5469 = vmatpush.bf16.msra.mxu0 %v5125
    %5470 = vmatpush.bf16.msra.mxu0 %v5121
    %5471 = vmatpush.bf16.msra.mxu0 %v5117
    %5472 = vmatpush.bf16.msra.mxu0 %v5113
    %5473 = vmatmul.bf16.gmra.mxu0 %v4491
    %v5474 = vpop.f32.mrf.mxu0
    %v5475 = vadd.f32 %v5462, %v5474
    %v5476 = vpop.f32.mrf.mxu0
    %5477 = vdwg.mxu0
    %v5478 = vmax.f32 %v5319, 0.0
    %v5479 = vmax.f32 %v5371, 0.0
    %v5480 = vmax.f32 %v5423, 0.0
    %v5481 = vmax.f32 %v5475, 0.0
    %v5482 = vpack.c.bf16 %v5478, %v5478
    %v5483 = vpack.c.bf16 %v5479, %v5479
    %v5484 = vpack.c.bf16 %v5480, %v5480
    %v5485 = vpack.c.bf16 %v5481, %v5481
    %v5486 = vld [vmem:[#allocation8 + $0x10] sm:$0xf]
    %v5487 = vld [vmem:[#allocation8 + $0x24] sm:$0xf]
    %v5488 = vld [vmem:[#allocation8 + $0x38] sm:$0xf]
    %v5489 = vld [vmem:[#allocation8 + $0x4c] sm:$0xf]
    %v5490 = vld [vmem:[#allocation8 + $0x60] sm:$0xf]
    %v5491 = vld [vmem:[#allocation8 + $0x74] sm:$0xf]
    %v5492 = vld [vmem:[#allocation8 + $0x88] sm:$0xf]
    %v5493 = vld [vmem:[#allocation8 + $0x9c] sm:$0xf]
    %v5494 = vld [vmem:[#allocation8 + $0xb0] sm:$0xf]
    %v5495 = vld [vmem:[#allocation8 + $0xc4] sm:$0xf]
    %v5496 = vld [vmem:[#allocation8 + $0xd8] sm:$0xf]
    %v5497 = vld [vmem:[#allocation8 + $0xec] sm:$0xf]
    %v5498 = vld [vmem:[#allocation8 + $0x100] sm:$0xf]
    %v5499 = vld [vmem:[#allocation8 + $0x114] sm:$0xf]
    %v5500 = vld [vmem:[#allocation8 + $0x128] sm:$0xf]
    %v5501 = vld [vmem:[#allocation8 + $0x13c] sm:$0xf]
    %v5502 = vld [vmem:[#allocation8 + $0x150] sm:$0xf]
    %v5503 = vld [vmem:[#allocation8 + $0x164] sm:$0xf]
    %v5504 = vld [vmem:[#allocation8 + $0x178] sm:$0xf]
    %v5505 = vld [vmem:[#allocation8 + $0x18c] sm:$0xf]
    %v5506 = vld [vmem:[#allocation8 + $0x1a0] sm:$0xf]
    %v5507 = vld [vmem:[#allocation8 + $0x1b4] sm:$0xf]
    %v5508 = vld [vmem:[#allocation8 + $0x1c8] sm:$0xf]
    %v5509 = vld [vmem:[#allocation8 + $0x1dc] sm:$0xf]
    %v5510 = vld [vmem:[#allocation8 + $0x1f0] sm:$0xf]
    %v5511 = vld [vmem:[#allocation8 + $0x204] sm:$0xf]
    %v5512 = vld [vmem:[#allocation8 + $0x218] sm:$0xf]
    %v5513 = vld [vmem:[#allocation8 + $0x22c] sm:$0xf]
    %v5514 = vld [vmem:[#allocation8 + $0x240] sm:$0xf]
    %v5515 = vld [vmem:[#allocation8 + $0x254] sm:$0xf]
    %v5516 = vld [vmem:[#allocation8 + $0x268] sm:$0xf]
    %v5517 = vld [vmem:[#allocation8 + $0x27c] sm:$0xf]
    %v5518 = vld [vmem:[#allocation8 + $0x290] sm:$0xf]
    %v5519 = vld [vmem:[#allocation8 + $0x2a4] sm:$0xf]
    %v5520 = vld [vmem:[#allocation8 + $0x2b8] sm:$0xf]
    %v5521 = vld [vmem:[#allocation8 + $0x2cc] sm:$0xf]
    %v5522 = vld [vmem:[#allocation8 + $0x2e0] sm:$0xf]
    %v5523 = vld [vmem:[#allocation8 + $0x2f4] sm:$0xf]
    %v5524 = vld [vmem:[#allocation8 + $0x308] sm:$0xf]
    %v5525 = vld [vmem:[#allocation8 + $0x31c] sm:$0xf]
    %v5526 = vld [vmem:[#allocation8 + $0x330] sm:$0xf]
    %v5527 = vld [vmem:[#allocation8 + $0x344] sm:$0xf]
    %v5528 = vld [vmem:[#allocation8 + $0x358] sm:$0xf]
    %v5529 = vld [vmem:[#allocation8 + $0x36c] sm:$0xf]
    %v5530 = vld [vmem:[#allocation8 + $0x380] sm:$0xf]
    %v5531 = vld [vmem:[#allocation8 + $0x394] sm:$0xf]
    %v5532 = vld [vmem:[#allocation8 + $0x3a8] sm:$0xf]
    %v5533 = vld [vmem:[#allocation8 + $0x3bc] sm:$0xf]
    %v5534 = vld [vmem:[#allocation8 + $0x3d0] sm:$0xf]
    %v5535 = vld [vmem:[#allocation8 + $0x3e4] sm:$0xf]
    %v5536 = vld [vmem:[#allocation8 + $0x3f8] sm:$0xf]
    %v5537 = vld [vmem:[#allocation8 + $0x40c] sm:$0xf]
    %v5538 = vld [vmem:[#allocation8 + $0x420] sm:$0xf]
    %v5539 = vld [vmem:[#allocation8 + $0x434] sm:$0xf]
    %v5540 = vld [vmem:[#allocation8 + $0x448] sm:$0xf]
    %v5541 = vld [vmem:[#allocation8 + $0x45c] sm:$0xf]
    %v5542 = vld [vmem:[#allocation8 + $0x470] sm:$0xf]
    %v5543 = vld [vmem:[#allocation8 + $0x484] sm:$0xf]
    %v5544 = vld [vmem:[#allocation8 + $0x498] sm:$0xf]
    %v5545 = vld [vmem:[#allocation8 + $0x4ac] sm:$0xf]
    %v5546 = vld [vmem:[#allocation8 + $0x4c0] sm:$0xf]
    %v5547 = vld [vmem:[#allocation8 + $0x4d4] sm:$0xf]
    %v5548 = vld [vmem:[#allocation8 + $0x4e8] sm:$0xf]
    %v5549 = vld [vmem:[#allocation8 + $0x4fc] sm:$0xf]
    %v5550 = vld [vmem:[#allocation10 + $0x18] sm:$0x1]
    %v5552 = vperm.slane %v5550, 0
    %v5618 = vunpack.c.l.b16 %v5486
    %v5619 = vunpack.c.l.b16 %v5487
    %v5620 = vunpack.c.l.b16 %v5488
    %v5621 = vunpack.c.l.b16 %v5489
    %v5622 = vunpack.c.l.b16 %v5490
    %v5623 = vunpack.c.l.b16 %v5491
    %v5624 = vunpack.c.l.b16 %v5492
    %v5625 = vunpack.c.l.b16 %v5493
    %v5626 = vunpack.c.l.b16 %v5494
    %v5627 = vunpack.c.l.b16 %v5495
    %v5628 = vunpack.c.l.b16 %v5496
    %v5629 = vunpack.c.l.b16 %v5497
    %v5630 = vunpack.c.l.b16 %v5498
    %v5631 = vunpack.c.l.b16 %v5499
    %v5632 = vunpack.c.l.b16 %v5500
    %v5633 = vunpack.c.l.b16 %v5501
    %v5634 = vunpack.c.l.b16 %v5502
    %v5635 = vunpack.c.l.b16 %v5503
    %v5636 = vunpack.c.l.b16 %v5504
    %v5637 = vunpack.c.l.b16 %v5505
    %v5638 = vunpack.c.l.b16 %v5506
    %v5639 = vunpack.c.l.b16 %v5507
    %v5640 = vunpack.c.l.b16 %v5508
    %v5641 = vunpack.c.l.b16 %v5509
    %v5642 = vunpack.c.l.b16 %v5510
    %v5643 = vunpack.c.l.b16 %v5511
    %v5644 = vunpack.c.l.b16 %v5512
    %v5645 = vunpack.c.l.b16 %v5513
    %v5646 = vunpack.c.l.b16 %v5514
    %v5647 = vunpack.c.l.b16 %v5515
    %v5648 = vunpack.c.l.b16 %v5516
    %v5649 = vunpack.c.l.b16 %v5517
    %v5650 = vunpack.c.l.b16 %v5518
    %v5651 = vunpack.c.l.b16 %v5519
    %v5652 = vunpack.c.l.b16 %v5520
    %v5653 = vunpack.c.l.b16 %v5521
    %v5654 = vunpack.c.l.b16 %v5522
    %v5655 = vunpack.c.l.b16 %v5523
    %v5656 = vunpack.c.l.b16 %v5524
    %v5657 = vunpack.c.l.b16 %v5525
    %v5658 = vunpack.c.l.b16 %v5526
    %v5659 = vunpack.c.l.b16 %v5527
    %v5660 = vunpack.c.l.b16 %v5528
    %v5661 = vunpack.c.l.b16 %v5529
    %v5662 = vunpack.c.l.b16 %v5530
    %v5663 = vunpack.c.l.b16 %v5531
    %v5664 = vunpack.c.l.b16 %v5532
    %v5665 = vunpack.c.l.b16 %v5533
    %v5666 = vunpack.c.l.b16 %v5534
    %v5667 = vunpack.c.l.b16 %v5535
    %v5668 = vunpack.c.l.b16 %v5536
    %v5669 = vunpack.c.l.b16 %v5537
    %v5670 = vunpack.c.l.b16 %v5538
    %v5671 = vunpack.c.l.b16 %v5539
    %v5672 = vunpack.c.l.b16 %v5540
    %v5673 = vunpack.c.l.b16 %v5541
    %v5674 = vunpack.c.l.b16 %v5542
    %v5675 = vunpack.c.l.b16 %v5543
    %v5676 = vunpack.c.l.b16 %v5544
    %v5677 = vunpack.c.l.b16 %v5545
    %v5678 = vunpack.c.l.b16 %v5546
    %v5679 = vunpack.c.l.b16 %v5547
    %v5680 = vunpack.c.l.b16 %v5548
    %v5681 = vunpack.c.l.b16 %v5549
    %v5682 = vpack.c.b16 %v5619, %v5618
    %v5683 = vpack.c.b16 %v5621, %v5620
    %v5684 = vpack.c.b16 %v5623, %v5622
    %v5685 = vpack.c.b16 %v5625, %v5624
    %v5686 = vpack.c.b16 %v5627, %v5626
    %v5687 = vpack.c.b16 %v5629, %v5628
    %v5688 = vpack.c.b16 %v5631, %v5630
    %v5689 = vpack.c.b16 %v5633, %v5632
    %v5690 = vpack.c.b16 %v5635, %v5634
    %v5691 = vpack.c.b16 %v5637, %v5636
    %v5692 = vpack.c.b16 %v5639, %v5638
    %v5693 = vpack.c.b16 %v5641, %v5640
    %v5694 = vpack.c.b16 %v5643, %v5642
    %v5695 = vpack.c.b16 %v5645, %v5644
    %v5696 = vpack.c.b16 %v5647, %v5646
    %v5697 = vpack.c.b16 %v5649, %v5648
    %v5698 = vpack.c.b16 %v5651, %v5650
    %v5699 = vpack.c.b16 %v5653, %v5652
    %v5700 = vpack.c.b16 %v5655, %v5654
    %v5701 = vpack.c.b16 %v5657, %v5656
    %v5702 = vpack.c.b16 %v5659, %v5658
    %v5703 = vpack.c.b16 %v5661, %v5660
    %v5704 = vpack.c.b16 %v5663, %v5662
    %v5705 = vpack.c.b16 %v5665, %v5664
    %v5706 = vpack.c.b16 %v5667, %v5666
    %v5707 = vpack.c.b16 %v5669, %v5668
    %v5708 = vpack.c.b16 %v5671, %v5670
    %v5709 = vpack.c.b16 %v5673, %v5672
    %v5710 = vpack.c.b16 %v5675, %v5674
    %v5711 = vpack.c.b16 %v5677, %v5676
    %v5712 = vpack.c.b16 %v5679, %v5678
    %v5713 = vpack.c.b16 %v5681, %v5680
    %5746 = vmatpush.bf16.msra.mxu0 %v5689
    %5747 = vmatpush.bf16.msra.mxu0 %v5688
    %5748 = vmatpush.bf16.msra.mxu0 %v5687
    %5749 = vmatpush.bf16.msra.mxu0 %v5686
    %5750 = vmatpush.bf16.msra.mxu0 %v5685
    %5751 = vmatpush.bf16.msra.mxu0 %v5684
    %5752 = vmatpush.bf16.msra.mxu0 %v5683
    %5753 = vmatpush.bf16.msra.mxu0 %v5682
    %5754 = vmatmul.bf16.gmra.mxu0 %v5482
    %v5755 = vpop.f32.mrf.mxu0
    %v5756 = vadd.f32 %v5552, %v5755
    %v5757 = vpop.f32.mrf.mxu0
    %5758 = vdwg.mxu0
    %5759 = vmatpush.bf16.msra.mxu0 %v5697
    %5760 = vmatpush.bf16.msra.mxu0 %v5696
    %5761 = vmatpush.bf16.msra.mxu0 %v5695
    %5762 = vmatpush.bf16.msra.mxu0 %v5694
    %5763 = vmatpush.bf16.msra.mxu0 %v5693
    %5764 = vmatpush.bf16.msra.mxu0 %v5692
    %5765 = vmatpush.bf16.msra.mxu0 %v5691
    %5766 = vmatpush.bf16.msra.mxu0 %v5690
    %5767 = vmatmul.bf16.gmra.mxu0 %v5483
    %v5768 = vpop.f32.mrf.mxu0
    %v5769 = vadd.f32 %v5756, %v5768
    %v5770 = vpop.f32.mrf.mxu0
    %5771 = vdwg.mxu0
    %5772 = vmatpush.bf16.msra.mxu0 %v5705
    %5773 = vmatpush.bf16.msra.mxu0 %v5704
    %5774 = vmatpush.bf16.msra.mxu0 %v5703
    %5775 = vmatpush.bf16.msra.mxu0 %v5702
    %5776 = vmatpush.bf16.msra.mxu0 %v5701
    %5777 = vmatpush.bf16.msra.mxu0 %v5700
    %5778 = vmatpush.bf16.msra.mxu0 %v5699
    %5779 = vmatpush.bf16.msra.mxu0 %v5698
    %5780 = vmatmul.bf16.gmra.mxu0 %v5484
    %v5781 = vpop.f32.mrf.mxu0
    %v5782 = vadd.f32 %v5769, %v5781
    %v5783 = vpop.f32.mrf.mxu0
    %5784 = vdwg.mxu0
    %5785 = vmatpush.bf16.msra.mxu0 %v5713
    %5786 = vmatpush.bf16.msra.mxu0 %v5712
    %5787 = vmatpush.bf16.msra.mxu0 %v5711
    %5788 = vmatpush.bf16.msra.mxu0 %v5710
    %5789 = vmatpush.bf16.msra.mxu0 %v5709
    %5790 = vmatpush.bf16.msra.mxu0 %v5708
    %5791 = vmatpush.bf16.msra.mxu0 %v5707
    %5792 = vmatpush.bf16.msra.mxu0 %v5706
    %5793 = vmatmul.bf16.gmra.mxu0 %v5485
    %v5794 = vpop.f32.mrf.mxu0
    %v5795 = vadd.f32 %v5782, %v5794
    %v5796 = vpop.f32.mrf.mxu0
    %5797 = vdwg.mxu0
    %5798 = vst [vmem:[#allocation11] sm:$0xff] %v5795
    // Predicated region
    $region42: #{tpu_custom_call.1} parent=1 // pred_check
      _
    $region43: #{tpu_custom_call.1} parent=1 // pred_check_branch
      %5800 = sbr.rel (0) target = $region45
    $region44: #{tpu_custom_call.1} parent=1 // pred_region
      %5802 = vsyncadd [#allocation4], 0
      %s5804 = sshll.u32 [#allocation11], 4
      %s5805 = int_to_ptr.vmem [resolvable:$true] %s5804
      %s5806 = sshll.u32 %s5, 4
      %s5807 = int_to_ptr.hbm [resolvable:$true] %s5806
      %5809 = dma.vmem_to_hbm [thread:$0]  %s5805, 128, %s5807, [#allocation4]
    $region45: #{tpu_custom_call.1} parent=1 // pred_fallthru
      _
    // Predicated region
    $region46: #{tpu_custom_call.1} parent=1 // pred_check
      _
    $region47: #{tpu_custom_call.1} parent=1 // pred_check_branch
      %5811 = sbr.rel (0) target = $region49
    $region48: #{tpu_custom_call.1} parent=1 // pred_region
      %5813 = dma.done [#allocation4], 128
    $region49: #{tpu_custom_call.1} parent=1 // pred_fallthru
      _
    %5814 = vsyncpa [#allocation3], 1
    %5815 = vsyncpa [#allocation6], 1
    %5816 = vsyncpa [#allocation9], 1
    %5817 = vsyncpa [#allocation4], 1

</llo_original>
